<compile_context>
chip_gen: v7x
topology: tpu7x:2x2x1
jax: 0.10.0
libtpu: 0.0.40
codegen_flags: <defaults>
</compile_context>

<pallas_src>
import jax
import jax.numpy as jnp
from jax.experimental import pallas as pl
from jax.experimental.pallas import tpu as pltpu


# ---------------------------------------------------------------------------
# Kernel
# ---------------------------------------------------------------------------
def _mlstm_kernel(x_ref, hx_ref, cx_ref,
                  wmx_ref, wmh_ref, wxg_ref, whg_ref,
                  hy_ref, cy_ref, m_ref):
    """One (batch tile, gate-column tile) step of the mLSTM cell.

    Column tile j of the packed gate weights holds the four gate slices
    [i_j | f_j | o_j | g_j], each TN lanes wide and 128-aligned, so every gate
    slice below is an unmasked, lane-dense access.
    """
    TN = hy_ref.shape[1]
    j = pl.program_id(1)

    x = x_ref[...]
    hx = hx_ref[...]

    # m = wmx(x) * wmh(hx): full hidden width, computed once per batch tile
    # and carried in VMEM scratch across the column tiles.
    @pl.when(j == 0)
    def _():
        mx = jnp.dot(x, wmx_ref[...], preferred_element_type=jnp.float32)
        mh = jnp.dot(hx, wmh_ref[...], preferred_element_type=jnp.float32)
        m_ref[...] = mx * mh

    m = m_ref[...]

    # gates[:, tile j] = wx(x) + wh(m) (+ bias folded into wx) -> (TB, 4*TN).
    # NOTE: m is cast to the weight dtype before the MXU matmul; exact for f32
    # weights, a deliberate mixed-precision choice when weight_dtype=bf16.
    gates = (jnp.dot(x, wxg_ref[...], preferred_element_type=jnp.float32)
             + jnp.dot(m.astype(whg_ref.dtype), whg_ref[...],
                       preferred_element_type=jnp.float32))

    ingate = jax.nn.sigmoid(gates[:, 0 * TN:1 * TN])
    forgetgate = jax.nn.sigmoid(gates[:, 1 * TN:2 * TN])
    outgate = jax.nn.sigmoid(gates[:, 2 * TN:3 * TN])
    cellgate = jnp.tanh(gates[:, 3 * TN:4 * TN])

    cx = cx_ref[...].astype(jnp.float32)
    cy = forgetgate * cx + ingate * cellgate
    hy = outgate * jnp.tanh(cy)

    hy_ref[...] = hy.astype(hy_ref.dtype)
    cy_ref[...] = cy.astype(cy_ref.dtype)   # f32 cell state


# ---------------------------------------------------------------------------
# Wrapper helpers
# ---------------------------------------------------------------------------
def _round_up(v, m):
    return (v + m - 1) // m * m


def _sublane_multiple(dtype):
    # 8 sublanes for 32-bit, 16 for 16-bit, 32 for 8-bit packed dtypes.
    return max(8, 32 // jnp.dtype(dtype).itemsize)


def _pick_col_tile(Hp, max_cols):
    """Largest multiple of 128 that divides Hp and is <= max_cols."""
    n = Hp // 128
    best = 1
    for c in range(1, n + 1):
        if n % c == 0 and c * 128 <= max_cols:
            best = c
    return best * 128


def _pack_gate_weight(w, in_pad, H, Hp, TN, dtype):
    """(n_in, 4H) -> (in_pad, 4*Hp), zero-padded and column-permuted so that
    column tile j holds the four gate slices [i_j | f_j | o_j | g_j]."""
    n_in = w.shape[0]
    nj = Hp // TN
    w4 = jnp.zeros((in_pad, 4, Hp), dtype).at[:n_in, :, :H].set(
        w.astype(dtype).reshape(n_in, 4, H))
    return (w4.reshape(in_pad, 4, nj, TN)
              .transpose(0, 2, 1, 3)
              .reshape(in_pad, 4 * Hp))


def _default_block_b():
    try:
        kind = jax.devices()[0].device_kind.lower()
    except Exception:
        return 128
    # 256x256 MXUs on v6e/v7x like a bigger M tile; v5e (128x128) keeps 128.
    return 256 if ("v6" in kind or "v7" in kind) else 128


def _vmem_limit_bytes():
    try:
        cap = pltpu.get_tpu_info().vmem_capacity_bytes
    except Exception:
        cap = 64 * 1024 * 1024
    # ~80% of physical: 102 MiB on v5e/v6e (128 MiB), ~51 MiB on v7x (64 MiB).
    return int(cap * 0.8)


# ---------------------------------------------------------------------------
# Public entry point
# ---------------------------------------------------------------------------
def mlstm_cell(x, hx, cx, wmx_t, wmh_t, wx_t, wh_t, wh_b, *,
               block_b=None, col_tile=512, weight_dtype=None):
    """One mLSTM cell step.

    Args:
      x:     (B, I)  input
      hx:    (B, H)  previous hidden state
      cx:    (B, H)  previous cell state
      wmx_t: (I, H)  = torch wmx.weight.T
      wmh_t: (H, H)  = torch wmh.weight.T
      wx_t:  (I, 4H) = torch wx.weight.T
      wh_t:  (H, 4H) = torch wh.weight.T
      wh_b:  (1, 4H) = torch wh.bias
      block_b:      batch tile (default: 256 on v6e/v7x, 128 otherwise)
      col_tile:     max gate-column tile width (multiple of 128)
      weight_dtype: optional weight cast (e.g. jnp.bfloat16) for perf

    Returns:
      (hy, cy): hy (B, H) in x.dtype, cy (B, H) in float32.
    """
    B, I = x.shape
    H = hx.shape[1]
    adt = x.dtype
    wdt = jnp.dtype(weight_dtype) if weight_dtype is not None else wmx_t.dtype

    # ---- padded / aligned sizes -------------------------------------------
    Ip = _round_up(I + 1, 128)          # +1 column reserved for the folded bias
    Hp = _round_up(H, 128)
    TN = _pick_col_tile(Hp, col_tile)   # gate-column tile; divides Hp exactly
    nJ = Hp // TN

    sub = _sublane_multiple(adt)
    if block_b is None:
        block_b = _default_block_b()
    TB = min(_round_up(block_b, sub), _round_up(B, sub))
    Bp = _round_up(B, TB)
    nB = Bp // TB

    # ---- pad activations; x gets a ones column at index I for the bias -----
    xp = (jnp.zeros((Bp, Ip), adt)
            .at[:B, :I].set(x)
            .at[:, I].set(1.0))
    hxp = jnp.zeros((Bp, Hp), adt).at[:B, :H].set(hx)
    cxp = jnp.zeros((Bp, Hp), adt).at[:B, :H].set(cx)

    # ---- pad / pack weights (done once, outside the kernel) ----------------
    wmx_p = jnp.zeros((Ip, Hp), wdt).at[:I, :H].set(wmx_t.astype(wdt))
    wmh_p = jnp.zeros((Hp, Hp), wdt).at[:H, :H].set(wmh_t.astype(wdt))
    wx_p = _pack_gate_weight(wx_t, Ip, H, Hp, TN, wdt)                   # (Ip, 4Hp)
    wh_p = _pack_gate_weight(wh_t, Hp, H, Hp, TN, wdt)                   # (Hp, 4Hp)
    b_p = _pack_gate_weight(wh_b.reshape(1, 4 * H), 1, H, Hp, TN, wdt)   # (1, 4Hp)
    wx_p = wx_p.at[I, :].set(b_p[0])    # fold bias into the ones column of x

    grid = (nB, nJ)

    def _specs(single_buffer_weights):
        kw = dict(pipeline_mode=pl.Buffered(1)) if single_buffer_weights else {}
        in_specs = [
            pl.BlockSpec((TB, Ip), lambda i, j: (i, 0)),            # x
            pl.BlockSpec((TB, Hp), lambda i, j: (i, 0)),            # hx
            pl.BlockSpec((TB, TN), lambda i, j: (i, j)),            # cx (col tile)
            pl.BlockSpec((Ip, Hp), lambda i, j: (0, 0), **kw),      # wmx (resident)
            pl.BlockSpec((Hp, Hp), lambda i, j: (0, 0), **kw),      # wmh (resident)
            pl.BlockSpec((Ip, 4 * TN), lambda i, j: (0, j)),        # wx  (streamed)
            pl.BlockSpec((Hp, 4 * TN), lambda i, j: (0, j)),        # wh  (streamed)
        ]
        out_specs = (pl.BlockSpec((TB, TN), lambda i, j: (i, j)),   # hy
                     pl.BlockSpec((TB, TN), lambda i, j: (i, j)))   # cy
        return in_specs, out_specs

    out_shape = (jax.ShapeDtypeStruct((Bp, Hp), adt),
                 jax.ShapeDtypeStruct((Bp, Hp), jnp.float32))
    scratch_shapes = [pltpu.VMEM((TB, Hp), jnp.float32)]   # m = wmx(x)*wmh(hx)

    def _run(single_buffer_weights):
        in_specs, out_specs = _specs(single_buffer_weights)
        return pl.pallas_call(
            _mlstm_kernel,
            out_shape=out_shape,
            grid=grid,
            in_specs=in_specs,
            out_specs=out_specs,
            scratch_shapes=scratch_shapes,
            compiler_params=pltpu.CompilerParams(
                # Batch tiles are independent ("parallel"); the column axis
                # carries the m scratch so it must stay "arbitrary".
                # TODO(synk): on v7x, batch-parallel across the 2 TCs streams
                # the weights twice; for weight-DMA-bound shapes shard the
                # column axis across cores instead.
                dimension_semantics=("parallel", "arbitrary"),
                vmem_limit_bytes=_vmem_limit_bytes(),
            ),
        )(xp, hxp, cxp, wmx_p, wmh_p, wx_p, wh_p)

    try:
        hy_p, cy_p = _run(True)      # single-buffered resident weights
    except Exception:                # fallback if pipeline_mode/Buffered(1)
        hy_p, cy_p = _run(False)     # is unsupported by this jax version

    # Un-pad.
    return hy_p[:B, :H], cy_p[:B, :H]


# ---------------------------------------------------------------------------
# Pure-JAX reference (mirrors the PyTorch forward) + demo
# ---------------------------------------------------------------------------
def _reference(x, hx, cx, wmx_t, wmh_t, wx_t, wh_t, wh_b):
    m = (x @ wmx_t) * (hx @ wmh_t)
    gates = x @ wx_t + m @ wh_t + wh_b
    H = hx.shape[1]
    i, f, o, g = (gates[:, 0:H], gates[:, H:2 * H],
                  gates[:, 2 * H:3 * H], gates[:, 3 * H:4 * H])
    i, f, o, g = jax.nn.sigmoid(i), jax.nn.sigmoid(f), jax.nn.sigmoid(o), jnp.tanh(g)
    cy = f * cx + i * g
    hy = o * jnp.tanh(cy)
    return hy, cy


if __name__ == "__main__":
    # Small deterministic setup that still exercises batch tiling (nB=2),
    # gate-column tiling (nJ=2) and batch padding (B not a multiple of TB).
    B, I, H = 24, 20, 160
    key = jax.random.PRNGKey(0)
    kx, khx, kcx, k1, k2, k3, k4, k5 = jax.random.split(key, 8)

    x = jax.random.normal(kx, (B, I), jnp.float32)
    hx = jax.random.normal(khx, (B, H), jnp.float32)
    cx = jax.random.normal(kcx, (B, H), jnp.float32)

    # Parameters (torch Linear weights, stored transposed: (in, out)).
    scale = 0.1
    wmx_t = scale * jax.random.normal(k1, (I, H), jnp.float32)
    wmh_t = scale * jax.random.normal(k2, (H, H), jnp.float32)
    wx_t = scale * jax.random.normal(k3, (I, 4 * H), jnp.float32)
    wh_t = scale * jax.random.normal(k4, (H, 4 * H), jnp.float32)
    wh_b = scale * jax.random.normal(k5, (1, 4 * H), jnp.float32)

    hy, cy = mlstm_cell(x, hx, cx, wmx_t, wmh_t, wx_t, wh_t, wh_b,
                        block_b=16, col_tile=128)
    jax.block_until_ready((hy, cy))

    hy_ref, cy_ref = _reference(x, hx, cx, wmx_t, wmh_t, wx_t, wh_t, wh_b)
    assert hy.shape == (B, H) and cy.shape == (B, H)
    assert jnp.allclose(hy, hy_ref, atol=1e-4, rtol=1e-4), "hy mismatch"
    assert jnp.allclose(cy, cy_ref.astype(jnp.float32), atol=1e-4, rtol=1e-4), "cy mismatch"

    print("KERNEL_OK")
</pallas_src>

<mosaic_0001>
module attributes {stable_mosaic.version = 11 : i64} {
  func.func @_mlstm_kernel(%arg0: i32, %arg1: i32, %arg2: memref<16x128xf32, #tpu.memory_space<vmem>>, %arg3: memref<16x256xf32, #tpu.memory_space<vmem>>, %arg4: memref<16x128xf32, #tpu.memory_space<vmem>>, %arg5: memref<128x256xf32, #tpu.memory_space<vmem>>, %arg6: memref<256x256xf32, #tpu.memory_space<vmem>>, %arg7: memref<128x512xf32, #tpu.memory_space<vmem>>, %arg8: memref<256x512xf32, #tpu.memory_space<vmem>>, %arg9: memref<16x128xf32, #tpu.memory_space<vmem>>, %arg10: memref<16x128xf32, #tpu.memory_space<vmem>>, %arg11: memref<16x256xf32, #tpu.memory_space<vmem>>) attributes {dimension_semantics = [#tpu.dimension_semantics<parallel>, #tpu.dimension_semantics<arbitrary>], iteration_bounds = array<i64: 2, 2>, scalar_prefetch = 0 : i64, scratch_operands = 1 : i64, tpu.core_type = #tpu.core_type<tc>, window_params = [{transform_indices = @transform_0, window_bounds = array<i64: 16, 128>}, {transform_indices = @transform_1, window_bounds = array<i64: 16, 256>}, {transform_indices = @transform_2, window_bounds = array<i64: 16, 128>}, {pipeline_mode = #tpu.pipeline_mode<synchronous>, transform_indices = @transform_3, window_bounds = array<i64: 128, 256>}, {pipeline_mode = #tpu.pipeline_mode<synchronous>, transform_indices = @transform_4, window_bounds = array<i64: 256, 256>}, {transform_indices = @transform_5, window_bounds = array<i64: 128, 512>}, {transform_indices = @transform_6, window_bounds = array<i64: 256, 512>}, {transform_indices = @transform_7, window_bounds = array<i64: 16, 128>}, {transform_indices = @transform_8, window_bounds = array<i64: 16, 128>}]} {
    %c0 = arith.constant 0 : index
    %c0_0 = arith.constant 0 : index
    %0 = vector.load %arg2[%c0, %c0_0] : memref<16x128xf32, #tpu.memory_space<vmem>>, vector<16x128xf32>
    %c0_1 = arith.constant 0 : index
    %c0_2 = arith.constant 0 : index
    %1 = vector.load %arg3[%c0_1, %c0_2] : memref<16x256xf32, #tpu.memory_space<vmem>>, vector<16x256xf32>
    %c0_i32 = arith.constant 0 : i32
    %2 = arith.cmpi eq, %arg1, %c0_i32 : i32
    %3 = arith.extui %2 : i1 to i32
    %c0_i32_3 = arith.constant 0 : i32
    %4 = arith.cmpi ne, %3, %c0_i32_3 : i32
    scf.if %4 {
      %c0_20 = arith.constant 0 : index
      %c0_21 = arith.constant 0 : index
      %39 = vector.load %arg5[%c0_20, %c0_21] : memref<128x256xf32, #tpu.memory_space<vmem>>, vector<128x256xf32>
      %cst_22 = arith.constant dense<0.000000e+00> : vector<16x256xf32>
      %40 = tpu.matmul %0, %39, %cst_22 {dimension_numbers = #tpu.dot_dimension_numbers<[1], [0], [0], [1], [0, 0, 1, 1], [], []>} : vector<16x128xf32>, vector<128x256xf32>, vector<16x256xf32> -> vector<16x256xf32>
      %c0_23 = arith.constant 0 : index
      %c0_24 = arith.constant 0 : index
      %41 = vector.load %arg6[%c0_23, %c0_24] : memref<256x256xf32, #tpu.memory_space<vmem>>, vector<256x256xf32>
      %cst_25 = arith.constant dense<0.000000e+00> : vector<16x256xf32>
      %42 = tpu.matmul %1, %41, %cst_25 {dimension_numbers = #tpu.dot_dimension_numbers<[1], [0], [0], [1], [0, 0, 1, 1], [], []>} : vector<16x256xf32>, vector<256x256xf32>, vector<16x256xf32> -> vector<16x256xf32>
      %43 = arith.mulf %40, %42 : vector<16x256xf32>
      %c0_26 = arith.constant 0 : index
      %c0_27 = arith.constant 0 : index
      %44 = vector.load %arg11[%c0_26, %c0_27] : memref<16x256xf32, #tpu.memory_space<vmem>>, vector<16x256xf32>
      tpu.vector_store %arg11[%c0_26, %c0_27], %43 {strides = array<i32>} : memref<16x256xf32, #tpu.memory_space<vmem>>, vector<16x256xf32>,
    } else {
    }
    %c0_4 = arith.constant 0 : index
    %c0_5 = arith.constant 0 : index
    %5 = vector.load %arg11[%c0_4, %c0_5] : memref<16x256xf32, #tpu.memory_space<vmem>>, vector<16x256xf32>
    %c0_6 = arith.constant 0 : index
    %c0_7 = arith.constant 0 : index
    %6 = vector.load %arg7[%c0_6, %c0_7] : memref<128x512xf32, #tpu.memory_space<vmem>>, vector<128x512xf32>
    %cst = arith.constant dense<0.000000e+00> : vector<16x512xf32>
    %7 = tpu.matmul %0, %6, %cst {dimension_numbers = #tpu.dot_dimension_numbers<[1], [0], [0], [1], [0, 0, 1, 1], [], []>} : vector<16x128xf32>, vector<128x512xf32>, vector<16x512xf32> -> vector<16x512xf32>
    %c0_8 = arith.constant 0 : index
    %c0_9 = arith.constant 0 : index
    %8 = vector.load %arg8[%c0_8, %c0_9] : memref<256x512xf32, #tpu.memory_space<vmem>>, vector<256x512xf32>
    %cst_10 = arith.constant dense<0.000000e+00> : vector<16x512xf32>
    %9 = tpu.matmul %5, %8, %cst_10 {dimension_numbers = #tpu.dot_dimension_numbers<[1], [0], [0], [1], [0, 0, 1, 1], [], []>} : vector<16x256xf32>, vector<256x512xf32>, vector<16x512xf32> -> vector<16x512xf32>
    %10 = arith.addf %7, %9 : vector<16x512xf32>
    %11 = vector.extract_strided_slice %10 {offsets = [0, 0], sizes = [16, 128], strides = [1, 1]} : vector<16x512xf32> to vector<16x128xf32>
    %12 = arith.negf %11 : vector<16x128xf32>
    %13 = math.exp %12 : vector<16x128xf32>
    %cst_11 = arith.constant 1.000000e+00 : f32
    %14 = vector.broadcast %cst_11 : f32 to vector<16x128xf32>
    %15 = arith.addf %14, %13 : vector<16x128xf32>
    %16 = arith.divf %14, %15 : vector<16x128xf32>
    %17 = vector.extract_strided_slice %10 {offsets = [0, 128], sizes = [16, 128], strides = [1, 1]} : vector<16x512xf32> to vector<16x128xf32>
    %18 = arith.negf %17 : vector<16x128xf32>
    %19 = math.exp %18 : vector<16x128xf32>
    %cst_12 = arith.constant 1.000000e+00 : f32
    %20 = vector.broadcast %cst_12 : f32 to vector<16x128xf32>
    %21 = arith.addf %20, %19 : vector<16x128xf32>
    %22 = arith.divf %20, %21 : vector<16x128xf32>
    %23 = vector.extract_strided_slice %10 {offsets = [0, 256], sizes = [16, 128], strides = [1, 1]} : vector<16x512xf32> to vector<16x128xf32>
    %24 = arith.negf %23 : vector<16x128xf32>
    %25 = math.exp %24 : vector<16x128xf32>
    %cst_13 = arith.constant 1.000000e+00 : f32
    %26 = vector.broadcast %cst_13 : f32 to vector<16x128xf32>
    %27 = arith.addf %26, %25 : vector<16x128xf32>
    %28 = arith.divf %26, %27 : vector<16x128xf32>
    %29 = vector.extract_strided_slice %10 {offsets = [0, 384], sizes = [16, 128], strides = [1, 1]} : vector<16x512xf32> to vector<16x128xf32>
    %30 = math.tanh %29 : vector<16x128xf32>
    %c0_14 = arith.constant 0 : index
    %c0_15 = arith.constant 0 : index
    %31 = vector.load %arg4[%c0_14, %c0_15] : memref<16x128xf32, #tpu.memory_space<vmem>>, vector<16x128xf32>
    %32 = arith.mulf %22, %31 : vector<16x128xf32>
    %33 = arith.mulf %16, %30 : vector<16x128xf32>
    %34 = arith.addf %32, %33 : vector<16x128xf32>
    %35 = math.tanh %34 : vector<16x128xf32>
    %36 = arith.mulf %28, %35 : vector<16x128xf32>
    %c0_16 = arith.constant 0 : index
    %c0_17 = arith.constant 0 : index
    %37 = vector.load %arg9[%c0_16, %c0_17] : memref<16x128xf32, #tpu.memory_space<vmem>>, vector<16x128xf32>
    tpu.vector_store %arg9[%c0_16, %c0_17], %36 {strides = array<i32>} : memref<16x128xf32, #tpu.memory_space<vmem>>, vector<16x128xf32>,
    %c0_18 = arith.constant 0 : index
    %c0_19 = arith.constant 0 : index
    %38 = vector.load %arg10[%c0_18, %c0_19] : memref<16x128xf32, #tpu.memory_space<vmem>>, vector<16x128xf32>
    tpu.vector_store %arg10[%c0_18, %c0_19], %34 {strides = array<i32>} : memref<16x128xf32, #tpu.memory_space<vmem>>, vector<16x128xf32>,
    return
  }
  func.func @transform_0(%arg0: i32, %arg1: i32) -> (i32, i32) {
    %c0_i32 = arith.constant 0 : i32
    %c0_i32_0 = arith.constant 0 : i32
    return %arg0, %c0_i32 : i32, i32
  }
  func.func @transform_1(%arg0: i32, %arg1: i32) -> (i32, i32) {
    %c0_i32 = arith.constant 0 : i32
    %c0_i32_0 = arith.constant 0 : i32
    return %arg0, %c0_i32 : i32, i32
  }
  func.func @transform_2(%arg0: i32, %arg1: i32) -> (i32, i32) {
    %c0_i32 = arith.constant 0 : i32
    return %arg0, %arg1 : i32, i32
  }
  func.func @transform_3(%arg0: i32, %arg1: i32) -> (i32, i32) {
    %c0_i32 = arith.constant 0 : i32
    %c0_i32_0 = arith.constant 0 : i32
    %c0_i32_1 = arith.constant 0 : i32
    return %c0_i32, %c0_i32_0 : i32, i32
  }
  func.func @transform_4(%arg0: i32, %arg1: i32) -> (i32, i32) {
    %c0_i32 = arith.constant 0 : i32
    %c0_i32_0 = arith.constant 0 : i32
    %c0_i32_1 = arith.constant 0 : i32
    return %c0_i32, %c0_i32_0 : i32, i32
  }
  func.func @transform_5(%arg0: i32, %arg1: i32) -> (i32, i32) {
    %c0_i32 = arith.constant 0 : i32
    %c0_i32_0 = arith.constant 0 : i32
    return %c0_i32, %arg1 : i32, i32
  }
  func.func @transform_6(%arg0: i32, %arg1: i32) -> (i32, i32) {
    %c0_i32 = arith.constant 0 : i32
    %c0_i32_0 = arith.constant 0 : i32
    return %c0_i32, %arg1 : i32, i32
  }
  func.func @transform_7(%arg0: i32, %arg1: i32) -> (i32, i32) {
    %c0_i32 = arith.constant 0 : i32
    return %arg0, %arg1 : i32, i32
  }
  func.func @transform_8(%arg0: i32, %arg1: i32) -> (i32, i32) {
    %c0_i32 = arith.constant 0 : i32
    return %arg0, %arg1 : i32, i32
  }
}

module attributes {stable_mosaic.version = 11 : i64} {
  func.func @_mlstm_kernel(%arg0: i32, %arg1: i32, %arg2: memref<16x128xf32, #tpu.memory_space<vmem>>, %arg3: memref<16x256xf32, #tpu.memory_space<vmem>>, %arg4: memref<16x128xf32, #tpu.memory_space<vmem>>, %arg5: memref<128x256xf32, #tpu.memory_space<vmem>>, %arg6: memref<256x256xf32, #tpu.memory_space<vmem>>, %arg7: memref<128x512xf32, #tpu.memory_space<vmem>>, %arg8: memref<256x512xf32, #tpu.memory_space<vmem>>, %arg9: memref<16x128xf32, #tpu.memory_space<vmem>>, %arg10: memref<16x128xf32, #tpu.memory_space<vmem>>, %arg11: memref<16x256xf32, #tpu.memory_space<vmem>>) attributes {dimension_semantics = [#tpu.dimension_semantics<parallel>, #tpu.dimension_semantics<arbitrary>], iteration_bounds = array<i64: 2, 2>, scalar_prefetch = 0 : i64, scratch_operands = 1 : i64, tpu.core_type = #tpu.core_type<tc>, window_params = [{transform_indices = @transform_0, window_bounds = array<i64: 16, 128>}, {transform_indices = @transform_1, window_bounds = array<i64: 16, 256>}, {transform_indices = @transform_2, window_bounds = array<i64: 16, 128>}, {pipeline_mode = #tpu.pipeline_mode<synchronous>, transform_indices = @transform_3, window_bounds = array<i64: 128, 256>}, {pipeline_mode = #tpu.pipeline_mode<synchronous>, transform_indices = @transform_4, window_bounds = array<i64: 256, 256>}, {transform_indices = @transform_5, window_bounds = array<i64: 128, 512>}, {transform_indices = @transform_6, window_bounds = array<i64: 256, 512>}, {transform_indices = @transform_7, window_bounds = array<i64: 16, 128>}, {transform_indices = @transform_8, window_bounds = array<i64: 16, 128>}]} {
    %c0 = arith.constant 0 : index
    %c0_0 = arith.constant 0 : index
    %0 = vector.load %arg2[%c0, %c0_0] : memref<16x128xf32, #tpu.memory_space<vmem>>, vector<16x128xf32>
    %c0_1 = arith.constant 0 : index
    %c0_2 = arith.constant 0 : index
    %1 = vector.load %arg3[%c0_1, %c0_2] : memref<16x256xf32, #tpu.memory_space<vmem>>, vector<16x256xf32>
    %c0_i32 = arith.constant 0 : i32
    %2 = arith.cmpi eq, %arg1, %c0_i32 : i32
    %3 = arith.extui %2 : i1 to i32
    %c0_i32_3 = arith.constant 0 : i32
    %4 = arith.cmpi ne, %3, %c0_i32_3 : i32
    scf.if %4 {
      %c0_20 = arith.constant 0 : index
      %c0_21 = arith.constant 0 : index
      %39 = vector.load %arg5[%c0_20, %c0_21] : memref<128x256xf32, #tpu.memory_space<vmem>>, vector<128x256xf32>
      %cst_22 = arith.constant dense<0.000000e+00> : vector<16x256xf32>
      %40 = tpu.matmul %0, %39, %cst_22 {dimension_numbers = #tpu.dot_dimension_numbers<[1], [0], [0], [1], [0, 0, 1, 1], [], []>} : vector<16x128xf32>, vector<128x256xf32>, vector<16x256xf32> -> vector<16x256xf32>
      %c0_23 = arith.constant 0 : index
      %c0_24 = arith.constant 0 : index
      %41 = vector.load %arg6[%c0_23, %c0_24] : memref<256x256xf32, #tpu.memory_space<vmem>>, vector<256x256xf32>
      %cst_25 = arith.constant dense<0.000000e+00> : vector<16x256xf32>
      %42 = tpu.matmul %1, %41, %cst_25 {dimension_numbers = #tpu.dot_dimension_numbers<[1], [0], [0], [1], [0, 0, 1, 1], [], []>} : vector<16x256xf32>, vector<256x256xf32>, vector<16x256xf32> -> vector<16x256xf32>
      %43 = arith.mulf %40, %42 : vector<16x256xf32>
      %c0_26 = arith.constant 0 : index
      %c0_27 = arith.constant 0 : index
      %44 = vector.load %arg11[%c0_26, %c0_27] : memref<16x256xf32, #tpu.memory_space<vmem>>, vector<16x256xf32>
      tpu.vector_store %arg11[%c0_26, %c0_27], %43 {strides = array<i32>} : memref<16x256xf32, #tpu.memory_space<vmem>>, vector<16x256xf32>,
    } else {
    }
    %c0_4 = arith.constant 0 : index
    %c0_5 = arith.constant 0 : index
    %5 = vector.load %arg11[%c0_4, %c0_5] : memref<16x256xf32, #tpu.memory_space<vmem>>, vector<16x256xf32>
    %c0_6 = arith.constant 0 : index
    %c0_7 = arith.constant 0 : index
    %6 = vector.load %arg7[%c0_6, %c0_7] : memref<128x512xf32, #tpu.memory_space<vmem>>, vector<128x512xf32>
    %cst = arith.constant dense<0.000000e+00> : vector<16x512xf32>
    %7 = tpu.matmul %0, %6, %cst {dimension_numbers = #tpu.dot_dimension_numbers<[1], [0], [0], [1], [0, 0, 1, 1], [], []>} : vector<16x128xf32>, vector<128x512xf32>, vector<16x512xf32> -> vector<16x512xf32>
    %c0_8 = arith.constant 0 : index
    %c0_9 = arith.constant 0 : index
    %8 = vector.load %arg8[%c0_8, %c0_9] : memref<256x512xf32, #tpu.memory_space<vmem>>, vector<256x512xf32>
    %cst_10 = arith.constant dense<0.000000e+00> : vector<16x512xf32>
    %9 = tpu.matmul %5, %8, %cst_10 {dimension_numbers = #tpu.dot_dimension_numbers<[1], [0], [0], [1], [0, 0, 1, 1], [], []>} : vector<16x256xf32>, vector<256x512xf32>, vector<16x512xf32> -> vector<16x512xf32>
    %10 = arith.addf %7, %9 : vector<16x512xf32>
    %11 = vector.extract_strided_slice %10 {offsets = [0, 0], sizes = [16, 128], strides = [1, 1]} : vector<16x512xf32> to vector<16x128xf32>
    %12 = arith.negf %11 : vector<16x128xf32>
    %13 = math.exp %12 : vector<16x128xf32>
    %cst_11 = arith.constant 1.000000e+00 : f32
    %14 = vector.broadcast %cst_11 : f32 to vector<16x128xf32>
    %15 = arith.addf %14, %13 : vector<16x128xf32>
    %16 = arith.divf %14, %15 : vector<16x128xf32>
    %17 = vector.extract_strided_slice %10 {offsets = [0, 128], sizes = [16, 128], strides = [1, 1]} : vector<16x512xf32> to vector<16x128xf32>
    %18 = arith.negf %17 : vector<16x128xf32>
    %19 = math.exp %18 : vector<16x128xf32>
    %cst_12 = arith.constant 1.000000e+00 : f32
    %20 = vector.broadcast %cst_12 : f32 to vector<16x128xf32>
    %21 = arith.addf %20, %19 : vector<16x128xf32>
    %22 = arith.divf %20, %21 : vector<16x128xf32>
    %23 = vector.extract_strided_slice %10 {offsets = [0, 256], sizes = [16, 128], strides = [1, 1]} : vector<16x512xf32> to vector<16x128xf32>
    %24 = arith.negf %23 : vector<16x128xf32>
    %25 = math.exp %24 : vector<16x128xf32>
    %cst_13 = arith.constant 1.000000e+00 : f32
    %26 = vector.broadcast %cst_13 : f32 to vector<16x128xf32>
    %27 = arith.addf %26, %25 : vector<16x128xf32>
    %28 = arith.divf %26, %27 : vector<16x128xf32>
    %29 = vector.extract_strided_slice %10 {offsets = [0, 384], sizes = [16, 128], strides = [1, 1]} : vector<16x512xf32> to vector<16x128xf32>
    %30 = math.tanh %29 : vector<16x128xf32>
    %c0_14 = arith.constant 0 : index
    %c0_15 = arith.constant 0 : index
    %31 = vector.load %arg4[%c0_14, %c0_15] : memref<16x128xf32, #tpu.memory_space<vmem>>, vector<16x128xf32>
    %32 = arith.mulf %22, %31 : vector<16x128xf32>
    %33 = arith.mulf %16, %30 : vector<16x128xf32>
    %34 = arith.addf %32, %33 : vector<16x128xf32>
    %35 = math.tanh %34 : vector<16x128xf32>
    %36 = arith.mulf %28, %35 : vector<16x128xf32>
    %c0_16 = arith.constant 0 : index
    %c0_17 = arith.constant 0 : index
    %37 = vector.load %arg9[%c0_16, %c0_17] : memref<16x128xf32, #tpu.memory_space<vmem>>, vector<16x128xf32>
    tpu.vector_store %arg9[%c0_16, %c0_17], %36 {strides = array<i32>} : memref<16x128xf32, #tpu.memory_space<vmem>>, vector<16x128xf32>,
    %c0_18 = arith.constant 0 : index
    %c0_19 = arith.constant 0 : index
    %38 = vector.load %arg10[%c0_18, %c0_19] : memref<16x128xf32, #tpu.memory_space<vmem>>, vector<16x128xf32>
    tpu.vector_store %arg10[%c0_18, %c0_19], %34 {strides = array<i32>} : memref<16x128xf32, #tpu.memory_space<vmem>>, vector<16x128xf32>,
    return
  }
  func.func @transform_0(%arg0: i32, %arg1: i32) -> (i32, i32) {
    %c0_i32 = arith.constant 0 : i32
    %c0_i32_0 = arith.constant 0 : i32
    return %arg0, %c0_i32 : i32, i32
  }
  func.func @transform_1(%arg0: i32, %arg1: i32) -> (i32, i32) {
    %c0_i32 = arith.constant 0 : i32
    %c0_i32_0 = arith.constant 0 : i32
    return %arg0, %c0_i32 : i32, i32
  }
  func.func @transform_2(%arg0: i32, %arg1: i32) -> (i32, i32) {
    %c0_i32 = arith.constant 0 : i32
    return %arg0, %arg1 : i32, i32
  }
  func.func @transform_3(%arg0: i32, %arg1: i32) -> (i32, i32) {
    %c0_i32 = arith.constant 0 : i32
    %c0_i32_0 = arith.constant 0 : i32
    %c0_i32_1 = arith.constant 0 : i32
    return %c0_i32, %c0_i32_0 : i32, i32
  }
  func.func @transform_4(%arg0: i32, %arg1: i32) -> (i32, i32) {
    %c0_i32 = arith.constant 0 : i32
    %c0_i32_0 = arith.constant 0 : i32
    %c0_i32_1 = arith.constant 0 : i32
    return %c0_i32, %c0_i32_0 : i32, i32
  }
  func.func @transform_5(%arg0: i32, %arg1: i32) -> (i32, i32) {
    %c0_i32 = arith.constant 0 : i32
    %c0_i32_0 = arith.constant 0 : i32
    return %c0_i32, %arg1 : i32, i32
  }
  func.func @transform_6(%arg0: i32, %arg1: i32) -> (i32, i32) {
    %c0_i32 = arith.constant 0 : i32
    %c0_i32_0 = arith.constant 0 : i32
    return %c0_i32, %arg1 : i32, i32
  }
  func.func @transform_7(%arg0: i32, %arg1: i32) -> (i32, i32) {
    %c0_i32 = arith.constant 0 : i32
    return %arg0, %arg1 : i32, i32
  }
  func.func @transform_8(%arg0: i32, %arg1: i32) -> (i32, i32) {
    %c0_i32 = arith.constant 0 : i32
    return %arg0, %arg1 : i32, i32
  }
}

</mosaic_0001>

<llo_original>
// kernel: tpu_custom_call.1
$region0: #{tpu_custom_call.1}
  #allocation0 [shape = 'u32[]', space=smem, size = 0x4, offset = 0x4, fixed_abs, tag = 'smem constant byte address 0x4 - core index']
  #allocation1 [shape = 'u32[144,128]{1,0:T(1,128)}', space=vmem, size = 0x12000, scoped, tag = 'internal scratch']
  #allocation2 [shape = 'f32[16,256]{1,0:T(8,128)}', space=vmem, size = 0x4000, scoped, tag = 'scratch operand']
  %s0 = inlined_call_operand.hbm [shape: f32[32,128], index: 0, kind: input, shape index: {}]
  %s1 = inlined_call_operand.hbm [shape: f32[32,256], index: 1, kind: input, shape index: {}]
  %s2 = inlined_call_operand.hbm [shape: f32[32,256], index: 2, kind: input, shape index: {}]
  %s3 = inlined_call_operand.hbm [shape: f32[128,256], index: 3, kind: input, shape index: {}]
  %s4 = inlined_call_operand.hbm [shape: f32[256,256], index: 4, kind: input, shape index: {}]
  %s5 = inlined_call_operand.hbm [shape: f32[128,1024], index: 5, kind: input, shape index: {}]
  %s6 = inlined_call_operand.hbm [shape: f32[256,1024], index: 6, kind: input, shape index: {}]
  %s7 = inlined_call_operand.hbm [shape: f32[32,256], index: 7, kind: output, shape index: {0}]
  %s8 = inlined_call_operand.hbm [shape: f32[32,256], index: 8, kind: output, shape index: {1}]
  %9 = xla_tuple %s7, %s8
  %s10 = sld [smem:[#allocation0]]
  $region101: #{tpu_custom_call.1} parent=0
    _
  %s12 = ssub.s32 1, %s10
  %s13 = scalar_select 0, %s12, %s10
  $region1: #{tpu_custom_call.1} parent=0
    #allocation3 [shape = 'u8[16384]{0}', space=vmem, size = 0x4000, scoped, tag = 'input window, operand 0']
    #allocation4 [shape = 's32[2]{0}', space=sflag, size = 0x8, scoped, tag = 'scoped memory for tpu_custom_call.1']
    #allocation5 [shape = 's32[2]{0}', space=sflag, size = 0x8, scoped, tag = 'scoped memory for tpu_custom_call.1']
    #allocation6 [shape = 'u8[32768]{0}', space=vmem, size = 0x8000, scoped, tag = 'input window, operand 1']
    #allocation7 [shape = 's32[2]{0}', space=sflag, size = 0x8, scoped, tag = 'scoped memory for tpu_custom_call.1']
    #allocation8 [shape = 'u8[16384]{0}', space=vmem, size = 0x4000, scoped, tag = 'input window, operand 2']
    #allocation9 [shape = 'u8[131072]{0}', space=vmem, size = 0x20000, scoped, tag = 'input window, operand 3, single buffered']
    #allocation10 [shape = 's32[1]{0}', space=sflag, size = 0x4, scoped, tag = 'scoped memory for tpu_custom_call.1']
    #allocation11 [shape = 'u8[262144]{0}', space=vmem, size = 0x40000, scoped, tag = 'input window, operand 4, single buffered']
    #allocation12 [shape = 'u8[524288]{0}', space=vmem, size = 0x80000, scoped, tag = 'input window, operand 5']
    #allocation13 [shape = 's32[2]{0}', space=sflag, size = 0x8, scoped, tag = 'scoped memory for tpu_custom_call.1']
    #allocation14 [shape = 'u8[1048576]{0}', space=vmem, size = 0x100000, scoped, tag = 'input window, operand 6']
    #allocation15 [shape = 'u8[16384]{0}', space=vmem, size = 0x4000, scoped, tag = 'output window, operand 0']
    #allocation16 [shape = 'u8[16384]{0}', space=vmem, size = 0x4000, scoped, tag = 'output window, operand 1']
    #allocation17 [shape = 's32[2]{0}', space=sflag, size = 0x8, scoped, tag = 'scoped memory for tpu_custom_call.1']
    %14 = vsyncpa [#allocation4], 0
    %s15 = scalar_lea.sflag [#allocation4], 1
    %16 = vsyncpa %s15, 0
    %17 = vsyncpa [#allocation7], 0
    %s18 = scalar_lea.sflag [#allocation7], 1
    %19 = vsyncpa %s18, 0
    %20 = vsyncpa [#allocation10], 0
    %21 = vsyncpa [#allocation13], 0
    %s22 = scalar_lea.sflag [#allocation13], 1
    %23 = vsyncpa %s22, 0
    %24 = vsyncpa [#allocation5], 0
    %s25 = scalar_lea.sflag [#allocation5], 1
    %26 = vsyncpa %s25, 0
    %27 = vsyncpa [#allocation17], 0
    %s28 = scalar_lea.sflag [#allocation17], 1
    %29 = vsyncpa %s28, 0
    loop: start=0, step=1, limit=6
    $region2: #{tpu_custom_call.1} parent=1 // loop_pre_header
      _
    $region3: #{tpu_custom_call.1} parent=1 // loop_header
      %s31 = sphi 0, %s35
      %p32 = scmp.ge.s32.totalorder %s31, 6
      %s38 = sphi 0, %s50
      %s39 = sphi 0, %s46
      %s40 = sphi 0, %s38
      %s41 = sphi 0, %s39
      %s42 = sphi 0, %s40
      %s43 = sphi 0, %s41
      %s53 = sphi 0, %s55
      %s56 = sphi 0, %s53
      %s57 = sphi 0, %s56
      %s73 = sphi 0, %s57
      %s79 = sphi 0, %s81
      %s82 = sphi 0, %s79
      %s83 = sphi 0, %s82
      %s99 = sphi 0, %s83
      %s107 = sphi 0, %s109
      %s110 = sphi 0, %s107
      %s111 = sphi 0, %s110
      %s127 = sphi 0, %s111
      %s131 = sphi 0, %s131
      %s133 = sphi 0, %s131
      %s134 = sphi 0, %s133
      %s148 = sphi 0, %s134
      %s152 = sphi 0, %s152
      %s154 = sphi 0, %s152
      %s155 = sphi 0, %s154
      %s169 = sphi 0, %s155
      %s175 = sphi 0, %s177
      %s178 = sphi 0, %s175
      %s179 = sphi 0, %s178
      %s195 = sphi 0, %s179
      %s201 = sphi 0, %s203
      %s204 = sphi 0, %s201
      %s205 = sphi 0, %s204
      %s221 = sphi 0, %s205
      %s229 = sphi 0, %s231
      %s232 = sphi 0, %s229
      %s233 = sphi 0, %s232
      %s249 = sphi 0, %s233
      %s257 = sphi 0, %s259
      %s260 = sphi 0, %s257
      %s261 = sphi 0, %s260
      %s277 = sphi 0, %s261
    $region4: #{tpu_custom_call.1} parent=1 // loop_header_branch
      %34 = sbr.rel (%p32) target = $region8
    $region5: #{tpu_custom_call.1} parent=1 // loop_body
      %s36 = ssub.s32 %s31, 1
      %s37 = ssub.s32 %s31, 2
      %s44 = sadd.s32 1, %s39
      %p45 = scmp.ge.s32.totalorder %s44, 2
      %s46 = scalar_select %p45, 0, %s44
      %s47 = sadd.s32 1, %s38
      %s48 = scalar_select %p45, %s47, %s38
      %p49 = scmp.ge.s32.totalorder %s48, 2
      %s50 = scalar_select %p49, 0, %s48
      %s51 = ssub.s32 %s38, %s50
      %p52 = scmp.eq.s32.totalorder %s51, 0
      %s54 = sadd.s32 %s53, 1
      %s55 = scalar_select %p52, %s53, %s54
      %p58 = pneg %p52
      %p59 = scmp.eq.s32.totalorder %s31, 3
      %p60 = por %p58, %p59
      %p61 = scmp.ne.s32.totalorder %s53, %s56
      %p62 = scmp.eq.s32.totalorder %s31, 0
      %p63 = por %p61, %p62
      %p64 = scmp.ne.s32.totalorder %s53, %s56
      %p65 = scmp.eq.s32.totalorder %s36, 3
      %p66 = por %p64, %p65
      %p67 = scmp.ne.s32.totalorder %s56, %s57
      %p68 = scmp.eq.s32.totalorder %s36, 0
      %p69 = por %p67, %p68
      %p70 = scmp.ne.s32.totalorder %s56, %s57
      %p71 = scmp.eq.s32.totalorder %s37, 3
      %p72 = por %p70, %p71
      %p74 = scmp.ne.s32.totalorder %s57, %s73
      %p75 = scmp.eq.s32.totalorder %s37, 0
      %p76 = por %p74, %p75
      %s77 = ssub.s32 %s38, %s50
      %p78 = scmp.eq.s32.totalorder %s77, 0
      %s80 = sadd.s32 %s79, 1
      %s81 = scalar_select %p78, %s79, %s80
      %p84 = pneg %p78
      %p85 = scmp.eq.s32.totalorder %s31, 3
      %p86 = por %p84, %p85
      %p87 = scmp.ne.s32.totalorder %s79, %s82
      %p88 = scmp.eq.s32.totalorder %s31, 0
      %p89 = por %p87, %p88
      %p90 = scmp.ne.s32.totalorder %s79, %s82
      %p91 = scmp.eq.s32.totalorder %s36, 3
      %p92 = por %p90, %p91
      %p93 = scmp.ne.s32.totalorder %s82, %s83
      %p94 = scmp.eq.s32.totalorder %s36, 0
      %p95 = por %p93, %p94
      %p96 = scmp.ne.s32.totalorder %s82, %s83
      %p97 = scmp.eq.s32.totalorder %s37, 3
      %p98 = por %p96, %p97
      %p100 = scmp.ne.s32.totalorder %s83, %s99
      %p101 = scmp.eq.s32.totalorder %s37, 0
      %p102 = por %p100, %p101
      %s103 = ssub.s32 %s38, %s50
      %s104 = ssub.s32 %s39, %s46
      %s105 = sor.u32 %s103, %s104
      %p106 = scmp.eq.s32.totalorder %s105, 0
      %s108 = sadd.s32 %s107, 1
      %s109 = scalar_select %p106, %s107, %s108
      %p112 = pneg %p106
      %p113 = scmp.eq.s32.totalorder %s31, 3
      %p114 = por %p112, %p113
      %p115 = scmp.ne.s32.totalorder %s107, %s110
      %p116 = scmp.eq.s32.totalorder %s31, 0
      %p117 = por %p115, %p116
      %p118 = scmp.ne.s32.totalorder %s107, %s110
      %p119 = scmp.eq.s32.totalorder %s36, 3
      %p120 = por %p118, %p119
      %p121 = scmp.ne.s32.totalorder %s110, %s111
      %p122 = scmp.eq.s32.totalorder %s36, 0
      %p123 = por %p121, %p122
      %p124 = scmp.ne.s32.totalorder %s110, %s111
      %p125 = scmp.eq.s32.totalorder %s37, 3
      %p126 = por %p124, %p125
      %p128 = scmp.ne.s32.totalorder %s111, %s127
      %p129 = scmp.eq.s32.totalorder %s37, 0
      %p130 = por %p128, %p129
      %s132 = sadd.s32 %s131, 1
      %p135 = scmp.eq.s32.totalorder %s31, 3
      %p136 = scmp.ne.s32.totalorder %s131, %s133
      %p137 = scmp.eq.s32.totalorder %s31, 0
      %p138 = por %p136, %p137
      %p139 = scmp.ne.s32.totalorder %s131, %s133
      %p140 = scmp.eq.s32.totalorder %s36, 3
      %p141 = por %p139, %p140
      %p142 = scmp.ne.s32.totalorder %s133, %s134
      %p143 = scmp.eq.s32.totalorder %s36, 0
      %p144 = por %p142, %p143
      %p145 = scmp.ne.s32.totalorder %s133, %s134
      %p146 = scmp.eq.s32.totalorder %s37, 3
      %p147 = por %p145, %p146
      %p149 = scmp.ne.s32.totalorder %s134, %s148
      %p150 = scmp.eq.s32.totalorder %s37, 0
      %p151 = por %p149, %p150
      %s153 = sadd.s32 %s152, 1
      %p156 = scmp.eq.s32.totalorder %s31, 3
      %p157 = scmp.ne.s32.totalorder %s152, %s154
      %p158 = scmp.eq.s32.totalorder %s31, 0
      %p159 = por %p157, %p158
      %p160 = scmp.ne.s32.totalorder %s152, %s154
      %p161 = scmp.eq.s32.totalorder %s36, 3
      %p162 = por %p160, %p161
      %p163 = scmp.ne.s32.totalorder %s154, %s155
      %p164 = scmp.eq.s32.totalorder %s36, 0
      %p165 = por %p163, %p164
      %p166 = scmp.ne.s32.totalorder %s154, %s155
      %p167 = scmp.eq.s32.totalorder %s37, 3
      %p168 = por %p166, %p167
      %p170 = scmp.ne.s32.totalorder %s155, %s169
      %p171 = scmp.eq.s32.totalorder %s37, 0
      %p172 = por %p170, %p171
      %s173 = ssub.s32 %s39, %s46
      %p174 = scmp.eq.s32.totalorder %s173, 0
      %s176 = sadd.s32 %s175, 1
      %s177 = scalar_select %p174, %s175, %s176
      %p180 = pneg %p174
      %p181 = scmp.eq.s32.totalorder %s31, 3
      %p182 = por %p180, %p181
      %p183 = scmp.ne.s32.totalorder %s175, %s178
      %p184 = scmp.eq.s32.totalorder %s31, 0
      %p185 = por %p183, %p184
      %p186 = scmp.ne.s32.totalorder %s175, %s178
      %p187 = scmp.eq.s32.totalorder %s36, 3
      %p188 = por %p186, %p187
      %p189 = scmp.ne.s32.totalorder %s178, %s179
      %p190 = scmp.eq.s32.totalorder %s36, 0
      %p191 = por %p189, %p190
      %p192 = scmp.ne.s32.totalorder %s178, %s179
      %p193 = scmp.eq.s32.totalorder %s37, 3
      %p194 = por %p192, %p193
      %p196 = scmp.ne.s32.totalorder %s179, %s195
      %p197 = scmp.eq.s32.totalorder %s37, 0
      %p198 = por %p196, %p197
      %s199 = ssub.s32 %s39, %s46
      %p200 = scmp.eq.s32.totalorder %s199, 0
      %s202 = sadd.s32 %s201, 1
      %s203 = scalar_select %p200, %s201, %s202
      %p206 = pneg %p200
      %p207 = scmp.eq.s32.totalorder %s31, 3
      %p208 = por %p206, %p207
      %p209 = scmp.ne.s32.totalorder %s201, %s204
      %p210 = scmp.eq.s32.totalorder %s31, 0
      %p211 = por %p209, %p210
      %p212 = scmp.ne.s32.totalorder %s201, %s204
      %p213 = scmp.eq.s32.totalorder %s36, 3
      %p214 = por %p212, %p213
      %p215 = scmp.ne.s32.totalorder %s204, %s205
      %p216 = scmp.eq.s32.totalorder %s36, 0
      %p217 = por %p215, %p216
      %p218 = scmp.ne.s32.totalorder %s204, %s205
      %p219 = scmp.eq.s32.totalorder %s37, 3
      %p220 = por %p218, %p219
      %p222 = scmp.ne.s32.totalorder %s205, %s221
      %p223 = scmp.eq.s32.totalorder %s37, 0
      %p224 = por %p222, %p223
      %s225 = ssub.s32 %s38, %s50
      %s226 = ssub.s32 %s39, %s46
      %s227 = sor.u32 %s225, %s226
      %p228 = scmp.eq.s32.totalorder %s227, 0
      %s230 = sadd.s32 %s229, 1
      %s231 = scalar_select %p228, %s229, %s230
      %p234 = pneg %p228
      %p235 = scmp.eq.s32.totalorder %s31, 3
      %p236 = por %p234, %p235
      %p237 = scmp.ne.s32.totalorder %s229, %s232
      %p238 = scmp.eq.s32.totalorder %s31, 0
      %p239 = por %p237, %p238
      %p240 = scmp.ne.s32.totalorder %s229, %s232
      %p241 = scmp.eq.s32.totalorder %s36, 3
      %p242 = por %p240, %p241
      %p243 = scmp.ne.s32.totalorder %s232, %s233
      %p244 = scmp.eq.s32.totalorder %s36, 0
      %p245 = por %p243, %p244
      %p246 = scmp.ne.s32.totalorder %s232, %s233
      %p247 = scmp.eq.s32.totalorder %s37, 3
      %p248 = por %p246, %p247
      %p250 = scmp.ne.s32.totalorder %s233, %s249
      %p251 = scmp.eq.s32.totalorder %s37, 0
      %p252 = por %p250, %p251
      %s253 = ssub.s32 %s38, %s50
      %s254 = ssub.s32 %s39, %s46
      %s255 = sor.u32 %s253, %s254
      %p256 = scmp.eq.s32.totalorder %s255, 0
      %s258 = sadd.s32 %s257, 1
      %s259 = scalar_select %p256, %s257, %s258
      %p262 = pneg %p256
      %p263 = scmp.eq.s32.totalorder %s31, 3
      %p264 = por %p262, %p263
      %p265 = scmp.ne.s32.totalorder %s257, %s260
      %p266 = scmp.eq.s32.totalorder %s31, 0
      %p267 = por %p265, %p266
      %p268 = scmp.ne.s32.totalorder %s257, %s260
      %p269 = scmp.eq.s32.totalorder %s36, 3
      %p270 = por %p268, %p269
      %p271 = scmp.ne.s32.totalorder %s260, %s261
      %p272 = scmp.eq.s32.totalorder %s36, 0
      %p273 = por %p271, %p272
      %p274 = scmp.ne.s32.totalorder %s260, %s261
      %p275 = scmp.eq.s32.totalorder %s37, 3
      %p276 = por %p274, %p275
      %p278 = scmp.ne.s32.totalorder %s261, %s277
      %p279 = scmp.eq.s32.totalorder %s37, 0
      %p280 = por %p278, %p279
      %p281 = scmp.le.s32.totalorder 1, %s31
      %p282 = scmp.lt.s32.totalorder %s31, 5
      %p283 = pnand %p281, %p282
      %p284 = pneg %p283
      // Predicated region
      $region9: #{tpu_custom_call.1} parent=5 // pred_check
        _
      $region10: #{tpu_custom_call.1} parent=5 // pred_check_branch
        %286 = sbr.rel (%p283) target = $region12
      $region11: #{tpu_custom_call.1} parent=5 // pred_region
        %s287 = ssub.s32 %s31, 1
        // Predicated region
        $region13: #{tpu_custom_call.1} parent=11 // pred_check
          %p288 = pneg %p144
        $region14: #{tpu_custom_call.1} parent=11 // pred_check_branch
          %290 = sbr.rel (%p288) target = $region16
        $region15: #{tpu_custom_call.1} parent=11 // pred_region
          %s292 = ssub.s32 4096, 4096
          %293 = vsyncadd [#allocation10], %s292
          %s294 = sshll.u32 [#allocation9], 4
          %s295 = int_to_ptr.vmem [resolvable:$true] %s294
          %300 = dma.hbm_to_vmem [thread:$0]  %s3, 4096, %s295, [#allocation10], 256, 256, 16
        $region16: #{tpu_custom_call.1} parent=11 // pred_fallthru
          _
        // Predicated region
        $region17: #{tpu_custom_call.1} parent=11 // pred_check
          %p301 = pneg %p165
        $region18: #{tpu_custom_call.1} parent=11 // pred_check_branch
          %303 = sbr.rel (%p301) target = $region20
        $region19: #{tpu_custom_call.1} parent=11 // pred_region
          %s305 = ssub.s32 8192, 8192
          %306 = vsyncadd [#allocation10], %s305
          %s307 = sshll.u32 [#allocation11], 4
          %s308 = int_to_ptr.vmem [resolvable:$true] %s307
          %313 = dma.hbm_to_vmem [thread:$0]  %s4, 8192, %s308, [#allocation10], 256, 256, 16
        $region20: #{tpu_custom_call.1} parent=11 // pred_fallthru
          _
      $region12: #{tpu_custom_call.1} parent=5 // pred_fallthru
        _
      %p314 = scmp.lt.s32.totalorder %s31, 4
      // Predicated region
      $region21: #{tpu_custom_call.1} parent=5 // pred_check
        %p315 = pneg %p314
      $region22: #{tpu_custom_call.1} parent=5 // pred_check_branch
        %317 = sbr.rel (%p315) target = $region24
      $region23: #{tpu_custom_call.1} parent=5 // pred_region
        // Predicated region
        $region25: #{tpu_custom_call.1} parent=23 // pred_check
          %p318 = pneg %p63
        $region26: #{tpu_custom_call.1} parent=23 // pred_check_branch
          %320 = sbr.rel (%p318) target = $region28
        $region27: #{tpu_custom_call.1} parent=23 // pred_region
          %s321 = sand.u32 %s53, 1
          %s322 = scalar_lea.sflag [#allocation4], %s321
          %s323 = sand.u32 %s53, 1
          %s324 = smul.addr %s323, 16
          %s325 = scalar_lea.vmem [#allocation3], %s324
          %s326 = smul.u32 2, %s38
          %s328 = ssub.s32 256, 256
          %329 = vsyncadd %s322, %s328
          %s330 = smul.addr %s326, 128
          %s331 = scalar_lea.hbm %s0, %s330
          %s332 = sshll.u32 %s325, 4
          %s333 = int_to_ptr.vmem [resolvable:$true] %s332
          %338 = dma.hbm_to_vmem [thread:$0]  %s331, 256, %s333, %s322, 128, 128, 8
        $region28: #{tpu_custom_call.1} parent=23 // pred_fallthru
          _
        // Predicated region
        $region29: #{tpu_custom_call.1} parent=23 // pred_check
          %p339 = pneg %p89
        $region30: #{tpu_custom_call.1} parent=23 // pred_check_branch
          %341 = sbr.rel (%p339) target = $region32
        $region31: #{tpu_custom_call.1} parent=23 // pred_region
          %s342 = sand.u32 %s31, 1
          %s343 = scalar_lea.sflag [#allocation7], %s342
          %s344 = sand.u32 %s79, 1
          %s345 = smul.addr %s344, 32
          %s346 = scalar_lea.vmem [#allocation6], %s345
          %s347 = smul.u32 2, %s38
          %s349 = ssub.s32 512, 512
          %350 = vsyncadd %s343, %s349
          %s351 = smul.addr %s347, 2
          %s352 = smul.addr %s351, 128
          %s353 = scalar_lea.hbm %s1, %s352
          %s354 = sshll.u32 %s346, 4
          %s355 = int_to_ptr.vmem [resolvable:$true] %s354
          %360 = dma.hbm_to_vmem [thread:$0]  %s353, 512, %s355, %s343, 256, 256, 16
        $region32: #{tpu_custom_call.1} parent=23 // pred_fallthru
          _
        // Predicated region
        $region33: #{tpu_custom_call.1} parent=23 // pred_check
          %p361 = pneg %p117
        $region34: #{tpu_custom_call.1} parent=23 // pred_check_branch
          %363 = sbr.rel (%p361) target = $region36
        $region35: #{tpu_custom_call.1} parent=23 // pred_region
          %s364 = sand.u32 %s31, 1
          %s365 = scalar_lea.sflag [#allocation7], %s364
          %s366 = sand.u32 %s107, 1
          %s367 = smul.addr %s366, 16
          %s368 = scalar_lea.vmem [#allocation8], %s367
          %s369 = smul.u32 2, %s38
          %s371 = ssub.s32 256, 256
          %372 = vsyncadd %s365, %s371
          %s373 = smul.addr %s369, 2
          %s374 = sadd.s32 %s39, %s373
          %s375 = smul.addr %s374, 128
          %s376 = scalar_lea.hbm %s2, %s375
          %s377 = sshll.u32 %s368, 4
          %s378 = int_to_ptr.vmem [resolvable:$true] %s377
          %383 = dma.hbm_to_vmem [thread:$0]  %s376, 256, %s378, %s365, 256, 128, 8
        $region36: #{tpu_custom_call.1} parent=23 // pred_fallthru
          _
        // Predicated region
        $region37: #{tpu_custom_call.1} parent=23 // pred_check
          %p384 = pneg %p185
        $region38: #{tpu_custom_call.1} parent=23 // pred_check_branch
          %386 = sbr.rel (%p384) target = $region40
        $region39: #{tpu_custom_call.1} parent=23 // pred_region
          %s387 = sand.u32 %s31, 1
          %s388 = scalar_lea.sflag [#allocation13], %s387
          %s389 = sand.u32 %s175, 1
          %s390 = smul.addr %s389, 512
          %s391 = scalar_lea.vmem [#allocation12], %s390
          %s392 = smul.u32 4, %s39
          %s394 = ssub.s32 8192, 8192
          %395 = vsyncadd %s388, %s394
          %s396 = smul.addr %s392, 128
          %s397 = scalar_lea.hbm %s5, %s396
          %s398 = sshll.u32 %s391, 4
          %s399 = int_to_ptr.vmem [resolvable:$true] %s398
          %404 = dma.hbm_to_vmem [thread:$0]  %s397, 8192, %s399, %s388, 1024, 512, 32
        $region40: #{tpu_custom_call.1} parent=23 // pred_fallthru
          _
        // Predicated region
        $region41: #{tpu_custom_call.1} parent=23 // pred_check
          %p405 = pneg %p211
        $region42: #{tpu_custom_call.1} parent=23 // pred_check_branch
          %407 = sbr.rel (%p405) target = $region44
        $region43: #{tpu_custom_call.1} parent=23 // pred_region
          %s408 = sand.u32 %s31, 1
          %s409 = scalar_lea.sflag [#allocation13], %s408
          %s410 = sand.u32 %s201, 1
          %s411 = smul.addr %s410, 1024
          %s412 = scalar_lea.vmem [#allocation14], %s411
          %s413 = smul.u32 4, %s39
          %s415 = ssub.s32 16384, 16384
          %416 = vsyncadd %s409, %s415
          %s417 = smul.addr %s413, 128
          %s418 = scalar_lea.hbm %s6, %s417
          %s419 = sshll.u32 %s412, 4
          %s420 = int_to_ptr.vmem [resolvable:$true] %s419
          %425 = dma.hbm_to_vmem [thread:$0]  %s418, 16384, %s420, %s409, 1024, 512, 32
        $region44: #{tpu_custom_call.1} parent=23 // pred_fallthru
          _
      $region24: #{tpu_custom_call.1} parent=5 // pred_fallthru
        _
      %p426 = scmp.le.s32.totalorder 1, %s31
      %p427 = scmp.lt.s32.totalorder %s31, 5
      %p428 = pnand %p426, %p427
      %p429 = pneg %p428
      // Predicated region
      $region45: #{tpu_custom_call.1} parent=5 // pred_check
        _
      $region46: #{tpu_custom_call.1} parent=5 // pred_check_branch
        %431 = sbr.rel (%p428) target = $region48
      $region47: #{tpu_custom_call.1} parent=5 // pred_region
        %s432 = ssub.s32 %s31, 1
        %s433 = sand.u32 %s56, 1
        %s434 = scalar_lea.sflag [#allocation4], %s433
        %s435 = sand.u32 %s56, 1
        %s436 = smul.addr %s435, 16
        %s437 = scalar_lea.vmem [#allocation3], %s436
        // Predicated region
        $region49: #{tpu_custom_call.1} parent=47 // pred_check
          %p438 = pneg %p69
        $region50: #{tpu_custom_call.1} parent=47 // pred_check_branch
          %440 = sbr.rel (%p438) target = $region52
        $region51: #{tpu_custom_call.1} parent=47 // pred_region
          %441 = dma.done %s434, 256
        $region52: #{tpu_custom_call.1} parent=47 // pred_fallthru
          _
        %s442 = sand.u32 %s36, 1
        %s443 = scalar_lea.sflag [#allocation7], %s442
        %s444 = sand.u32 %s82, 1
        %s445 = smul.addr %s444, 32
        %s446 = scalar_lea.vmem [#allocation6], %s445
        // Predicated region
        $region53: #{tpu_custom_call.1} parent=47 // pred_check
          %p447 = pneg %p95
        $region54: #{tpu_custom_call.1} parent=47 // pred_check_branch
          %449 = sbr.rel (%p447) target = $region56
        $region55: #{tpu_custom_call.1} parent=47 // pred_region
          %450 = dma.done %s443, 512
        $region56: #{tpu_custom_call.1} parent=47 // pred_fallthru
          _
        %s451 = sand.u32 %s36, 1
        %s452 = scalar_lea.sflag [#allocation7], %s451
        %s453 = sand.u32 %s110, 1
        %s454 = smul.addr %s453, 16
        %s455 = scalar_lea.vmem [#allocation8], %s454
        // Predicated region
        $region57: #{tpu_custom_call.1} parent=47 // pred_check
          %p456 = pneg %p123
        $region58: #{tpu_custom_call.1} parent=47 // pred_check_branch
          %458 = sbr.rel (%p456) target = $region60
        $region59: #{tpu_custom_call.1} parent=47 // pred_region
          %459 = dma.done %s452, 256
        $region60: #{tpu_custom_call.1} parent=47 // pred_fallthru
          _
        // Predicated region
        $region61: #{tpu_custom_call.1} parent=47 // pred_check
          %p460 = pneg %p144
        $region62: #{tpu_custom_call.1} parent=47 // pred_check_branch
          %462 = sbr.rel (%p460) target = $region64
        $region63: #{tpu_custom_call.1} parent=47 // pred_region
          %463 = dma.done [#allocation10], 4096
        $region64: #{tpu_custom_call.1} parent=47 // pred_fallthru
          _
        // Predicated region
        $region65: #{tpu_custom_call.1} parent=47 // pred_check
          %p464 = pneg %p165
        $region66: #{tpu_custom_call.1} parent=47 // pred_check_branch
          %466 = sbr.rel (%p464) target = $region68
        $region67: #{tpu_custom_call.1} parent=47 // pred_region
          %467 = dma.done [#allocation10], 8192
        $region68: #{tpu_custom_call.1} parent=47 // pred_fallthru
          _
        %s468 = sand.u32 %s36, 1
        %s469 = scalar_lea.sflag [#allocation13], %s468
        %s470 = sand.u32 %s178, 1
        %s471 = smul.addr %s470, 512
        %s472 = scalar_lea.vmem [#allocation12], %s471
        // Predicated region
        $region69: #{tpu_custom_call.1} parent=47 // pred_check
          %p473 = pneg %p191
        $region70: #{tpu_custom_call.1} parent=47 // pred_check_branch
          %475 = sbr.rel (%p473) target = $region72
        $region71: #{tpu_custom_call.1} parent=47 // pred_region
          %476 = dma.done %s469, 8192
        $region72: #{tpu_custom_call.1} parent=47 // pred_fallthru
          _
        %s477 = sand.u32 %s36, 1
        %s478 = scalar_lea.sflag [#allocation13], %s477
        %s479 = sand.u32 %s204, 1
        %s480 = smul.addr %s479, 1024
        %s481 = scalar_lea.vmem [#allocation14], %s480
        // Predicated region
        $region73: #{tpu_custom_call.1} parent=47 // pred_check
          %p482 = pneg %p217
        $region74: #{tpu_custom_call.1} parent=47 // pred_check_branch
          %484 = sbr.rel (%p482) target = $region76
        $region75: #{tpu_custom_call.1} parent=47 // pred_region
          %485 = dma.done %s478, 16384
        $region76: #{tpu_custom_call.1} parent=47 // pred_fallthru
          _
        %s486 = sand.u32 %s56, 1
        %s487 = scalar_lea.sflag [#allocation4], %s486
        %s488 = sand.u32 %s56, 1
        %s489 = smul.addr %s488, 16
        %s490 = scalar_lea.vmem [#allocation3], %s489
        %p491 = pneg %p69
        %p492 = pneg %p66
        %s493 = sand.u32 %s36, 1
        %s494 = scalar_lea.sflag [#allocation7], %s493
        %s495 = sand.u32 %s82, 1
        %s496 = smul.addr %s495, 32
        %s497 = scalar_lea.vmem [#allocation6], %s496
        %p498 = pneg %p95
        %p499 = pneg %p92
        %s500 = sand.u32 %s36, 1
        %s501 = scalar_lea.sflag [#allocation7], %s500
        %s502 = sand.u32 %s110, 1
        %s503 = smul.addr %s502, 16
        %s504 = scalar_lea.vmem [#allocation8], %s503
        %p505 = pneg %p123
        %p506 = pneg %p120
        %p507 = pneg %p144
        %p508 = pneg %p141
        %p509 = pneg %p165
        %p510 = pneg %p162
        %s511 = sand.u32 %s36, 1
        %s512 = scalar_lea.sflag [#allocation13], %s511
        %s513 = sand.u32 %s178, 1
        %s514 = smul.addr %s513, 512
        %s515 = scalar_lea.vmem [#allocation12], %s514
        %p516 = pneg %p191
        %p517 = pneg %p188
        %s518 = sand.u32 %s36, 1
        %s519 = scalar_lea.sflag [#allocation13], %s518
        %s520 = sand.u32 %s204, 1
        %s521 = smul.addr %s520, 1024
        %s522 = scalar_lea.vmem [#allocation14], %s521
        %p523 = pneg %p217
        %p524 = pneg %p214
        %p525 = pneg %p245
        %p526 = pneg %p242
        %s527 = sand.u32 %s232, 1
        %s528 = scalar_lea.sflag [#allocation5], %s527
        %s529 = sand.u32 %s232, 1
        %s530 = smul.addr %s529, 16
        %s531 = scalar_lea.vmem [#allocation15], %s530
        %p532 = pneg %p273
        %p533 = pneg %p270
        %s534 = sand.u32 %s260, 1
        %s535 = scalar_lea.sflag [#allocation17], %s534
        %s536 = sand.u32 %s260, 1
        %s537 = smul.addr %s536, 16
        %s538 = scalar_lea.vmem [#allocation16], %s537
        %s539 = smul.u32 2, %s40
        %s540 = smul.u32 2, %s40
        %s541 = smul.u32 2, %s40
        %s542 = smul.u32 4, %s41
        %s543 = smul.u32 4, %s41
        %s544 = smul.u32 2, %s40
        %s545 = smul.u32 2, %s40
        %v546 = vld [vmem:[%s437] sm:$0xff]
        %v547 = vld [vmem:[%s437 + $0x8] sm:$0xff]
        %v548 = vld [vmem:[%s446] sm:$0xff]
        %v549 = vld [vmem:[%s446 + $0x8] sm:$0xff]
        %v550 = vld [vmem:[%s446 + $0x10] sm:$0xff]
        %v551 = vld [vmem:[%s446 + $0x18] sm:$0xff]
        %p552 = scmp.eq.s32.totalorder %s41, 0
        // Predicated region
        $region77: #{tpu_custom_call.1} parent=47 // pred_check
          %p553 = pneg %p552
        $region78: #{tpu_custom_call.1} parent=47 // pred_check_branch
          %555 = sbr.rel (%p553) target = $region80
        $region79: #{tpu_custom_call.1} parent=47 // pred_region
          %v556 = vld [vmem:[#allocation9] sm:$0xff]
          %v557 = vld [vmem:[#allocation9 + $0x8] sm:$0xff]
          %v558 = vld [vmem:[#allocation9 + $0x10] sm:$0xff]
          %v559 = vld [vmem:[#allocation9 + $0x18] sm:$0xff]
          %v560 = vld [vmem:[#allocation9 + $0x20] sm:$0xff]
          %v561 = vld [vmem:[#allocation9 + $0x28] sm:$0xff]
          %v562 = vld [vmem:[#allocation9 + $0x30] sm:$0xff]
          %v563 = vld [vmem:[#allocation9 + $0x38] sm:$0xff]
          %v564 = vld [vmem:[#allocation9 + $0x40] sm:$0xff]
          %v565 = vld [vmem:[#allocation9 + $0x48] sm:$0xff]
          %v566 = vld [vmem:[#allocation9 + $0x50] sm:$0xff]
          %v567 = vld [vmem:[#allocation9 + $0x58] sm:$0xff]
          %v568 = vld [vmem:[#allocation9 + $0x60] sm:$0xff]
          %v569 = vld [vmem:[#allocation9 + $0x68] sm:$0xff]
          %v570 = vld [vmem:[#allocation9 + $0x70] sm:$0xff]
          %v571 = vld [vmem:[#allocation9 + $0x78] sm:$0xff]
          %v572 = vld [vmem:[#allocation9 + $0x80] sm:$0xff]
          %v573 = vld [vmem:[#allocation9 + $0x88] sm:$0xff]
          %v574 = vld [vmem:[#allocation9 + $0x90] sm:$0xff]
          %v575 = vld [vmem:[#allocation9 + $0x98] sm:$0xff]
          %v576 = vld [vmem:[#allocation9 + $0xa0] sm:$0xff]
          %v577 = vld [vmem:[#allocation9 + $0xa8] sm:$0xff]
          %v578 = vld [vmem:[#allocation9 + $0xb0] sm:$0xff]
          %v579 = vld [vmem:[#allocation9 + $0xb8] sm:$0xff]
          %v580 = vld [vmem:[#allocation9 + $0xc0] sm:$0xff]
          %v581 = vld [vmem:[#allocation9 + $0xc8] sm:$0xff]
          %v582 = vld [vmem:[#allocation9 + $0xd0] sm:$0xff]
          %v583 = vld [vmem:[#allocation9 + $0xd8] sm:$0xff]
          %v584 = vld [vmem:[#allocation9 + $0xe0] sm:$0xff]
          %v585 = vld [vmem:[#allocation9 + $0xe8] sm:$0xff]
          %v586 = vld [vmem:[#allocation9 + $0xf0] sm:$0xff]
          %v587 = vld [vmem:[#allocation9 + $0xf8] sm:$0xff]
          %588 = vmatprep.subr.mxu0 %v557
          %589 = vmatpush1.msra.mxu0 %v556
          %590 = vmatprep.subr.mxu0 %v559
          %591 = vmatpush1.msra.mxu0 %v558
          %592 = vmatprep.subr.mxu0 %v561
          %593 = vmatpush1.msra.mxu0 %v560
          %594 = vmatprep.subr.mxu0 %v563
          %595 = vmatpush1.msra.mxu0 %v562
          %596 = vmatprep.subr.mxu0 %v565
          %597 = vmatpush1.msra.mxu0 %v564
          %598 = vmatprep.subr.mxu0 %v567
          %599 = vmatpush1.msra.mxu0 %v566
          %600 = vmatprep.subr.mxu0 %v569
          %601 = vmatpush1.msra.mxu0 %v568
          %602 = vmatprep.subr.mxu0 %v571
          %603 = vmatpush1.msra.mxu0 %v570
          %604 = vmatprep.subr.mxu0 %v573
          %605 = vmatpush1.msra.mxu0 %v572
          %606 = vmatprep.subr.mxu0 %v575
          %607 = vmatpush1.msra.mxu0 %v574
          %608 = vmatprep.subr.mxu0 %v577
          %609 = vmatpush1.msra.mxu0 %v576
          %610 = vmatprep.subr.mxu0 %v579
          %611 = vmatpush1.msra.mxu0 %v578
          %612 = vmatprep.subr.mxu0 %v581
          %613 = vmatpush1.msra.mxu0 %v580
          %614 = vmatprep.subr.mxu0 %v583
          %615 = vmatpush1.msra.mxu0 %v582
          %616 = vmatprep.subr.mxu0 %v585
          %617 = vmatpush1.msra.mxu0 %v584
          %618 = vmatprep.subr.mxu0 %v587
          %619 = vmatpush1.msra.mxu0 %v586
          %620 = vmatprep.subr.mxu0 0.0
          %621 = vmatpush1.msra.mxu0 0.0
          %622 = vmatprep.subr.mxu0 0.0
          %623 = vmatpush1.msra.mxu0 0.0
          %624 = vmatprep.subr.mxu0 0.0
          %625 = vmatpush1.msra.mxu0 0.0
          %626 = vmatprep.subr.mxu0 0.0
          %627 = vmatpush1.msra.mxu0 0.0
          %628 = vmatprep.subr.mxu0 0.0
          %629 = vmatpush1.msra.mxu0 0.0
          %630 = vmatprep.subr.mxu0 0.0
          %631 = vmatpush1.msra.mxu0 0.0
          %632 = vmatprep.subr.mxu0 0.0
          %633 = vmatpush1.msra.mxu0 0.0
          %634 = vmatprep.subr.mxu0 0.0
          %635 = vmatpush1.msra.mxu0 0.0
          %636 = vmatprep.subr.mxu0 0.0
          %637 = vmatpush1.msra.mxu0 0.0
          %638 = vmatprep.subr.mxu0 0.0
          %639 = vmatpush1.msra.mxu0 0.0
          %640 = vmatprep.subr.mxu0 0.0
          %641 = vmatpush1.msra.mxu0 0.0
          %642 = vmatprep.subr.mxu0 0.0
          %643 = vmatpush1.msra.mxu0 0.0
          %644 = vmatprep.subr.mxu0 0.0
          %645 = vmatpush1.msra.mxu0 0.0
          %646 = vmatprep.subr.mxu0 0.0
          %647 = vmatpush1.msra.mxu0 0.0
          %648 = vmatprep.subr.mxu0 0.0
          %649 = vmatpush1.msra.mxu0 0.0
          %650 = vmatprep.subr.mxu0 0.0
          %651 = vmatpush1.msra.mxu0 0.0
          %652 = vmatprep.mubr.f32.mxu0 0.0
          %653 = vmatmul.mubr.f32.gmra.mrb[0].mxu0 %v546
          %v654 = vpop.f32.mrb[0].mxu0
          %v655 = vadd.f32 0.0, %v654
          %v656 = vpop.f32.mrb[0].mxu0
          %v657 = vadd.f32 0.0, %v656
          %658 = vmatprep.mubr.f32.mxu0 0.0
          %659 = vmatmul.mubr.f32.gmra.mrb[0].mxu0 %v547
          %v660 = vpop.f32.mrb[0].mxu0
          %v661 = vadd.f32 0.0, %v660
          %v662 = vpop.f32.mrb[0].mxu0
          %v663 = vadd.f32 0.0, %v662
          %664 = vdwg.mxu0
          %v665 = vld [vmem:[#allocation11] sm:$0xff]
          %v666 = vld [vmem:[#allocation11 + $0x8] sm:$0xff]
          %v667 = vld [vmem:[#allocation11 + $0x10] sm:$0xff]
          %v668 = vld [vmem:[#allocation11 + $0x18] sm:$0xff]
          %v669 = vld [vmem:[#allocation11 + $0x20] sm:$0xff]
          %v670 = vld [vmem:[#allocation11 + $0x28] sm:$0xff]
          %v671 = vld [vmem:[#allocation11 + $0x30] sm:$0xff]
          %v672 = vld [vmem:[#allocation11 + $0x38] sm:$0xff]
          %v673 = vld [vmem:[#allocation11 + $0x40] sm:$0xff]
          %v674 = vld [vmem:[#allocation11 + $0x48] sm:$0xff]
          %v675 = vld [vmem:[#allocation11 + $0x50] sm:$0xff]
          %v676 = vld [vmem:[#allocation11 + $0x58] sm:$0xff]
          %v677 = vld [vmem:[#allocation11 + $0x60] sm:$0xff]
          %v678 = vld [vmem:[#allocation11 + $0x68] sm:$0xff]
          %v679 = vld [vmem:[#allocation11 + $0x70] sm:$0xff]
          %v680 = vld [vmem:[#allocation11 + $0x78] sm:$0xff]
          %v681 = vld [vmem:[#allocation11 + $0x80] sm:$0xff]
          %v682 = vld [vmem:[#allocation11 + $0x88] sm:$0xff]
          %v683 = vld [vmem:[#allocation11 + $0x90] sm:$0xff]
          %v684 = vld [vmem:[#allocation11 + $0x98] sm:$0xff]
          %v685 = vld [vmem:[#allocation11 + $0xa0] sm:$0xff]
          %v686 = vld [vmem:[#allocation11 + $0xa8] sm:$0xff]
          %v687 = vld [vmem:[#allocation11 + $0xb0] sm:$0xff]
          %v688 = vld [vmem:[#allocation11 + $0xb8] sm:$0xff]
          %v689 = vld [vmem:[#allocation11 + $0xc0] sm:$0xff]
          %v690 = vld [vmem:[#allocation11 + $0xc8] sm:$0xff]
          %v691 = vld [vmem:[#allocation11 + $0xd0] sm:$0xff]
          %v692 = vld [vmem:[#allocation11 + $0xd8] sm:$0xff]
          %v693 = vld [vmem:[#allocation11 + $0xe0] sm:$0xff]
          %v694 = vld [vmem:[#allocation11 + $0xe8] sm:$0xff]
          %v695 = vld [vmem:[#allocation11 + $0xf0] sm:$0xff]
          %v696 = vld [vmem:[#allocation11 + $0xf8] sm:$0xff]
          %v697 = vld [vmem:[#allocation11 + $0x100] sm:$0xff]
          %v698 = vld [vmem:[#allocation11 + $0x108] sm:$0xff]
          %v699 = vld [vmem:[#allocation11 + $0x110] sm:$0xff]
          %v700 = vld [vmem:[#allocation11 + $0x118] sm:$0xff]
          %v701 = vld [vmem:[#allocation11 + $0x120] sm:$0xff]
          %v702 = vld [vmem:[#allocation11 + $0x128] sm:$0xff]
          %v703 = vld [vmem:[#allocation11 + $0x130] sm:$0xff]
          %v704 = vld [vmem:[#allocation11 + $0x138] sm:$0xff]
          %v705 = vld [vmem:[#allocation11 + $0x140] sm:$0xff]
          %v706 = vld [vmem:[#allocation11 + $0x148] sm:$0xff]
          %v707 = vld [vmem:[#allocation11 + $0x150] sm:$0xff]
          %v708 = vld [vmem:[#allocation11 + $0x158] sm:$0xff]
          %v709 = vld [vmem:[#allocation11 + $0x160] sm:$0xff]
          %v710 = vld [vmem:[#allocation11 + $0x168] sm:$0xff]
          %v711 = vld [vmem:[#allocation11 + $0x170] sm:$0xff]
          %v712 = vld [vmem:[#allocation11 + $0x178] sm:$0xff]
          %v713 = vld [vmem:[#allocation11 + $0x180] sm:$0xff]
          %v714 = vld [vmem:[#allocation11 + $0x188] sm:$0xff]
          %v715 = vld [vmem:[#allocation11 + $0x190] sm:$0xff]
          %v716 = vld [vmem:[#allocation11 + $0x198] sm:$0xff]
          %v717 = vld [vmem:[#allocation11 + $0x1a0] sm:$0xff]
          %v718 = vld [vmem:[#allocation11 + $0x1a8] sm:$0xff]
          %v719 = vld [vmem:[#allocation11 + $0x1b0] sm:$0xff]
          %v720 = vld [vmem:[#allocation11 + $0x1b8] sm:$0xff]
          %v721 = vld [vmem:[#allocation11 + $0x1c0] sm:$0xff]
          %v722 = vld [vmem:[#allocation11 + $0x1c8] sm:$0xff]
          %v723 = vld [vmem:[#allocation11 + $0x1d0] sm:$0xff]
          %v724 = vld [vmem:[#allocation11 + $0x1d8] sm:$0xff]
          %v725 = vld [vmem:[#allocation11 + $0x1e0] sm:$0xff]
          %v726 = vld [vmem:[#allocation11 + $0x1e8] sm:$0xff]
          %v727 = vld [vmem:[#allocation11 + $0x1f0] sm:$0xff]
          %v728 = vld [vmem:[#allocation11 + $0x1f8] sm:$0xff]
          %729 = vmatprep.subr.mxu0 %v666
          %730 = vmatpush1.msra.mxu0 %v665
          %731 = vmatprep.subr.mxu0 %v668
          %732 = vmatpush1.msra.mxu0 %v667
          %733 = vmatprep.subr.mxu0 %v670
          %734 = vmatpush1.msra.mxu0 %v669
          %735 = vmatprep.subr.mxu0 %v672
          %736 = vmatpush1.msra.mxu0 %v671
          %737 = vmatprep.subr.mxu0 %v674
          %738 = vmatpush1.msra.mxu0 %v673
          %739 = vmatprep.subr.mxu0 %v676
          %740 = vmatpush1.msra.mxu0 %v675
          %741 = vmatprep.subr.mxu0 %v678
          %742 = vmatpush1.msra.mxu0 %v677
          %743 = vmatprep.subr.mxu0 %v680
          %744 = vmatpush1.msra.mxu0 %v679
          %745 = vmatprep.subr.mxu0 %v682
          %746 = vmatpush1.msra.mxu0 %v681
          %747 = vmatprep.subr.mxu0 %v684
          %748 = vmatpush1.msra.mxu0 %v683
          %749 = vmatprep.subr.mxu0 %v686
          %750 = vmatpush1.msra.mxu0 %v685
          %751 = vmatprep.subr.mxu0 %v688
          %752 = vmatpush1.msra.mxu0 %v687
          %753 = vmatprep.subr.mxu0 %v690
          %754 = vmatpush1.msra.mxu0 %v689
          %755 = vmatprep.subr.mxu0 %v692
          %756 = vmatpush1.msra.mxu0 %v691
          %757 = vmatprep.subr.mxu0 %v694
          %758 = vmatpush1.msra.mxu0 %v693
          %759 = vmatprep.subr.mxu0 %v696
          %760 = vmatpush1.msra.mxu0 %v695
          %761 = vmatprep.subr.mxu0 %v698
          %762 = vmatpush1.msra.mxu0 %v697
          %763 = vmatprep.subr.mxu0 %v700
          %764 = vmatpush1.msra.mxu0 %v699
          %765 = vmatprep.subr.mxu0 %v702
          %766 = vmatpush1.msra.mxu0 %v701
          %767 = vmatprep.subr.mxu0 %v704
          %768 = vmatpush1.msra.mxu0 %v703
          %769 = vmatprep.subr.mxu0 %v706
          %770 = vmatpush1.msra.mxu0 %v705
          %771 = vmatprep.subr.mxu0 %v708
          %772 = vmatpush1.msra.mxu0 %v707
          %773 = vmatprep.subr.mxu0 %v710
          %774 = vmatpush1.msra.mxu0 %v709
          %775 = vmatprep.subr.mxu0 %v712
          %776 = vmatpush1.msra.mxu0 %v711
          %777 = vmatprep.subr.mxu0 %v714
          %778 = vmatpush1.msra.mxu0 %v713
          %779 = vmatprep.subr.mxu0 %v716
          %780 = vmatpush1.msra.mxu0 %v715
          %781 = vmatprep.subr.mxu0 %v718
          %782 = vmatpush1.msra.mxu0 %v717
          %783 = vmatprep.subr.mxu0 %v720
          %784 = vmatpush1.msra.mxu0 %v719
          %785 = vmatprep.subr.mxu0 %v722
          %786 = vmatpush1.msra.mxu0 %v721
          %787 = vmatprep.subr.mxu0 %v724
          %788 = vmatpush1.msra.mxu0 %v723
          %789 = vmatprep.subr.mxu0 %v726
          %790 = vmatpush1.msra.mxu0 %v725
          %791 = vmatprep.subr.mxu0 %v728
          %792 = vmatpush1.msra.mxu0 %v727
          %793 = vmatprep.mubr.f32.mxu0 %v549
          %794 = vmatmul.mubr.f32.gmra.mrb[0].mxu0 %v548
          %v795 = vpop.f32.mrb[0].mxu0
          %v796 = vadd.f32 0.0, %v795
          %v797 = vpop.f32.mrb[0].mxu0
          %v798 = vadd.f32 0.0, %v797
          %799 = vmatprep.mubr.f32.mxu0 %v551
          %800 = vmatmul.mubr.f32.gmra.mrb[0].mxu0 %v550
          %v801 = vpop.f32.mrb[0].mxu0
          %v802 = vadd.f32 0.0, %v801
          %v803 = vpop.f32.mrb[0].mxu0
          %v804 = vadd.f32 0.0, %v803
          %805 = vdwg.mxu0
          %v806 = vmul.f32 %v655, %v796
          %v807 = vmul.f32 %v657, %v798
          %v808 = vmul.f32 %v661, %v802
          %v809 = vmul.f32 %v663, %v804
          %810 = vst [vmem:[#allocation2] sm:$0xff] %v806
          %811 = vst [vmem:[#allocation2 + $0x8] sm:$0xff] %v807
          %812 = vst [vmem:[#allocation2 + $0x10] sm:$0xff] %v808
          %813 = vst [vmem:[#allocation2 + $0x18] sm:$0xff] %v809
        $region80: #{tpu_custom_call.1} parent=47 // pred_fallthru
          _
        %v814 = vld [vmem:[#allocation2] sm:$0xff]
        %v815 = vld [vmem:[#allocation2 + $0x8] sm:$0xff]
        %v816 = vld [vmem:[#allocation2 + $0x10] sm:$0xff]
        %v817 = vld [vmem:[#allocation2 + $0x18] sm:$0xff]
        %v818 = vld [vmem:[%s472] sm:$0xff]
        %v819 = vld [vmem:[%s472 + $0x8] sm:$0xff]
        %v820 = vld [vmem:[%s472 + $0x10] sm:$0xff]
        %v821 = vld [vmem:[%s472 + $0x18] sm:$0xff]
        %v822 = vld [vmem:[%s472 + $0x20] sm:$0xff]
        %v823 = vld [vmem:[%s472 + $0x28] sm:$0xff]
        %v824 = vld [vmem:[%s472 + $0x30] sm:$0xff]
        %v825 = vld [vmem:[%s472 + $0x38] sm:$0xff]
        %v826 = vld [vmem:[%s472 + $0x40] sm:$0xff]
        %v827 = vld [vmem:[%s472 + $0x48] sm:$0xff]
        %v828 = vld [vmem:[%s472 + $0x50] sm:$0xff]
        %v829 = vld [vmem:[%s472 + $0x58] sm:$0xff]
        %v830 = vld [vmem:[%s472 + $0x60] sm:$0xff]
        %v831 = vld [vmem:[%s472 + $0x68] sm:$0xff]
        %v832 = vld [vmem:[%s472 + $0x70] sm:$0xff]
        %v833 = vld [vmem:[%s472 + $0x78] sm:$0xff]
        %v834 = vld [vmem:[%s472 + $0x80] sm:$0xff]
        %v835 = vld [vmem:[%s472 + $0x88] sm:$0xff]
        %v836 = vld [vmem:[%s472 + $0x90] sm:$0xff]
        %v837 = vld [vmem:[%s472 + $0x98] sm:$0xff]
        %v838 = vld [vmem:[%s472 + $0xa0] sm:$0xff]
        %v839 = vld [vmem:[%s472 + $0xa8] sm:$0xff]
        %v840 = vld [vmem:[%s472 + $0xb0] sm:$0xff]
        %v841 = vld [vmem:[%s472 + $0xb8] sm:$0xff]
        %v842 = vld [vmem:[%s472 + $0xc0] sm:$0xff]
        %v843 = vld [vmem:[%s472 + $0xc8] sm:$0xff]
        %v844 = vld [vmem:[%s472 + $0xd0] sm:$0xff]
        %v845 = vld [vmem:[%s472 + $0xd8] sm:$0xff]
        %v846 = vld [vmem:[%s472 + $0xe0] sm:$0xff]
        %v847 = vld [vmem:[%s472 + $0xe8] sm:$0xff]
        %v848 = vld [vmem:[%s472 + $0xf0] sm:$0xff]
        %v849 = vld [vmem:[%s472 + $0xf8] sm:$0xff]
        %v850 = vld [vmem:[%s472 + $0x100] sm:$0xff]
        %v851 = vld [vmem:[%s472 + $0x108] sm:$0xff]
        %v852 = vld [vmem:[%s472 + $0x110] sm:$0xff]
        %v853 = vld [vmem:[%s472 + $0x118] sm:$0xff]
        %v854 = vld [vmem:[%s472 + $0x120] sm:$0xff]
        %v855 = vld [vmem:[%s472 + $0x128] sm:$0xff]
        %v856 = vld [vmem:[%s472 + $0x130] sm:$0xff]
        %v857 = vld [vmem:[%s472 + $0x138] sm:$0xff]
        %v858 = vld [vmem:[%s472 + $0x140] sm:$0xff]
        %v859 = vld [vmem:[%s472 + $0x148] sm:$0xff]
        %v860 = vld [vmem:[%s472 + $0x150] sm:$0xff]
        %v861 = vld [vmem:[%s472 + $0x158] sm:$0xff]
        %v862 = vld [vmem:[%s472 + $0x160] sm:$0xff]
        %v863 = vld [vmem:[%s472 + $0x168] sm:$0xff]
        %v864 = vld [vmem:[%s472 + $0x170] sm:$0xff]
        %v865 = vld [vmem:[%s472 + $0x178] sm:$0xff]
        %v866 = vld [vmem:[%s472 + $0x180] sm:$0xff]
        %v867 = vld [vmem:[%s472 + $0x188] sm:$0xff]
        %v868 = vld [vmem:[%s472 + $0x190] sm:$0xff]
        %v869 = vld [vmem:[%s472 + $0x198] sm:$0xff]
        %v870 = vld [vmem:[%s472 + $0x1a0] sm:$0xff]
        %v871 = vld [vmem:[%s472 + $0x1a8] sm:$0xff]
        %v872 = vld [vmem:[%s472 + $0x1b0] sm:$0xff]
        %v873 = vld [vmem:[%s472 + $0x1b8] sm:$0xff]
        %v874 = vld [vmem:[%s472 + $0x1c0] sm:$0xff]
        %v875 = vld [vmem:[%s472 + $0x1c8] sm:$0xff]
        %v876 = vld [vmem:[%s472 + $0x1d0] sm:$0xff]
        %v877 = vld [vmem:[%s472 + $0x1d8] sm:$0xff]
        %v878 = vld [vmem:[%s472 + $0x1e0] sm:$0xff]
        %v879 = vld [vmem:[%s472 + $0x1e8] sm:$0xff]
        %v880 = vld [vmem:[%s472 + $0x1f0] sm:$0xff]
        %v881 = vld [vmem:[%s472 + $0x1f8] sm:$0xff]
        %v882 = vld [vmem:[%s481] sm:$0xff]
        %v883 = vld [vmem:[%s481 + $0x8] sm:$0xff]
        %v884 = vld [vmem:[%s481 + $0x10] sm:$0xff]
        %v885 = vld [vmem:[%s481 + $0x18] sm:$0xff]
        %v886 = vld [vmem:[%s481 + $0x20] sm:$0xff]
        %v887 = vld [vmem:[%s481 + $0x28] sm:$0xff]
        %v888 = vld [vmem:[%s481 + $0x30] sm:$0xff]
        %v889 = vld [vmem:[%s481 + $0x38] sm:$0xff]
        %v890 = vld [vmem:[%s481 + $0x40] sm:$0xff]
        %v891 = vld [vmem:[%s481 + $0x48] sm:$0xff]
        %v892 = vld [vmem:[%s481 + $0x50] sm:$0xff]
        %v893 = vld [vmem:[%s481 + $0x58] sm:$0xff]
        %v894 = vld [vmem:[%s481 + $0x60] sm:$0xff]
        %v895 = vld [vmem:[%s481 + $0x68] sm:$0xff]
        %v896 = vld [vmem:[%s481 + $0x70] sm:$0xff]
        %v897 = vld [vmem:[%s481 + $0x78] sm:$0xff]
        %v898 = vld [vmem:[%s481 + $0x80] sm:$0xff]
        %v899 = vld [vmem:[%s481 + $0x88] sm:$0xff]
        %v900 = vld [vmem:[%s481 + $0x90] sm:$0xff]
        %v901 = vld [vmem:[%s481 + $0x98] sm:$0xff]
        %v902 = vld [vmem:[%s481 + $0xa0] sm:$0xff]
        %v903 = vld [vmem:[%s481 + $0xa8] sm:$0xff]
        %v904 = vld [vmem:[%s481 + $0xb0] sm:$0xff]
        %v905 = vld [vmem:[%s481 + $0xb8] sm:$0xff]
        %v906 = vld [vmem:[%s481 + $0xc0] sm:$0xff]
        %v907 = vld [vmem:[%s481 + $0xc8] sm:$0xff]
        %v908 = vld [vmem:[%s481 + $0xd0] sm:$0xff]
        %v909 = vld [vmem:[%s481 + $0xd8] sm:$0xff]
        %v910 = vld [vmem:[%s481 + $0xe0] sm:$0xff]
        %v911 = vld [vmem:[%s481 + $0xe8] sm:$0xff]
        %v912 = vld [vmem:[%s481 + $0xf0] sm:$0xff]
        %v913 = vld [vmem:[%s481 + $0xf8] sm:$0xff]
        %v914 = vld [vmem:[%s481 + $0x100] sm:$0xff]
        %v915 = vld [vmem:[%s481 + $0x108] sm:$0xff]
        %v916 = vld [vmem:[%s481 + $0x110] sm:$0xff]
        %v917 = vld [vmem:[%s481 + $0x118] sm:$0xff]
        %v918 = vld [vmem:[%s481 + $0x120] sm:$0xff]
        %v919 = vld [vmem:[%s481 + $0x128] sm:$0xff]
        %v920 = vld [vmem:[%s481 + $0x130] sm:$0xff]
        %v921 = vld [vmem:[%s481 + $0x138] sm:$0xff]
        %v922 = vld [vmem:[%s481 + $0x140] sm:$0xff]
        %v923 = vld [vmem:[%s481 + $0x148] sm:$0xff]
        %v924 = vld [vmem:[%s481 + $0x150] sm:$0xff]
        %v925 = vld [vmem:[%s481 + $0x158] sm:$0xff]
        %v926 = vld [vmem:[%s481 + $0x160] sm:$0xff]
        %v927 = vld [vmem:[%s481 + $0x168] sm:$0xff]
        %v928 = vld [vmem:[%s481 + $0x170] sm:$0xff]
        %v929 = vld [vmem:[%s481 + $0x178] sm:$0xff]
        %v930 = vld [vmem:[%s481 + $0x180] sm:$0xff]
        %v931 = vld [vmem:[%s481 + $0x188] sm:$0xff]
        %v932 = vld [vmem:[%s481 + $0x190] sm:$0xff]
        %v933 = vld [vmem:[%s481 + $0x198] sm:$0xff]
        %v934 = vld [vmem:[%s481 + $0x1a0] sm:$0xff]
        %v935 = vld [vmem:[%s481 + $0x1a8] sm:$0xff]
        %v936 = vld [vmem:[%s481 + $0x1b0] sm:$0xff]
        %v937 = vld [vmem:[%s481 + $0x1b8] sm:$0xff]
        %v938 = vld [vmem:[%s481 + $0x1c0] sm:$0xff]
        %v939 = vld [vmem:[%s481 + $0x1c8] sm:$0xff]
        %v940 = vld [vmem:[%s481 + $0x1d0] sm:$0xff]
        %v941 = vld [vmem:[%s481 + $0x1d8] sm:$0xff]
        %v942 = vld [vmem:[%s481 + $0x1e0] sm:$0xff]
        %v943 = vld [vmem:[%s481 + $0x1e8] sm:$0xff]
        %v944 = vld [vmem:[%s481 + $0x1f0] sm:$0xff]
        %v945 = vld [vmem:[%s481 + $0x1f8] sm:$0xff]
        %v946 = vld [vmem:[%s481 + $0x200] sm:$0xff]
        %v947 = vld [vmem:[%s481 + $0x208] sm:$0xff]
        %v948 = vld [vmem:[%s481 + $0x210] sm:$0xff]
        %v949 = vld [vmem:[%s481 + $0x218] sm:$0xff]
        %v950 = vld [vmem:[%s481 + $0x220] sm:$0xff]
        %v951 = vld [vmem:[%s481 + $0x228] sm:$0xff]
        %v952 = vld [vmem:[%s481 + $0x230] sm:$0xff]
        %v953 = vld [vmem:[%s481 + $0x238] sm:$0xff]
        %v954 = vld [vmem:[%s481 + $0x240] sm:$0xff]
        %v955 = vld [vmem:[%s481 + $0x248] sm:$0xff]
        %v956 = vld [vmem:[%s481 + $0x250] sm:$0xff]
        %v957 = vld [vmem:[%s481 + $0x258] sm:$0xff]
        %v958 = vld [vmem:[%s481 + $0x260] sm:$0xff]
        %v959 = vld [vmem:[%s481 + $0x268] sm:$0xff]
        %v960 = vld [vmem:[%s481 + $0x270] sm:$0xff]
        %v961 = vld [vmem:[%s481 + $0x278] sm:$0xff]
        %v962 = vld [vmem:[%s481 + $0x280] sm:$0xff]
        %v963 = vld [vmem:[%s481 + $0x288] sm:$0xff]
        %v964 = vld [vmem:[%s481 + $0x290] sm:$0xff]
        %v965 = vld [vmem:[%s481 + $0x298] sm:$0xff]
        %v966 = vld [vmem:[%s481 + $0x2a0] sm:$0xff]
        %v967 = vld [vmem:[%s481 + $0x2a8] sm:$0xff]
        %v968 = vld [vmem:[%s481 + $0x2b0] sm:$0xff]
        %v969 = vld [vmem:[%s481 + $0x2b8] sm:$0xff]
        %v970 = vld [vmem:[%s481 + $0x2c0] sm:$0xff]
        %v971 = vld [vmem:[%s481 + $0x2c8] sm:$0xff]
        %v972 = vld [vmem:[%s481 + $0x2d0] sm:$0xff]
        %v973 = vld [vmem:[%s481 + $0x2d8] sm:$0xff]
        %v974 = vld [vmem:[%s481 + $0x2e0] sm:$0xff]
        %v975 = vld [vmem:[%s481 + $0x2e8] sm:$0xff]
        %v976 = vld [vmem:[%s481 + $0x2f0] sm:$0xff]
        %v977 = vld [vmem:[%s481 + $0x2f8] sm:$0xff]
        %v978 = vld [vmem:[%s481 + $0x300] sm:$0xff]
        %v979 = vld [vmem:[%s481 + $0x308] sm:$0xff]
        %v980 = vld [vmem:[%s481 + $0x310] sm:$0xff]
        %v981 = vld [vmem:[%s481 + $0x318] sm:$0xff]
        %v982 = vld [vmem:[%s481 + $0x320] sm:$0xff]
        %v983 = vld [vmem:[%s481 + $0x328] sm:$0xff]
        %v984 = vld [vmem:[%s481 + $0x330] sm:$0xff]
        %v985 = vld [vmem:[%s481 + $0x338] sm:$0xff]
        %v986 = vld [vmem:[%s481 + $0x340] sm:$0xff]
        %v987 = vld [vmem:[%s481 + $0x348] sm:$0xff]
        %v988 = vld [vmem:[%s481 + $0x350] sm:$0xff]
        %v989 = vld [vmem:[%s481 + $0x358] sm:$0xff]
        %v990 = vld [vmem:[%s481 + $0x360] sm:$0xff]
        %v991 = vld [vmem:[%s481 + $0x368] sm:$0xff]
        %v992 = vld [vmem:[%s481 + $0x370] sm:$0xff]
        %v993 = vld [vmem:[%s481 + $0x378] sm:$0xff]
        %v994 = vld [vmem:[%s481 + $0x380] sm:$0xff]
        %v995 = vld [vmem:[%s481 + $0x388] sm:$0xff]
        %v996 = vld [vmem:[%s481 + $0x390] sm:$0xff]
        %v997 = vld [vmem:[%s481 + $0x398] sm:$0xff]
        %v998 = vld [vmem:[%s481 + $0x3a0] sm:$0xff]
        %v999 = vld [vmem:[%s481 + $0x3a8] sm:$0xff]
        %v1000 = vld [vmem:[%s481 + $0x3b0] sm:$0xff]
        %v1001 = vld [vmem:[%s481 + $0x3b8] sm:$0xff]
        %v1002 = vld [vmem:[%s481 + $0x3c0] sm:$0xff]
        %v1003 = vld [vmem:[%s481 + $0x3c8] sm:$0xff]
        %v1004 = vld [vmem:[%s481 + $0x3d0] sm:$0xff]
        %v1005 = vld [vmem:[%s481 + $0x3d8] sm:$0xff]
        %v1006 = vld [vmem:[%s481 + $0x3e0] sm:$0xff]
        %v1007 = vld [vmem:[%s481 + $0x3e8] sm:$0xff]
        %v1008 = vld [vmem:[%s481 + $0x3f0] sm:$0xff]
        %v1009 = vld [vmem:[%s481 + $0x3f8] sm:$0xff]
        %1010 = vmatprep.subr.mxu0 %v883
        %1011 = vmatpush1.msra.mxu0 %v882
        %1012 = vmatprep.subr.mxu0 %v887
        %1013 = vmatpush1.msra.mxu0 %v886
        %1014 = vmatprep.subr.mxu0 %v891
        %1015 = vmatpush1.msra.mxu0 %v890
        %1016 = vmatprep.subr.mxu0 %v895
        %1017 = vmatpush1.msra.mxu0 %v894
        %1018 = vmatprep.subr.mxu0 %v899
        %1019 = vmatpush1.msra.mxu0 %v898
        %1020 = vmatprep.subr.mxu0 %v903
        %1021 = vmatpush1.msra.mxu0 %v902
        %1022 = vmatprep.subr.mxu0 %v907
        %1023 = vmatpush1.msra.mxu0 %v906
        %1024 = vmatprep.subr.mxu0 %v911
        %1025 = vmatpush1.msra.mxu0 %v910
        %1026 = vmatprep.subr.mxu0 %v915
        %1027 = vmatpush1.msra.mxu0 %v914
        %1028 = vmatprep.subr.mxu0 %v919
        %1029 = vmatpush1.msra.mxu0 %v918
        %1030 = vmatprep.subr.mxu0 %v923
        %1031 = vmatpush1.msra.mxu0 %v922
        %1032 = vmatprep.subr.mxu0 %v927
        %1033 = vmatpush1.msra.mxu0 %v926
        %1034 = vmatprep.subr.mxu0 %v931
        %1035 = vmatpush1.msra.mxu0 %v930
        %1036 = vmatprep.subr.mxu0 %v935
        %1037 = vmatpush1.msra.mxu0 %v934
        %1038 = vmatprep.subr.mxu0 %v939
        %1039 = vmatpush1.msra.mxu0 %v938
        %1040 = vmatprep.subr.mxu0 %v943
        %1041 = vmatpush1.msra.mxu0 %v942
        %1042 = vmatprep.subr.mxu0 %v947
        %1043 = vmatpush1.msra.mxu0 %v946
        %1044 = vmatprep.subr.mxu0 %v951
        %1045 = vmatpush1.msra.mxu0 %v950
        %1046 = vmatprep.subr.mxu0 %v955
        %1047 = vmatpush1.msra.mxu0 %v954
        %1048 = vmatprep.subr.mxu0 %v959
        %1049 = vmatpush1.msra.mxu0 %v958
        %1050 = vmatprep.subr.mxu0 %v963
        %1051 = vmatpush1.msra.mxu0 %v962
        %1052 = vmatprep.subr.mxu0 %v967
        %1053 = vmatpush1.msra.mxu0 %v966
        %1054 = vmatprep.subr.mxu0 %v971
        %1055 = vmatpush1.msra.mxu0 %v970
        %1056 = vmatprep.subr.mxu0 %v975
        %1057 = vmatpush1.msra.mxu0 %v974
        %1058 = vmatprep.subr.mxu0 %v979
        %1059 = vmatpush1.msra.mxu0 %v978
        %1060 = vmatprep.subr.mxu0 %v983
        %1061 = vmatpush1.msra.mxu0 %v982
        %1062 = vmatprep.subr.mxu0 %v987
        %1063 = vmatpush1.msra.mxu0 %v986
        %1064 = vmatprep.subr.mxu0 %v991
        %1065 = vmatpush1.msra.mxu0 %v990
        %1066 = vmatprep.subr.mxu0 %v995
        %1067 = vmatpush1.msra.mxu0 %v994
        %1068 = vmatprep.subr.mxu0 %v999
        %1069 = vmatpush1.msra.mxu0 %v998
        %1070 = vmatprep.subr.mxu0 %v1003
        %1071 = vmatpush1.msra.mxu0 %v1002
        %1072 = vmatprep.subr.mxu0 %v1007
        %1073 = vmatpush1.msra.mxu0 %v1006
        %1074 = vmatprep.mubr.f32.mxu0 %v815
        %1075 = vmatmul.mubr.f32.gmra.mrb[0].mxu0 %v814
        %v1076 = vpop.f32.mrb[0].mxu0
        %v1077 = vadd.f32 0.0, %v1076
        %v1078 = vpop.f32.mrb[0].mxu0
        %v1079 = vadd.f32 0.0, %v1078
        %1080 = vmatprep.mubr.f32.mxu0 %v817
        %1081 = vmatmul.mubr.f32.gmra.mrb[0].mxu0 %v816
        %v1082 = vpop.f32.mrb[0].mxu0
        %v1083 = vadd.f32 0.0, %v1082
        %v1084 = vpop.f32.mrb[0].mxu0
        %v1085 = vadd.f32 0.0, %v1084
        %1086 = vdwg.mxu0
        %1087 = vmatprep.subr.mxu0 %v885
        %1088 = vmatpush1.msra.mxu0 %v884
        %1089 = vmatprep.subr.mxu0 %v889
        %1090 = vmatpush1.msra.mxu0 %v888
        %1091 = vmatprep.subr.mxu0 %v893
        %1092 = vmatpush1.msra.mxu0 %v892
        %1093 = vmatprep.subr.mxu0 %v897
        %1094 = vmatpush1.msra.mxu0 %v896
        %1095 = vmatprep.subr.mxu0 %v901
        %1096 = vmatpush1.msra.mxu0 %v900
        %1097 = vmatprep.subr.mxu0 %v905
        %1098 = vmatpush1.msra.mxu0 %v904
        %1099 = vmatprep.subr.mxu0 %v909
        %1100 = vmatpush1.msra.mxu0 %v908
        %1101 = vmatprep.subr.mxu0 %v913
        %1102 = vmatpush1.msra.mxu0 %v912
        %1103 = vmatprep.subr.mxu0 %v917
        %1104 = vmatpush1.msra.mxu0 %v916
        %1105 = vmatprep.subr.mxu0 %v921
        %1106 = vmatpush1.msra.mxu0 %v920
        %1107 = vmatprep.subr.mxu0 %v925
        %1108 = vmatpush1.msra.mxu0 %v924
        %1109 = vmatprep.subr.mxu0 %v929
        %1110 = vmatpush1.msra.mxu0 %v928
        %1111 = vmatprep.subr.mxu0 %v933
        %1112 = vmatpush1.msra.mxu0 %v932
        %1113 = vmatprep.subr.mxu0 %v937
        %1114 = vmatpush1.msra.mxu0 %v936
        %1115 = vmatprep.subr.mxu0 %v941
        %1116 = vmatpush1.msra.mxu0 %v940
        %1117 = vmatprep.subr.mxu0 %v945
        %1118 = vmatpush1.msra.mxu0 %v944
        %1119 = vmatprep.subr.mxu0 %v949
        %1120 = vmatpush1.msra.mxu0 %v948
        %1121 = vmatprep.subr.mxu0 %v953
        %1122 = vmatpush1.msra.mxu0 %v952
        %1123 = vmatprep.subr.mxu0 %v957
        %1124 = vmatpush1.msra.mxu0 %v956
        %1125 = vmatprep.subr.mxu0 %v961
        %1126 = vmatpush1.msra.mxu0 %v960
        %1127 = vmatprep.subr.mxu0 %v965
        %1128 = vmatpush1.msra.mxu0 %v964
        %1129 = vmatprep.subr.mxu0 %v969
        %1130 = vmatpush1.msra.mxu0 %v968
        %1131 = vmatprep.subr.mxu0 %v973
        %1132 = vmatpush1.msra.mxu0 %v972
        %1133 = vmatprep.subr.mxu0 %v977
        %1134 = vmatpush1.msra.mxu0 %v976
        %1135 = vmatprep.subr.mxu0 %v981
        %1136 = vmatpush1.msra.mxu0 %v980
        %1137 = vmatprep.subr.mxu0 %v985
        %1138 = vmatpush1.msra.mxu0 %v984
        %1139 = vmatprep.subr.mxu0 %v989
        %1140 = vmatpush1.msra.mxu0 %v988
        %1141 = vmatprep.subr.mxu0 %v993
        %1142 = vmatpush1.msra.mxu0 %v992
        %1143 = vmatprep.subr.mxu0 %v997
        %1144 = vmatpush1.msra.mxu0 %v996
        %1145 = vmatprep.subr.mxu0 %v1001
        %1146 = vmatpush1.msra.mxu0 %v1000
        %1147 = vmatprep.subr.mxu0 %v1005
        %1148 = vmatpush1.msra.mxu0 %v1004
        %1149 = vmatprep.subr.mxu0 %v1009
        %1150 = vmatpush1.msra.mxu0 %v1008
        %1151 = vmatprep.mubr.f32.mxu0 %v815
        %1152 = vmatmul.mubr.f32.gmra.mrb[0].mxu0 %v814
        %v1153 = vpop.f32.mrb[0].mxu0
        %v1154 = vadd.f32 0.0, %v1153
        %v1155 = vpop.f32.mrb[0].mxu0
        %v1156 = vadd.f32 0.0, %v1155
        %1157 = vmatprep.mubr.f32.mxu0 %v817
        %1158 = vmatmul.mubr.f32.gmra.mrb[0].mxu0 %v816
        %v1159 = vpop.f32.mrb[0].mxu0
        %v1160 = vadd.f32 0.0, %v1159
        %v1161 = vpop.f32.mrb[0].mxu0
        %v1162 = vadd.f32 0.0, %v1161
        %1163 = vdwg.mxu0
        %1164 = vmatprep.subr.mxu0 %v819
        %1165 = vmatpush1.msra.mxu0 %v818
        %1166 = vmatprep.subr.mxu0 %v823
        %1167 = vmatpush1.msra.mxu0 %v822
        %1168 = vmatprep.subr.mxu0 %v827
        %1169 = vmatpush1.msra.mxu0 %v826
        %1170 = vmatprep.subr.mxu0 %v831
        %1171 = vmatpush1.msra.mxu0 %v830
        %1172 = vmatprep.subr.mxu0 %v835
        %1173 = vmatpush1.msra.mxu0 %v834
        %1174 = vmatprep.subr.mxu0 %v839
        %1175 = vmatpush1.msra.mxu0 %v838
        %1176 = vmatprep.subr.mxu0 %v843
        %1177 = vmatpush1.msra.mxu0 %v842
        %1178 = vmatprep.subr.mxu0 %v847
        %1179 = vmatpush1.msra.mxu0 %v846
        %1180 = vmatprep.subr.mxu0 %v851
        %1181 = vmatpush1.msra.mxu0 %v850
        %1182 = vmatprep.subr.mxu0 %v855
        %1183 = vmatpush1.msra.mxu0 %v854
        %1184 = vmatprep.subr.mxu0 %v859
        %1185 = vmatpush1.msra.mxu0 %v858
        %1186 = vmatprep.subr.mxu0 %v863
        %1187 = vmatpush1.msra.mxu0 %v862
        %1188 = vmatprep.subr.mxu0 %v867
        %1189 = vmatpush1.msra.mxu0 %v866
        %1190 = vmatprep.subr.mxu0 %v871
        %1191 = vmatpush1.msra.mxu0 %v870
        %1192 = vmatprep.subr.mxu0 %v875
        %1193 = vmatpush1.msra.mxu0 %v874
        %1194 = vmatprep.subr.mxu0 %v879
        %1195 = vmatpush1.msra.mxu0 %v878
        %1196 = vmatprep.subr.mxu0 0.0
        %1197 = vmatpush1.msra.mxu0 0.0
        %1198 = vmatprep.subr.mxu0 0.0
        %1199 = vmatpush1.msra.mxu0 0.0
        %1200 = vmatprep.subr.mxu0 0.0
        %1201 = vmatpush1.msra.mxu0 0.0
        %1202 = vmatprep.subr.mxu0 0.0
        %1203 = vmatpush1.msra.mxu0 0.0
        %1204 = vmatprep.subr.mxu0 0.0
        %1205 = vmatpush1.msra.mxu0 0.0
        %1206 = vmatprep.subr.mxu0 0.0
        %1207 = vmatpush1.msra.mxu0 0.0
        %1208 = vmatprep.subr.mxu0 0.0
        %1209 = vmatpush1.msra.mxu0 0.0
        %1210 = vmatprep.subr.mxu0 0.0
        %1211 = vmatpush1.msra.mxu0 0.0
        %1212 = vmatprep.subr.mxu0 0.0
        %1213 = vmatpush1.msra.mxu0 0.0
        %1214 = vmatprep.subr.mxu0 0.0
        %1215 = vmatpush1.msra.mxu0 0.0
        %1216 = vmatprep.subr.mxu0 0.0
        %1217 = vmatpush1.msra.mxu0 0.0
        %1218 = vmatprep.subr.mxu0 0.0
        %1219 = vmatpush1.msra.mxu0 0.0
        %1220 = vmatprep.subr.mxu0 0.0
        %1221 = vmatpush1.msra.mxu0 0.0
        %1222 = vmatprep.subr.mxu0 0.0
        %1223 = vmatpush1.msra.mxu0 0.0
        %1224 = vmatprep.subr.mxu0 0.0
        %1225 = vmatpush1.msra.mxu0 0.0
        %1226 = vmatprep.subr.mxu0 0.0
        %1227 = vmatpush1.msra.mxu0 0.0
        %1228 = vmatprep.mubr.f32.mxu0 0.0
        %1229 = vmatmul.mubr.f32.gmra.mrb[0].mxu0 %v546
        %v1230 = vpop.f32.mrb[0].mxu0
        %v1231 = vadd.f32 %v1077, %v1230
        %v1232 = vpop.f32.mrb[0].mxu0
        %v1233 = vadd.f32 %v1079, %v1232
        %1234 = vmatprep.mubr.f32.mxu0 0.0
        %1235 = vmatmul.mubr.f32.gmra.mrb[0].mxu0 %v547
        %v1236 = vpop.f32.mrb[0].mxu0
        %v1237 = vadd.f32 %v1083, %v1236
        %v1238 = vpop.f32.mrb[0].mxu0
        %v1239 = vadd.f32 %v1085, %v1238
        %1240 = vdwg.mxu0
        %1241 = vmatprep.subr.mxu0 %v821
        %1242 = vmatpush1.msra.mxu0 %v820
        %1243 = vmatprep.subr.mxu0 %v825
        %1244 = vmatpush1.msra.mxu0 %v824
        %1245 = vmatprep.subr.mxu0 %v829
        %1246 = vmatpush1.msra.mxu0 %v828
        %1247 = vmatprep.subr.mxu0 %v833
        %1248 = vmatpush1.msra.mxu0 %v832
        %1249 = vmatprep.subr.mxu0 %v837
        %1250 = vmatpush1.msra.mxu0 %v836
        %1251 = vmatprep.subr.mxu0 %v841
        %1252 = vmatpush1.msra.mxu0 %v840
        %1253 = vmatprep.subr.mxu0 %v845
        %1254 = vmatpush1.msra.mxu0 %v844
        %1255 = vmatprep.subr.mxu0 %v849
        %1256 = vmatpush1.msra.mxu0 %v848
        %1257 = vmatprep.subr.mxu0 %v853
        %1258 = vmatpush1.msra.mxu0 %v852
        %1259 = vmatprep.subr.mxu0 %v857
        %1260 = vmatpush1.msra.mxu0 %v856
        %1261 = vmatprep.subr.mxu0 %v861
        %1262 = vmatpush1.msra.mxu0 %v860
        %1263 = vmatprep.subr.mxu0 %v865
        %1264 = vmatpush1.msra.mxu0 %v864
        %1265 = vmatprep.subr.mxu0 %v869
        %1266 = vmatpush1.msra.mxu0 %v868
        %1267 = vmatprep.subr.mxu0 %v873
        %1268 = vmatpush1.msra.mxu0 %v872
        %1269 = vmatprep.subr.mxu0 %v877
        %1270 = vmatpush1.msra.mxu0 %v876
        %1271 = vmatprep.subr.mxu0 %v881
        %1272 = vmatpush1.msra.mxu0 %v880
        %1273 = vmatprep.subr.mxu0 0.0
        %1274 = vmatpush1.msra.mxu0 0.0
        %1275 = vmatprep.subr.mxu0 0.0
        %1276 = vmatpush1.msra.mxu0 0.0
        %1277 = vmatprep.subr.mxu0 0.0
        %1278 = vmatpush1.msra.mxu0 0.0
        %1279 = vmatprep.subr.mxu0 0.0
        %1280 = vmatpush1.msra.mxu0 0.0
        %1281 = vmatprep.subr.mxu0 0.0
        %1282 = vmatpush1.msra.mxu0 0.0
        %1283 = vmatprep.subr.mxu0 0.0
        %1284 = vmatpush1.msra.mxu0 0.0
        %1285 = vmatprep.subr.mxu0 0.0
        %1286 = vmatpush1.msra.mxu0 0.0
        %1287 = vmatprep.subr.mxu0 0.0
        %1288 = vmatpush1.msra.mxu0 0.0
        %1289 = vmatprep.subr.mxu0 0.0
        %1290 = vmatpush1.msra.mxu0 0.0
        %1291 = vmatprep.subr.mxu0 0.0
        %1292 = vmatpush1.msra.mxu0 0.0
        %1293 = vmatprep.subr.mxu0 0.0
        %1294 = vmatpush1.msra.mxu0 0.0
        %1295 = vmatprep.subr.mxu0 0.0
        %1296 = vmatpush1.msra.mxu0 0.0
        %1297 = vmatprep.subr.mxu0 0.0
        %1298 = vmatpush1.msra.mxu0 0.0
        %1299 = vmatprep.subr.mxu0 0.0
        %1300 = vmatpush1.msra.mxu0 0.0
        %1301 = vmatprep.subr.mxu0 0.0
        %1302 = vmatpush1.msra.mxu0 0.0
        %1303 = vmatprep.subr.mxu0 0.0
        %1304 = vmatpush1.msra.mxu0 0.0
        %1305 = vmatprep.mubr.f32.mxu0 0.0
        %1306 = vmatmul.mubr.f32.gmra.mrb[0].mxu0 %v546
        %v1307 = vpop.f32.mrb[0].mxu0
        %v1308 = vadd.f32 %v1154, %v1307
        %v1309 = vpop.f32.mrb[0].mxu0
        %v1310 = vadd.f32 %v1156, %v1309
        %1311 = vmatprep.mubr.f32.mxu0 0.0
        %1312 = vmatmul.mubr.f32.gmra.mrb[0].mxu0 %v547
        %v1313 = vpop.f32.mrb[0].mxu0
        %v1314 = vadd.f32 %v1160, %v1313
        %v1315 = vpop.f32.mrb[0].mxu0
        %v1316 = vadd.f32 %v1162, %v1315
        %1317 = vdwg.mxu0
        %v1318 = vxor.u32 %v1231, 2147483648
        %v1319 = vxor.u32 %v1237, 2147483648
        %v1320 = vmul.f32 %v1318, 1.442695
        %v1321 = vpow.pop %v1320
        %v1322 = vmul.f32 %v1319, 1.442695
        %v1323 = vpow.pop %v1322
        %v1324 = vadd.f32 %v1321, 1.0
        %v1325 = vadd.f32 %v1323, 1.0
        %v1326 = vrcp.pop %v1324
        %v1327 = vmul.f32 1.0, %v1326
        %v1328 = vrcp.pop %v1325
        %v1329 = vmul.f32 1.0, %v1328
        %v1330 = vxor.u32 %v1233, 2147483648
        %v1331 = vxor.u32 %v1239, 2147483648
        %v1332 = vmul.f32 %v1330, 1.442695
        %v1333 = vpow.pop %v1332
        %v1334 = vmul.f32 %v1331, 1.442695
        %v1335 = vpow.pop %v1334
        %v1336 = vadd.f32 %v1333, 1.0
        %v1337 = vadd.f32 %v1335, 1.0
        %v1338 = vrcp.pop %v1336
        %v1339 = vmul.f32 1.0, %v1338
        %v1340 = vrcp.pop %v1337
        %v1341 = vmul.f32 1.0, %v1340
        %v1342 = vxor.u32 %v1308, 2147483648
        %v1343 = vxor.u32 %v1314, 2147483648
        %v1344 = vmul.f32 %v1342, 1.442695
        %v1345 = vpow.pop %v1344
        %v1346 = vmul.f32 %v1343, 1.442695
        %v1347 = vpow.pop %v1346
        %v1348 = vadd.f32 %v1345, 1.0
        %v1349 = vadd.f32 %v1347, 1.0
        %v1350 = vrcp.pop %v1348
        %v1351 = vmul.f32 1.0, %v1350
        %v1352 = vrcp.pop %v1349
        %v1353 = vmul.f32 1.0, %v1352
        %v1354 = vtanh.pop %v1310
        %v1355 = vtanh.pop %v1316
        %v1356 = vld [vmem:[%s455] sm:$0xff]
        %v1357 = vld [vmem:[%s455 + $0x8] sm:$0xff]
        %v1358 = vmul.f32 %v1339, %v1356
        %v1359 = vmul.f32 %v1341, %v1357
        %v1360 = vmul.f32 %v1327, %v1354
        %v1361 = vmul.f32 %v1329, %v1355
        %v1362 = vadd.f32 %v1358, %v1360
        %v1363 = vadd.f32 %v1359, %v1361
        %v1364 = vtanh.pop %v1362
        %v1365 = vtanh.pop %v1363
        %v1366 = vmul.f32 %v1351, %v1364
        %v1367 = vmul.f32 %v1353, %v1365
        %1368 = vst [vmem:[%s531] sm:$0xff] %v1366
        %1369 = vst [vmem:[%s531 + $0x8] sm:$0xff] %v1367
        %1370 = vst [vmem:[%s538] sm:$0xff] %v1362
        %1371 = vst [vmem:[%s538 + $0x8] sm:$0xff] %v1363
        %s1372 = sand.u32 %s232, 1
        %s1373 = scalar_lea.sflag [#allocation5], %s1372
        %s1374 = sand.u32 %s232, 1
        %s1375 = smul.addr %s1374, 16
        %s1376 = scalar_lea.vmem [#allocation15], %s1375
        %s1377 = sand.u32 %s260, 1
        %s1378 = scalar_lea.sflag [#allocation17], %s1377
        %s1379 = sand.u32 %s260, 1
        %s1380 = smul.addr %s1379, 16
        %s1381 = scalar_lea.vmem [#allocation16], %s1380
        // Predicated region
        $region81: #{tpu_custom_call.1} parent=47 // pred_check
          %p1382 = pneg %p242
        $region82: #{tpu_custom_call.1} parent=47 // pred_check_branch
          %1384 = sbr.rel (%p1382) target = $region84
        $region83: #{tpu_custom_call.1} parent=47 // pred_region
          %s1385 = smul.u32 2, %s40
          %s1387 = ssub.s32 256, 256
          %1388 = vsyncadd %s1373, %s1387
          %s1389 = smul.addr %s1385, 2
          %s1390 = sadd.s32 %s41, %s1389
          %s1391 = smul.addr %s1390, 128
          %s1392 = scalar_lea.hbm %s7, %s1391
          %s1393 = sshll.u32 %s1376, 4
          %s1394 = int_to_ptr.vmem [resolvable:$true] %s1393
          %1399 = dma.vmem_to_hbm [thread:$0]  %s1394, 256, %s1392, %s1373, 128, 256, 8
        $region84: #{tpu_custom_call.1} parent=47 // pred_fallthru
          _
        // Predicated region
        $region85: #{tpu_custom_call.1} parent=47 // pred_check
          %p1400 = pneg %p270
        $region86: #{tpu_custom_call.1} parent=47 // pred_check_branch
          %1402 = sbr.rel (%p1400) target = $region88
        $region87: #{tpu_custom_call.1} parent=47 // pred_region
          %s1403 = smul.u32 2, %s40
          %s1405 = ssub.s32 256, 256
          %1406 = vsyncadd %s1378, %s1405
          %s1407 = smul.addr %s1403, 2
          %s1408 = sadd.s32 %s41, %s1407
          %s1409 = smul.addr %s1408, 128
          %s1410 = scalar_lea.hbm %s8, %s1409
          %s1411 = sshll.u32 %s1381, 4
          %s1412 = int_to_ptr.vmem [resolvable:$true] %s1411
          %1417 = dma.vmem_to_hbm [thread:$0]  %s1412, 256, %s1410, %s1378, 128, 256, 8
        $region88: #{tpu_custom_call.1} parent=47 // pred_fallthru
          _
      $region48: #{tpu_custom_call.1} parent=5 // pred_fallthru
        _
      %p1418 = scmp.le.s32.totalorder 2, %s31
      // Predicated region
      $region89: #{tpu_custom_call.1} parent=5 // pred_check
        %p1419 = pneg %p1418
      $region90: #{tpu_custom_call.1} parent=5 // pred_check_branch
        %1421 = sbr.rel (%p1419) target = $region92
      $region91: #{tpu_custom_call.1} parent=5 // pred_region
        %s1422 = ssub.s32 %s31, 2
        // Predicated region
        $region93: #{tpu_custom_call.1} parent=91 // pred_check
          %p1423 = pneg %p248
        $region94: #{tpu_custom_call.1} parent=91 // pred_check_branch
          %1425 = sbr.rel (%p1423) target = $region96
        $region95: #{tpu_custom_call.1} parent=91 // pred_region
          %s1426 = sand.u32 %s233, 1
          %s1427 = scalar_lea.sflag [#allocation5], %s1426
          %s1428 = sand.u32 %s233, 1
          %s1429 = smul.addr %s1428, 16
          %s1430 = scalar_lea.vmem [#allocation15], %s1429
          %1431 = dma.done %s1427, 256
        $region96: #{tpu_custom_call.1} parent=91 // pred_fallthru
          _
        // Predicated region
        $region97: #{tpu_custom_call.1} parent=91 // pred_check
          %p1432 = pneg %p276
        $region98: #{tpu_custom_call.1} parent=91 // pred_check_branch
          %1434 = sbr.rel (%p1432) target = $region100
        $region99: #{tpu_custom_call.1} parent=91 // pred_region
          %s1435 = sand.u32 %s261, 1
          %s1436 = scalar_lea.sflag [#allocation17], %s1435
          %s1437 = sand.u32 %s261, 1
          %s1438 = smul.addr %s1437, 16
          %s1439 = scalar_lea.vmem [#allocation16], %s1438
          %1440 = dma.done %s1436, 256
        $region100: #{tpu_custom_call.1} parent=91 // pred_fallthru
          _
      $region92: #{tpu_custom_call.1} parent=5 // pred_fallthru
        _
    $region6: #{tpu_custom_call.1} parent=1 // loop_footer
      %s35 = sadd.s32 1, %s31
    $region7: #{tpu_custom_call.1} parent=1 // loop_footer_branch
      %30 = sbr.rel target = $region3
    $region8: #{tpu_custom_call.1} parent=1 // loop_exit
      _
    %1441 = vsyncpa [#allocation4], 1
    %s1442 = scalar_lea.sflag [#allocation4], 1
    %1443 = vsyncpa %s1442, 1
    %1444 = vsyncpa [#allocation7], 1
    %s1445 = scalar_lea.sflag [#allocation7], 1
    %1446 = vsyncpa %s1445, 1
    %1447 = vsyncpa [#allocation10], 1
    %1448 = vsyncpa [#allocation13], 1
    %s1449 = scalar_lea.sflag [#allocation13], 1
    %1450 = vsyncpa %s1449, 1
    %1451 = vsyncpa [#allocation5], 1
    %s1452 = scalar_lea.sflag [#allocation5], 1
    %1453 = vsyncpa %s1452, 1
    %1454 = vsyncpa [#allocation17], 1
    %s1455 = scalar_lea.sflag [#allocation17], 1
    %1456 = vsyncpa %s1455, 1

// kernel: tpu_custom_call.1
$region0: #{tpu_custom_call.1}
  #allocation0 [shape = 'u32[]', space=smem, size = 0x4, offset = 0x4, fixed_abs, tag = 'smem constant byte address 0x4 - core index']
  #allocation1 [shape = 'u32[144,128]{1,0:T(1,128)}', space=vmem, size = 0x12000, scoped, tag = 'internal scratch']
  #allocation2 [shape = 'f32[16,256]{1,0:T(8,128)}', space=vmem, size = 0x4000, scoped, tag = 'scratch operand']
  %s0 = inlined_call_operand.hbm [shape: f32[32,128], index: 0, kind: input, shape index: {}]
  %s1 = inlined_call_operand.hbm [shape: f32[32,256], index: 1, kind: input, shape index: {}]
  %s2 = inlined_call_operand.hbm [shape: f32[32,256], index: 2, kind: input, shape index: {}]
  %s3 = inlined_call_operand.hbm [shape: f32[128,256], index: 3, kind: input, shape index: {}]
  %s4 = inlined_call_operand.hbm [shape: f32[256,256], index: 4, kind: input, shape index: {}]
  %s5 = inlined_call_operand.hbm [shape: f32[128,1024], index: 5, kind: input, shape index: {}]
  %s6 = inlined_call_operand.hbm [shape: f32[256,1024], index: 6, kind: input, shape index: {}]
  %s7 = inlined_call_operand.hbm [shape: f32[32,256], index: 7, kind: output, shape index: {0}]
  %s8 = inlined_call_operand.hbm [shape: f32[32,256], index: 8, kind: output, shape index: {1}]
  %9 = xla_tuple %s7, %s8
  %s10 = sld [smem:[#allocation0]]
  $region101: #{tpu_custom_call.1} parent=0
    _
  %s12 = ssub.s32 1, %s10
  %s13 = scalar_select 0, %s12, %s10
  $region1: #{tpu_custom_call.1} parent=0
    #allocation3 [shape = 'u8[16384]{0}', space=vmem, size = 0x4000, scoped, tag = 'input window, operand 0']
    #allocation4 [shape = 's32[2]{0}', space=sflag, size = 0x8, scoped, tag = 'scoped memory for tpu_custom_call.1']
    #allocation5 [shape = 's32[2]{0}', space=sflag, size = 0x8, scoped, tag = 'scoped memory for tpu_custom_call.1']
    #allocation6 [shape = 'u8[32768]{0}', space=vmem, size = 0x8000, scoped, tag = 'input window, operand 1']
    #allocation7 [shape = 's32[2]{0}', space=sflag, size = 0x8, scoped, tag = 'scoped memory for tpu_custom_call.1']
    #allocation8 [shape = 'u8[16384]{0}', space=vmem, size = 0x4000, scoped, tag = 'input window, operand 2']
    #allocation9 [shape = 'u8[131072]{0}', space=vmem, size = 0x20000, scoped, tag = 'input window, operand 3, single buffered']
    #allocation10 [shape = 's32[1]{0}', space=sflag, size = 0x4, scoped, tag = 'scoped memory for tpu_custom_call.1']
    #allocation11 [shape = 'u8[262144]{0}', space=vmem, size = 0x40000, scoped, tag = 'input window, operand 4, single buffered']
    #allocation12 [shape = 'u8[524288]{0}', space=vmem, size = 0x80000, scoped, tag = 'input window, operand 5']
    #allocation13 [shape = 's32[2]{0}', space=sflag, size = 0x8, scoped, tag = 'scoped memory for tpu_custom_call.1']
    #allocation14 [shape = 'u8[1048576]{0}', space=vmem, size = 0x100000, scoped, tag = 'input window, operand 6']
    #allocation15 [shape = 'u8[16384]{0}', space=vmem, size = 0x4000, scoped, tag = 'output window, operand 0']
    #allocation16 [shape = 'u8[16384]{0}', space=vmem, size = 0x4000, scoped, tag = 'output window, operand 1']
    #allocation17 [shape = 's32[2]{0}', space=sflag, size = 0x8, scoped, tag = 'scoped memory for tpu_custom_call.1']
    %14 = vsyncpa [#allocation4], 0
    %s15 = scalar_lea.sflag [#allocation4], 1
    %16 = vsyncpa %s15, 0
    %17 = vsyncpa [#allocation7], 0
    %s18 = scalar_lea.sflag [#allocation7], 1
    %19 = vsyncpa %s18, 0
    %20 = vsyncpa [#allocation10], 0
    %21 = vsyncpa [#allocation13], 0
    %s22 = scalar_lea.sflag [#allocation13], 1
    %23 = vsyncpa %s22, 0
    %24 = vsyncpa [#allocation5], 0
    %s25 = scalar_lea.sflag [#allocation5], 1
    %26 = vsyncpa %s25, 0
    %27 = vsyncpa [#allocation17], 0
    %s28 = scalar_lea.sflag [#allocation17], 1
    %29 = vsyncpa %s28, 0
    loop: start=0, step=1, limit=6
    $region2: #{tpu_custom_call.1} parent=1 // loop_pre_header
      _
    $region3: #{tpu_custom_call.1} parent=1 // loop_header
      %s31 = sphi 0, %s35
      %p32 = scmp.ge.s32.totalorder %s31, 6
      %s38 = sphi 0, %s50
      %s39 = sphi 0, %s46
      %s40 = sphi 0, %s38
      %s41 = sphi 0, %s39
      %s42 = sphi 0, %s40
      %s43 = sphi 0, %s41
      %s53 = sphi 0, %s55
      %s56 = sphi 0, %s53
      %s57 = sphi 0, %s56
      %s73 = sphi 0, %s57
      %s79 = sphi 0, %s81
      %s82 = sphi 0, %s79
      %s83 = sphi 0, %s82
      %s99 = sphi 0, %s83
      %s107 = sphi 0, %s109
      %s110 = sphi 0, %s107
      %s111 = sphi 0, %s110
      %s127 = sphi 0, %s111
      %s131 = sphi 0, %s131
      %s133 = sphi 0, %s131
      %s134 = sphi 0, %s133
      %s148 = sphi 0, %s134
      %s152 = sphi 0, %s152
      %s154 = sphi 0, %s152
      %s155 = sphi 0, %s154
      %s169 = sphi 0, %s155
      %s175 = sphi 0, %s177
      %s178 = sphi 0, %s175
      %s179 = sphi 0, %s178
      %s195 = sphi 0, %s179
      %s201 = sphi 0, %s203
      %s204 = sphi 0, %s201
      %s205 = sphi 0, %s204
      %s221 = sphi 0, %s205
      %s229 = sphi 0, %s231
      %s232 = sphi 0, %s229
      %s233 = sphi 0, %s232
      %s249 = sphi 0, %s233
      %s257 = sphi 0, %s259
      %s260 = sphi 0, %s257
      %s261 = sphi 0, %s260
      %s277 = sphi 0, %s261
    $region4: #{tpu_custom_call.1} parent=1 // loop_header_branch
      %34 = sbr.rel (%p32) target = $region8
    $region5: #{tpu_custom_call.1} parent=1 // loop_body
      %s36 = ssub.s32 %s31, 1
      %s37 = ssub.s32 %s31, 2
      %s44 = sadd.s32 1, %s39
      %p45 = scmp.ge.s32.totalorder %s44, 2
      %s46 = scalar_select %p45, 0, %s44
      %s47 = sadd.s32 1, %s38
      %s48 = scalar_select %p45, %s47, %s38
      %p49 = scmp.ge.s32.totalorder %s48, 2
      %s50 = scalar_select %p49, 0, %s48
      %s51 = ssub.s32 %s38, %s50
      %p52 = scmp.eq.s32.totalorder %s51, 0
      %s54 = sadd.s32 %s53, 1
      %s55 = scalar_select %p52, %s53, %s54
      %p58 = pneg %p52
      %p59 = scmp.eq.s32.totalorder %s31, 3
      %p60 = por %p58, %p59
      %p61 = scmp.ne.s32.totalorder %s53, %s56
      %p62 = scmp.eq.s32.totalorder %s31, 0
      %p63 = por %p61, %p62
      %p64 = scmp.ne.s32.totalorder %s53, %s56
      %p65 = scmp.eq.s32.totalorder %s36, 3
      %p66 = por %p64, %p65
      %p67 = scmp.ne.s32.totalorder %s56, %s57
      %p68 = scmp.eq.s32.totalorder %s36, 0
      %p69 = por %p67, %p68
      %p70 = scmp.ne.s32.totalorder %s56, %s57
      %p71 = scmp.eq.s32.totalorder %s37, 3
      %p72 = por %p70, %p71
      %p74 = scmp.ne.s32.totalorder %s57, %s73
      %p75 = scmp.eq.s32.totalorder %s37, 0
      %p76 = por %p74, %p75
      %s77 = ssub.s32 %s38, %s50
      %p78 = scmp.eq.s32.totalorder %s77, 0
      %s80 = sadd.s32 %s79, 1
      %s81 = scalar_select %p78, %s79, %s80
      %p84 = pneg %p78
      %p85 = scmp.eq.s32.totalorder %s31, 3
      %p86 = por %p84, %p85
      %p87 = scmp.ne.s32.totalorder %s79, %s82
      %p88 = scmp.eq.s32.totalorder %s31, 0
      %p89 = por %p87, %p88
      %p90 = scmp.ne.s32.totalorder %s79, %s82
      %p91 = scmp.eq.s32.totalorder %s36, 3
      %p92 = por %p90, %p91
      %p93 = scmp.ne.s32.totalorder %s82, %s83
      %p94 = scmp.eq.s32.totalorder %s36, 0
      %p95 = por %p93, %p94
      %p96 = scmp.ne.s32.totalorder %s82, %s83
      %p97 = scmp.eq.s32.totalorder %s37, 3
      %p98 = por %p96, %p97
      %p100 = scmp.ne.s32.totalorder %s83, %s99
      %p101 = scmp.eq.s32.totalorder %s37, 0
      %p102 = por %p100, %p101
      %s103 = ssub.s32 %s38, %s50
      %s104 = ssub.s32 %s39, %s46
      %s105 = sor.u32 %s103, %s104
      %p106 = scmp.eq.s32.totalorder %s105, 0
      %s108 = sadd.s32 %s107, 1
      %s109 = scalar_select %p106, %s107, %s108
      %p112 = pneg %p106
      %p113 = scmp.eq.s32.totalorder %s31, 3
      %p114 = por %p112, %p113
      %p115 = scmp.ne.s32.totalorder %s107, %s110
      %p116 = scmp.eq.s32.totalorder %s31, 0
      %p117 = por %p115, %p116
      %p118 = scmp.ne.s32.totalorder %s107, %s110
      %p119 = scmp.eq.s32.totalorder %s36, 3
      %p120 = por %p118, %p119
      %p121 = scmp.ne.s32.totalorder %s110, %s111
      %p122 = scmp.eq.s32.totalorder %s36, 0
      %p123 = por %p121, %p122
      %p124 = scmp.ne.s32.totalorder %s110, %s111
      %p125 = scmp.eq.s32.totalorder %s37, 3
      %p126 = por %p124, %p125
      %p128 = scmp.ne.s32.totalorder %s111, %s127
      %p129 = scmp.eq.s32.totalorder %s37, 0
      %p130 = por %p128, %p129
      %s132 = sadd.s32 %s131, 1
      %p135 = scmp.eq.s32.totalorder %s31, 3
      %p136 = scmp.ne.s32.totalorder %s131, %s133
      %p137 = scmp.eq.s32.totalorder %s31, 0
      %p138 = por %p136, %p137
      %p139 = scmp.ne.s32.totalorder %s131, %s133
      %p140 = scmp.eq.s32.totalorder %s36, 3
      %p141 = por %p139, %p140
      %p142 = scmp.ne.s32.totalorder %s133, %s134
      %p143 = scmp.eq.s32.totalorder %s36, 0
      %p144 = por %p142, %p143
      %p145 = scmp.ne.s32.totalorder %s133, %s134
      %p146 = scmp.eq.s32.totalorder %s37, 3
      %p147 = por %p145, %p146
      %p149 = scmp.ne.s32.totalorder %s134, %s148
      %p150 = scmp.eq.s32.totalorder %s37, 0
      %p151 = por %p149, %p150
      %s153 = sadd.s32 %s152, 1
      %p156 = scmp.eq.s32.totalorder %s31, 3
      %p157 = scmp.ne.s32.totalorder %s152, %s154
      %p158 = scmp.eq.s32.totalorder %s31, 0
      %p159 = por %p157, %p158
      %p160 = scmp.ne.s32.totalorder %s152, %s154
      %p161 = scmp.eq.s32.totalorder %s36, 3
      %p162 = por %p160, %p161
      %p163 = scmp.ne.s32.totalorder %s154, %s155
      %p164 = scmp.eq.s32.totalorder %s36, 0
      %p165 = por %p163, %p164
      %p166 = scmp.ne.s32.totalorder %s154, %s155
      %p167 = scmp.eq.s32.totalorder %s37, 3
      %p168 = por %p166, %p167
      %p170 = scmp.ne.s32.totalorder %s155, %s169
      %p171 = scmp.eq.s32.totalorder %s37, 0
      %p172 = por %p170, %p171
      %s173 = ssub.s32 %s39, %s46
      %p174 = scmp.eq.s32.totalorder %s173, 0
      %s176 = sadd.s32 %s175, 1
      %s177 = scalar_select %p174, %s175, %s176
      %p180 = pneg %p174
      %p181 = scmp.eq.s32.totalorder %s31, 3
      %p182 = por %p180, %p181
      %p183 = scmp.ne.s32.totalorder %s175, %s178
      %p184 = scmp.eq.s32.totalorder %s31, 0
      %p185 = por %p183, %p184
      %p186 = scmp.ne.s32.totalorder %s175, %s178
      %p187 = scmp.eq.s32.totalorder %s36, 3
      %p188 = por %p186, %p187
      %p189 = scmp.ne.s32.totalorder %s178, %s179
      %p190 = scmp.eq.s32.totalorder %s36, 0
      %p191 = por %p189, %p190
      %p192 = scmp.ne.s32.totalorder %s178, %s179
      %p193 = scmp.eq.s32.totalorder %s37, 3
      %p194 = por %p192, %p193
      %p196 = scmp.ne.s32.totalorder %s179, %s195
      %p197 = scmp.eq.s32.totalorder %s37, 0
      %p198 = por %p196, %p197
      %s199 = ssub.s32 %s39, %s46
      %p200 = scmp.eq.s32.totalorder %s199, 0
      %s202 = sadd.s32 %s201, 1
      %s203 = scalar_select %p200, %s201, %s202
      %p206 = pneg %p200
      %p207 = scmp.eq.s32.totalorder %s31, 3
      %p208 = por %p206, %p207
      %p209 = scmp.ne.s32.totalorder %s201, %s204
      %p210 = scmp.eq.s32.totalorder %s31, 0
      %p211 = por %p209, %p210
      %p212 = scmp.ne.s32.totalorder %s201, %s204
      %p213 = scmp.eq.s32.totalorder %s36, 3
      %p214 = por %p212, %p213
      %p215 = scmp.ne.s32.totalorder %s204, %s205
      %p216 = scmp.eq.s32.totalorder %s36, 0
      %p217 = por %p215, %p216
      %p218 = scmp.ne.s32.totalorder %s204, %s205
      %p219 = scmp.eq.s32.totalorder %s37, 3
      %p220 = por %p218, %p219
      %p222 = scmp.ne.s32.totalorder %s205, %s221
      %p223 = scmp.eq.s32.totalorder %s37, 0
      %p224 = por %p222, %p223
      %s225 = ssub.s32 %s38, %s50
      %s226 = ssub.s32 %s39, %s46
      %s227 = sor.u32 %s225, %s226
      %p228 = scmp.eq.s32.totalorder %s227, 0
      %s230 = sadd.s32 %s229, 1
      %s231 = scalar_select %p228, %s229, %s230
      %p234 = pneg %p228
      %p235 = scmp.eq.s32.totalorder %s31, 3
      %p236 = por %p234, %p235
      %p237 = scmp.ne.s32.totalorder %s229, %s232
      %p238 = scmp.eq.s32.totalorder %s31, 0
      %p239 = por %p237, %p238
      %p240 = scmp.ne.s32.totalorder %s229, %s232
      %p241 = scmp.eq.s32.totalorder %s36, 3
      %p242 = por %p240, %p241
      %p243 = scmp.ne.s32.totalorder %s232, %s233
      %p244 = scmp.eq.s32.totalorder %s36, 0
      %p245 = por %p243, %p244
      %p246 = scmp.ne.s32.totalorder %s232, %s233
      %p247 = scmp.eq.s32.totalorder %s37, 3
      %p248 = por %p246, %p247
      %p250 = scmp.ne.s32.totalorder %s233, %s249
      %p251 = scmp.eq.s32.totalorder %s37, 0
      %p252 = por %p250, %p251
      %s253 = ssub.s32 %s38, %s50
      %s254 = ssub.s32 %s39, %s46
      %s255 = sor.u32 %s253, %s254
      %p256 = scmp.eq.s32.totalorder %s255, 0
      %s258 = sadd.s32 %s257, 1
      %s259 = scalar_select %p256, %s257, %s258
      %p262 = pneg %p256
      %p263 = scmp.eq.s32.totalorder %s31, 3
      %p264 = por %p262, %p263
      %p265 = scmp.ne.s32.totalorder %s257, %s260
      %p266 = scmp.eq.s32.totalorder %s31, 0
      %p267 = por %p265, %p266
      %p268 = scmp.ne.s32.totalorder %s257, %s260
      %p269 = scmp.eq.s32.totalorder %s36, 3
      %p270 = por %p268, %p269
      %p271 = scmp.ne.s32.totalorder %s260, %s261
      %p272 = scmp.eq.s32.totalorder %s36, 0
      %p273 = por %p271, %p272
      %p274 = scmp.ne.s32.totalorder %s260, %s261
      %p275 = scmp.eq.s32.totalorder %s37, 3
      %p276 = por %p274, %p275
      %p278 = scmp.ne.s32.totalorder %s261, %s277
      %p279 = scmp.eq.s32.totalorder %s37, 0
      %p280 = por %p278, %p279
      %p281 = scmp.le.s32.totalorder 1, %s31
      %p282 = scmp.lt.s32.totalorder %s31, 5
      %p283 = pnand %p281, %p282
      %p284 = pneg %p283
      // Predicated region
      $region9: #{tpu_custom_call.1} parent=5 // pred_check
        _
      $region10: #{tpu_custom_call.1} parent=5 // pred_check_branch
        %286 = sbr.rel (%p283) target = $region12
      $region11: #{tpu_custom_call.1} parent=5 // pred_region
        %s287 = ssub.s32 %s31, 1
        // Predicated region
        $region13: #{tpu_custom_call.1} parent=11 // pred_check
          %p288 = pneg %p144
        $region14: #{tpu_custom_call.1} parent=11 // pred_check_branch
          %290 = sbr.rel (%p288) target = $region16
        $region15: #{tpu_custom_call.1} parent=11 // pred_region
          %s292 = ssub.s32 4096, 4096
          %293 = vsyncadd [#allocation10], %s292
          %s294 = sshll.u32 [#allocation9], 4
          %s295 = int_to_ptr.vmem [resolvable:$true] %s294
          %300 = dma.hbm_to_vmem [thread:$0]  %s3, 4096, %s295, [#allocation10], 256, 256, 16
        $region16: #{tpu_custom_call.1} parent=11 // pred_fallthru
          _
        // Predicated region
        $region17: #{tpu_custom_call.1} parent=11 // pred_check
          %p301 = pneg %p165
        $region18: #{tpu_custom_call.1} parent=11 // pred_check_branch
          %303 = sbr.rel (%p301) target = $region20
        $region19: #{tpu_custom_call.1} parent=11 // pred_region
          %s305 = ssub.s32 8192, 8192
          %306 = vsyncadd [#allocation10], %s305
          %s307 = sshll.u32 [#allocation11], 4
          %s308 = int_to_ptr.vmem [resolvable:$true] %s307
          %313 = dma.hbm_to_vmem [thread:$0]  %s4, 8192, %s308, [#allocation10], 256, 256, 16
        $region20: #{tpu_custom_call.1} parent=11 // pred_fallthru
          _
      $region12: #{tpu_custom_call.1} parent=5 // pred_fallthru
        _
      %p314 = scmp.lt.s32.totalorder %s31, 4
      // Predicated region
      $region21: #{tpu_custom_call.1} parent=5 // pred_check
        %p315 = pneg %p314
      $region22: #{tpu_custom_call.1} parent=5 // pred_check_branch
        %317 = sbr.rel (%p315) target = $region24
      $region23: #{tpu_custom_call.1} parent=5 // pred_region
        // Predicated region
        $region25: #{tpu_custom_call.1} parent=23 // pred_check
          %p318 = pneg %p63
        $region26: #{tpu_custom_call.1} parent=23 // pred_check_branch
          %320 = sbr.rel (%p318) target = $region28
        $region27: #{tpu_custom_call.1} parent=23 // pred_region
          %s321 = sand.u32 %s53, 1
          %s322 = scalar_lea.sflag [#allocation4], %s321
          %s323 = sand.u32 %s53, 1
          %s324 = smul.addr %s323, 16
          %s325 = scalar_lea.vmem [#allocation3], %s324
          %s326 = smul.u32 2, %s38
          %s328 = ssub.s32 256, 256
          %329 = vsyncadd %s322, %s328
          %s330 = smul.addr %s326, 128
          %s331 = scalar_lea.hbm %s0, %s330
          %s332 = sshll.u32 %s325, 4
          %s333 = int_to_ptr.vmem [resolvable:$true] %s332
          %338 = dma.hbm_to_vmem [thread:$0]  %s331, 256, %s333, %s322, 128, 128, 8
        $region28: #{tpu_custom_call.1} parent=23 // pred_fallthru
          _
        // Predicated region
        $region29: #{tpu_custom_call.1} parent=23 // pred_check
          %p339 = pneg %p89
        $region30: #{tpu_custom_call.1} parent=23 // pred_check_branch
          %341 = sbr.rel (%p339) target = $region32
        $region31: #{tpu_custom_call.1} parent=23 // pred_region
          %s342 = sand.u32 %s31, 1
          %s343 = scalar_lea.sflag [#allocation7], %s342
          %s344 = sand.u32 %s79, 1
          %s345 = smul.addr %s344, 32
          %s346 = scalar_lea.vmem [#allocation6], %s345
          %s347 = smul.u32 2, %s38
          %s349 = ssub.s32 512, 512
          %350 = vsyncadd %s343, %s349
          %s351 = smul.addr %s347, 2
          %s352 = smul.addr %s351, 128
          %s353 = scalar_lea.hbm %s1, %s352
          %s354 = sshll.u32 %s346, 4
          %s355 = int_to_ptr.vmem [resolvable:$true] %s354
          %360 = dma.hbm_to_vmem [thread:$0]  %s353, 512, %s355, %s343, 256, 256, 16
        $region32: #{tpu_custom_call.1} parent=23 // pred_fallthru
          _
        // Predicated region
        $region33: #{tpu_custom_call.1} parent=23 // pred_check
          %p361 = pneg %p117
        $region34: #{tpu_custom_call.1} parent=23 // pred_check_branch
          %363 = sbr.rel (%p361) target = $region36
        $region35: #{tpu_custom_call.1} parent=23 // pred_region
          %s364 = sand.u32 %s31, 1
          %s365 = scalar_lea.sflag [#allocation7], %s364
          %s366 = sand.u32 %s107, 1
          %s367 = smul.addr %s366, 16
          %s368 = scalar_lea.vmem [#allocation8], %s367
          %s369 = smul.u32 2, %s38
          %s371 = ssub.s32 256, 256
          %372 = vsyncadd %s365, %s371
          %s373 = smul.addr %s369, 2
          %s374 = sadd.s32 %s39, %s373
          %s375 = smul.addr %s374, 128
          %s376 = scalar_lea.hbm %s2, %s375
          %s377 = sshll.u32 %s368, 4
          %s378 = int_to_ptr.vmem [resolvable:$true] %s377
          %383 = dma.hbm_to_vmem [thread:$0]  %s376, 256, %s378, %s365, 256, 128, 8
        $region36: #{tpu_custom_call.1} parent=23 // pred_fallthru
          _
        // Predicated region
        $region37: #{tpu_custom_call.1} parent=23 // pred_check
          %p384 = pneg %p185
        $region38: #{tpu_custom_call.1} parent=23 // pred_check_branch
          %386 = sbr.rel (%p384) target = $region40
        $region39: #{tpu_custom_call.1} parent=23 // pred_region
          %s387 = sand.u32 %s31, 1
          %s388 = scalar_lea.sflag [#allocation13], %s387
          %s389 = sand.u32 %s175, 1
          %s390 = smul.addr %s389, 512
          %s391 = scalar_lea.vmem [#allocation12], %s390
          %s392 = smul.u32 4, %s39
          %s394 = ssub.s32 8192, 8192
          %395 = vsyncadd %s388, %s394
          %s396 = smul.addr %s392, 128
          %s397 = scalar_lea.hbm %s5, %s396
          %s398 = sshll.u32 %s391, 4
          %s399 = int_to_ptr.vmem [resolvable:$true] %s398
          %404 = dma.hbm_to_vmem [thread:$0]  %s397, 8192, %s399, %s388, 1024, 512, 32
        $region40: #{tpu_custom_call.1} parent=23 // pred_fallthru
          _
        // Predicated region
        $region41: #{tpu_custom_call.1} parent=23 // pred_check
          %p405 = pneg %p211
        $region42: #{tpu_custom_call.1} parent=23 // pred_check_branch
          %407 = sbr.rel (%p405) target = $region44
        $region43: #{tpu_custom_call.1} parent=23 // pred_region
          %s408 = sand.u32 %s31, 1
          %s409 = scalar_lea.sflag [#allocation13], %s408
          %s410 = sand.u32 %s201, 1
          %s411 = smul.addr %s410, 1024
          %s412 = scalar_lea.vmem [#allocation14], %s411
          %s413 = smul.u32 4, %s39
          %s415 = ssub.s32 16384, 16384
          %416 = vsyncadd %s409, %s415
          %s417 = smul.addr %s413, 128
          %s418 = scalar_lea.hbm %s6, %s417
          %s419 = sshll.u32 %s412, 4
          %s420 = int_to_ptr.vmem [resolvable:$true] %s419
          %425 = dma.hbm_to_vmem [thread:$0]  %s418, 16384, %s420, %s409, 1024, 512, 32
        $region44: #{tpu_custom_call.1} parent=23 // pred_fallthru
          _
      $region24: #{tpu_custom_call.1} parent=5 // pred_fallthru
        _
      %p426 = scmp.le.s32.totalorder 1, %s31
      %p427 = scmp.lt.s32.totalorder %s31, 5
      %p428 = pnand %p426, %p427
      %p429 = pneg %p428
      // Predicated region
      $region45: #{tpu_custom_call.1} parent=5 // pred_check
        _
      $region46: #{tpu_custom_call.1} parent=5 // pred_check_branch
        %431 = sbr.rel (%p428) target = $region48
      $region47: #{tpu_custom_call.1} parent=5 // pred_region
        %s432 = ssub.s32 %s31, 1
        %s433 = sand.u32 %s56, 1
        %s434 = scalar_lea.sflag [#allocation4], %s433
        %s435 = sand.u32 %s56, 1
        %s436 = smul.addr %s435, 16
        %s437 = scalar_lea.vmem [#allocation3], %s436
        // Predicated region
        $region49: #{tpu_custom_call.1} parent=47 // pred_check
          %p438 = pneg %p69
        $region50: #{tpu_custom_call.1} parent=47 // pred_check_branch
          %440 = sbr.rel (%p438) target = $region52
        $region51: #{tpu_custom_call.1} parent=47 // pred_region
          %441 = dma.done %s434, 256
        $region52: #{tpu_custom_call.1} parent=47 // pred_fallthru
          _
        %s442 = sand.u32 %s36, 1
        %s443 = scalar_lea.sflag [#allocation7], %s442
        %s444 = sand.u32 %s82, 1
        %s445 = smul.addr %s444, 32
        %s446 = scalar_lea.vmem [#allocation6], %s445
        // Predicated region
        $region53: #{tpu_custom_call.1} parent=47 // pred_check
          %p447 = pneg %p95
        $region54: #{tpu_custom_call.1} parent=47 // pred_check_branch
          %449 = sbr.rel (%p447) target = $region56
        $region55: #{tpu_custom_call.1} parent=47 // pred_region
          %450 = dma.done %s443, 512
        $region56: #{tpu_custom_call.1} parent=47 // pred_fallthru
          _
        %s451 = sand.u32 %s36, 1
        %s452 = scalar_lea.sflag [#allocation7], %s451
        %s453 = sand.u32 %s110, 1
        %s454 = smul.addr %s453, 16
        %s455 = scalar_lea.vmem [#allocation8], %s454
        // Predicated region
        $region57: #{tpu_custom_call.1} parent=47 // pred_check
          %p456 = pneg %p123
        $region58: #{tpu_custom_call.1} parent=47 // pred_check_branch
          %458 = sbr.rel (%p456) target = $region60
        $region59: #{tpu_custom_call.1} parent=47 // pred_region
          %459 = dma.done %s452, 256
        $region60: #{tpu_custom_call.1} parent=47 // pred_fallthru
          _
        // Predicated region
        $region61: #{tpu_custom_call.1} parent=47 // pred_check
          %p460 = pneg %p144
        $region62: #{tpu_custom_call.1} parent=47 // pred_check_branch
          %462 = sbr.rel (%p460) target = $region64
        $region63: #{tpu_custom_call.1} parent=47 // pred_region
          %463 = dma.done [#allocation10], 4096
        $region64: #{tpu_custom_call.1} parent=47 // pred_fallthru
          _
        // Predicated region
        $region65: #{tpu_custom_call.1} parent=47 // pred_check
          %p464 = pneg %p165
        $region66: #{tpu_custom_call.1} parent=47 // pred_check_branch
          %466 = sbr.rel (%p464) target = $region68
        $region67: #{tpu_custom_call.1} parent=47 // pred_region
          %467 = dma.done [#allocation10], 8192
        $region68: #{tpu_custom_call.1} parent=47 // pred_fallthru
          _
        %s468 = sand.u32 %s36, 1
        %s469 = scalar_lea.sflag [#allocation13], %s468
        %s470 = sand.u32 %s178, 1
        %s471 = smul.addr %s470, 512
        %s472 = scalar_lea.vmem [#allocation12], %s471
        // Predicated region
        $region69: #{tpu_custom_call.1} parent=47 // pred_check
          %p473 = pneg %p191
        $region70: #{tpu_custom_call.1} parent=47 // pred_check_branch
          %475 = sbr.rel (%p473) target = $region72
        $region71: #{tpu_custom_call.1} parent=47 // pred_region
          %476 = dma.done %s469, 8192
        $region72: #{tpu_custom_call.1} parent=47 // pred_fallthru
          _
        %s477 = sand.u32 %s36, 1
        %s478 = scalar_lea.sflag [#allocation13], %s477
        %s479 = sand.u32 %s204, 1
        %s480 = smul.addr %s479, 1024
        %s481 = scalar_lea.vmem [#allocation14], %s480
        // Predicated region
        $region73: #{tpu_custom_call.1} parent=47 // pred_check
          %p482 = pneg %p217
        $region74: #{tpu_custom_call.1} parent=47 // pred_check_branch
          %484 = sbr.rel (%p482) target = $region76
        $region75: #{tpu_custom_call.1} parent=47 // pred_region
          %485 = dma.done %s478, 16384
        $region76: #{tpu_custom_call.1} parent=47 // pred_fallthru
          _
        %s486 = sand.u32 %s56, 1
        %s487 = scalar_lea.sflag [#allocation4], %s486
        %s488 = sand.u32 %s56, 1
        %s489 = smul.addr %s488, 16
        %s490 = scalar_lea.vmem [#allocation3], %s489
        %p491 = pneg %p69
        %p492 = pneg %p66
        %s493 = sand.u32 %s36, 1
        %s494 = scalar_lea.sflag [#allocation7], %s493
        %s495 = sand.u32 %s82, 1
        %s496 = smul.addr %s495, 32
        %s497 = scalar_lea.vmem [#allocation6], %s496
        %p498 = pneg %p95
        %p499 = pneg %p92
        %s500 = sand.u32 %s36, 1
        %s501 = scalar_lea.sflag [#allocation7], %s500
        %s502 = sand.u32 %s110, 1
        %s503 = smul.addr %s502, 16
        %s504 = scalar_lea.vmem [#allocation8], %s503
        %p505 = pneg %p123
        %p506 = pneg %p120
        %p507 = pneg %p144
        %p508 = pneg %p141
        %p509 = pneg %p165
        %p510 = pneg %p162
        %s511 = sand.u32 %s36, 1
        %s512 = scalar_lea.sflag [#allocation13], %s511
        %s513 = sand.u32 %s178, 1
        %s514 = smul.addr %s513, 512
        %s515 = scalar_lea.vmem [#allocation12], %s514
        %p516 = pneg %p191
        %p517 = pneg %p188
        %s518 = sand.u32 %s36, 1
        %s519 = scalar_lea.sflag [#allocation13], %s518
        %s520 = sand.u32 %s204, 1
        %s521 = smul.addr %s520, 1024
        %s522 = scalar_lea.vmem [#allocation14], %s521
        %p523 = pneg %p217
        %p524 = pneg %p214
        %p525 = pneg %p245
        %p526 = pneg %p242
        %s527 = sand.u32 %s232, 1
        %s528 = scalar_lea.sflag [#allocation5], %s527
        %s529 = sand.u32 %s232, 1
        %s530 = smul.addr %s529, 16
        %s531 = scalar_lea.vmem [#allocation15], %s530
        %p532 = pneg %p273
        %p533 = pneg %p270
        %s534 = sand.u32 %s260, 1
        %s535 = scalar_lea.sflag [#allocation17], %s534
        %s536 = sand.u32 %s260, 1
        %s537 = smul.addr %s536, 16
        %s538 = scalar_lea.vmem [#allocation16], %s537
        %s539 = smul.u32 2, %s40
        %s540 = smul.u32 2, %s40
        %s541 = smul.u32 2, %s40
        %s542 = smul.u32 4, %s41
        %s543 = smul.u32 4, %s41
        %s544 = smul.u32 2, %s40
        %s545 = smul.u32 2, %s40
        %v546 = vld [vmem:[%s437] sm:$0xff]
        %v547 = vld [vmem:[%s437 + $0x8] sm:$0xff]
        %v548 = vld [vmem:[%s446] sm:$0xff]
        %v549 = vld [vmem:[%s446 + $0x8] sm:$0xff]
        %v550 = vld [vmem:[%s446 + $0x10] sm:$0xff]
        %v551 = vld [vmem:[%s446 + $0x18] sm:$0xff]
        %p552 = scmp.eq.s32.totalorder %s41, 0
        // Predicated region
        $region77: #{tpu_custom_call.1} parent=47 // pred_check
          %p553 = pneg %p552
        $region78: #{tpu_custom_call.1} parent=47 // pred_check_branch
          %555 = sbr.rel (%p553) target = $region80
        $region79: #{tpu_custom_call.1} parent=47 // pred_region
          %v556 = vld [vmem:[#allocation9] sm:$0xff]
          %v557 = vld [vmem:[#allocation9 + $0x8] sm:$0xff]
          %v558 = vld [vmem:[#allocation9 + $0x10] sm:$0xff]
          %v559 = vld [vmem:[#allocation9 + $0x18] sm:$0xff]
          %v560 = vld [vmem:[#allocation9 + $0x20] sm:$0xff]
          %v561 = vld [vmem:[#allocation9 + $0x28] sm:$0xff]
          %v562 = vld [vmem:[#allocation9 + $0x30] sm:$0xff]
          %v563 = vld [vmem:[#allocation9 + $0x38] sm:$0xff]
          %v564 = vld [vmem:[#allocation9 + $0x40] sm:$0xff]
          %v565 = vld [vmem:[#allocation9 + $0x48] sm:$0xff]
          %v566 = vld [vmem:[#allocation9 + $0x50] sm:$0xff]
          %v567 = vld [vmem:[#allocation9 + $0x58] sm:$0xff]
          %v568 = vld [vmem:[#allocation9 + $0x60] sm:$0xff]
          %v569 = vld [vmem:[#allocation9 + $0x68] sm:$0xff]
          %v570 = vld [vmem:[#allocation9 + $0x70] sm:$0xff]
          %v571 = vld [vmem:[#allocation9 + $0x78] sm:$0xff]
          %v572 = vld [vmem:[#allocation9 + $0x80] sm:$0xff]
          %v573 = vld [vmem:[#allocation9 + $0x88] sm:$0xff]
          %v574 = vld [vmem:[#allocation9 + $0x90] sm:$0xff]
          %v575 = vld [vmem:[#allocation9 + $0x98] sm:$0xff]
          %v576 = vld [vmem:[#allocation9 + $0xa0] sm:$0xff]
          %v577 = vld [vmem:[#allocation9 + $0xa8] sm:$0xff]
          %v578 = vld [vmem:[#allocation9 + $0xb0] sm:$0xff]
          %v579 = vld [vmem:[#allocation9 + $0xb8] sm:$0xff]
          %v580 = vld [vmem:[#allocation9 + $0xc0] sm:$0xff]
          %v581 = vld [vmem:[#allocation9 + $0xc8] sm:$0xff]
          %v582 = vld [vmem:[#allocation9 + $0xd0] sm:$0xff]
          %v583 = vld [vmem:[#allocation9 + $0xd8] sm:$0xff]
          %v584 = vld [vmem:[#allocation9 + $0xe0] sm:$0xff]
          %v585 = vld [vmem:[#allocation9 + $0xe8] sm:$0xff]
          %v586 = vld [vmem:[#allocation9 + $0xf0] sm:$0xff]
          %v587 = vld [vmem:[#allocation9 + $0xf8] sm:$0xff]
          %588 = vmatprep.subr.mxu0 %v557
          %589 = vmatpush1.msra.mxu0 %v556
          %590 = vmatprep.subr.mxu0 %v559
          %591 = vmatpush1.msra.mxu0 %v558
          %592 = vmatprep.subr.mxu0 %v561
          %593 = vmatpush1.msra.mxu0 %v560
          %594 = vmatprep.subr.mxu0 %v563
          %595 = vmatpush1.msra.mxu0 %v562
          %596 = vmatprep.subr.mxu0 %v565
          %597 = vmatpush1.msra.mxu0 %v564
          %598 = vmatprep.subr.mxu0 %v567
          %599 = vmatpush1.msra.mxu0 %v566
          %600 = vmatprep.subr.mxu0 %v569
          %601 = vmatpush1.msra.mxu0 %v568
          %602 = vmatprep.subr.mxu0 %v571
          %603 = vmatpush1.msra.mxu0 %v570
          %604 = vmatprep.subr.mxu0 %v573
          %605 = vmatpush1.msra.mxu0 %v572
          %606 = vmatprep.subr.mxu0 %v575
          %607 = vmatpush1.msra.mxu0 %v574
          %608 = vmatprep.subr.mxu0 %v577
          %609 = vmatpush1.msra.mxu0 %v576
          %610 = vmatprep.subr.mxu0 %v579
          %611 = vmatpush1.msra.mxu0 %v578
          %612 = vmatprep.subr.mxu0 %v581
          %613 = vmatpush1.msra.mxu0 %v580
          %614 = vmatprep.subr.mxu0 %v583
          %615 = vmatpush1.msra.mxu0 %v582
          %616 = vmatprep.subr.mxu0 %v585
          %617 = vmatpush1.msra.mxu0 %v584
          %618 = vmatprep.subr.mxu0 %v587
          %619 = vmatpush1.msra.mxu0 %v586
          %620 = vmatprep.subr.mxu0 0.0
          %621 = vmatpush1.msra.mxu0 0.0
          %622 = vmatprep.subr.mxu0 0.0
          %623 = vmatpush1.msra.mxu0 0.0
          %624 = vmatprep.subr.mxu0 0.0
          %625 = vmatpush1.msra.mxu0 0.0
          %626 = vmatprep.subr.mxu0 0.0
          %627 = vmatpush1.msra.mxu0 0.0
          %628 = vmatprep.subr.mxu0 0.0
          %629 = vmatpush1.msra.mxu0 0.0
          %630 = vmatprep.subr.mxu0 0.0
          %631 = vmatpush1.msra.mxu0 0.0
          %632 = vmatprep.subr.mxu0 0.0
          %633 = vmatpush1.msra.mxu0 0.0
          %634 = vmatprep.subr.mxu0 0.0
          %635 = vmatpush1.msra.mxu0 0.0
          %636 = vmatprep.subr.mxu0 0.0
          %637 = vmatpush1.msra.mxu0 0.0
          %638 = vmatprep.subr.mxu0 0.0
          %639 = vmatpush1.msra.mxu0 0.0
          %640 = vmatprep.subr.mxu0 0.0
          %641 = vmatpush1.msra.mxu0 0.0
          %642 = vmatprep.subr.mxu0 0.0
          %643 = vmatpush1.msra.mxu0 0.0
          %644 = vmatprep.subr.mxu0 0.0
          %645 = vmatpush1.msra.mxu0 0.0
          %646 = vmatprep.subr.mxu0 0.0
          %647 = vmatpush1.msra.mxu0 0.0
          %648 = vmatprep.subr.mxu0 0.0
          %649 = vmatpush1.msra.mxu0 0.0
          %650 = vmatprep.subr.mxu0 0.0
          %651 = vmatpush1.msra.mxu0 0.0
          %652 = vmatprep.mubr.f32.mxu0 0.0
          %653 = vmatmul.mubr.f32.gmra.mrb[0].mxu0 %v546
          %v654 = vpop.f32.mrb[0].mxu0
          %v655 = vadd.f32 0.0, %v654
          %v656 = vpop.f32.mrb[0].mxu0
          %v657 = vadd.f32 0.0, %v656
          %658 = vmatprep.mubr.f32.mxu0 0.0
          %659 = vmatmul.mubr.f32.gmra.mrb[0].mxu0 %v547
          %v660 = vpop.f32.mrb[0].mxu0
          %v661 = vadd.f32 0.0, %v660
          %v662 = vpop.f32.mrb[0].mxu0
          %v663 = vadd.f32 0.0, %v662
          %664 = vdwg.mxu0
          %v665 = vld [vmem:[#allocation11] sm:$0xff]
          %v666 = vld [vmem:[#allocation11 + $0x8] sm:$0xff]
          %v667 = vld [vmem:[#allocation11 + $0x10] sm:$0xff]
          %v668 = vld [vmem:[#allocation11 + $0x18] sm:$0xff]
          %v669 = vld [vmem:[#allocation11 + $0x20] sm:$0xff]
          %v670 = vld [vmem:[#allocation11 + $0x28] sm:$0xff]
          %v671 = vld [vmem:[#allocation11 + $0x30] sm:$0xff]
          %v672 = vld [vmem:[#allocation11 + $0x38] sm:$0xff]
          %v673 = vld [vmem:[#allocation11 + $0x40] sm:$0xff]
          %v674 = vld [vmem:[#allocation11 + $0x48] sm:$0xff]
          %v675 = vld [vmem:[#allocation11 + $0x50] sm:$0xff]
          %v676 = vld [vmem:[#allocation11 + $0x58] sm:$0xff]
          %v677 = vld [vmem:[#allocation11 + $0x60] sm:$0xff]
          %v678 = vld [vmem:[#allocation11 + $0x68] sm:$0xff]
          %v679 = vld [vmem:[#allocation11 + $0x70] sm:$0xff]
          %v680 = vld [vmem:[#allocation11 + $0x78] sm:$0xff]
          %v681 = vld [vmem:[#allocation11 + $0x80] sm:$0xff]
          %v682 = vld [vmem:[#allocation11 + $0x88] sm:$0xff]
          %v683 = vld [vmem:[#allocation11 + $0x90] sm:$0xff]
          %v684 = vld [vmem:[#allocation11 + $0x98] sm:$0xff]
          %v685 = vld [vmem:[#allocation11 + $0xa0] sm:$0xff]
          %v686 = vld [vmem:[#allocation11 + $0xa8] sm:$0xff]
          %v687 = vld [vmem:[#allocation11 + $0xb0] sm:$0xff]
          %v688 = vld [vmem:[#allocation11 + $0xb8] sm:$0xff]
          %v689 = vld [vmem:[#allocation11 + $0xc0] sm:$0xff]
          %v690 = vld [vmem:[#allocation11 + $0xc8] sm:$0xff]
          %v691 = vld [vmem:[#allocation11 + $0xd0] sm:$0xff]
          %v692 = vld [vmem:[#allocation11 + $0xd8] sm:$0xff]
          %v693 = vld [vmem:[#allocation11 + $0xe0] sm:$0xff]
          %v694 = vld [vmem:[#allocation11 + $0xe8] sm:$0xff]
          %v695 = vld [vmem:[#allocation11 + $0xf0] sm:$0xff]
          %v696 = vld [vmem:[#allocation11 + $0xf8] sm:$0xff]
          %v697 = vld [vmem:[#allocation11 + $0x100] sm:$0xff]
          %v698 = vld [vmem:[#allocation11 + $0x108] sm:$0xff]
          %v699 = vld [vmem:[#allocation11 + $0x110] sm:$0xff]
          %v700 = vld [vmem:[#allocation11 + $0x118] sm:$0xff]
          %v701 = vld [vmem:[#allocation11 + $0x120] sm:$0xff]
          %v702 = vld [vmem:[#allocation11 + $0x128] sm:$0xff]
          %v703 = vld [vmem:[#allocation11 + $0x130] sm:$0xff]
          %v704 = vld [vmem:[#allocation11 + $0x138] sm:$0xff]
          %v705 = vld [vmem:[#allocation11 + $0x140] sm:$0xff]
          %v706 = vld [vmem:[#allocation11 + $0x148] sm:$0xff]
          %v707 = vld [vmem:[#allocation11 + $0x150] sm:$0xff]
          %v708 = vld [vmem:[#allocation11 + $0x158] sm:$0xff]
          %v709 = vld [vmem:[#allocation11 + $0x160] sm:$0xff]
          %v710 = vld [vmem:[#allocation11 + $0x168] sm:$0xff]
          %v711 = vld [vmem:[#allocation11 + $0x170] sm:$0xff]
          %v712 = vld [vmem:[#allocation11 + $0x178] sm:$0xff]
          %v713 = vld [vmem:[#allocation11 + $0x180] sm:$0xff]
          %v714 = vld [vmem:[#allocation11 + $0x188] sm:$0xff]
          %v715 = vld [vmem:[#allocation11 + $0x190] sm:$0xff]
          %v716 = vld [vmem:[#allocation11 + $0x198] sm:$0xff]
          %v717 = vld [vmem:[#allocation11 + $0x1a0] sm:$0xff]
          %v718 = vld [vmem:[#allocation11 + $0x1a8] sm:$0xff]
          %v719 = vld [vmem:[#allocation11 + $0x1b0] sm:$0xff]
          %v720 = vld [vmem:[#allocation11 + $0x1b8] sm:$0xff]
          %v721 = vld [vmem:[#allocation11 + $0x1c0] sm:$0xff]
          %v722 = vld [vmem:[#allocation11 + $0x1c8] sm:$0xff]
          %v723 = vld [vmem:[#allocation11 + $0x1d0] sm:$0xff]
          %v724 = vld [vmem:[#allocation11 + $0x1d8] sm:$0xff]
          %v725 = vld [vmem:[#allocation11 + $0x1e0] sm:$0xff]
          %v726 = vld [vmem:[#allocation11 + $0x1e8] sm:$0xff]
          %v727 = vld [vmem:[#allocation11 + $0x1f0] sm:$0xff]
          %v728 = vld [vmem:[#allocation11 + $0x1f8] sm:$0xff]
          %729 = vmatprep.subr.mxu0 %v666
          %730 = vmatpush1.msra.mxu0 %v665
          %731 = vmatprep.subr.mxu0 %v668
          %732 = vmatpush1.msra.mxu0 %v667
          %733 = vmatprep.subr.mxu0 %v670
          %734 = vmatpush1.msra.mxu0 %v669
          %735 = vmatprep.subr.mxu0 %v672
          %736 = vmatpush1.msra.mxu0 %v671
          %737 = vmatprep.subr.mxu0 %v674
          %738 = vmatpush1.msra.mxu0 %v673
          %739 = vmatprep.subr.mxu0 %v676
          %740 = vmatpush1.msra.mxu0 %v675
          %741 = vmatprep.subr.mxu0 %v678
          %742 = vmatpush1.msra.mxu0 %v677
          %743 = vmatprep.subr.mxu0 %v680
          %744 = vmatpush1.msra.mxu0 %v679
          %745 = vmatprep.subr.mxu0 %v682
          %746 = vmatpush1.msra.mxu0 %v681
          %747 = vmatprep.subr.mxu0 %v684
          %748 = vmatpush1.msra.mxu0 %v683
          %749 = vmatprep.subr.mxu0 %v686
          %750 = vmatpush1.msra.mxu0 %v685
          %751 = vmatprep.subr.mxu0 %v688
          %752 = vmatpush1.msra.mxu0 %v687
          %753 = vmatprep.subr.mxu0 %v690
          %754 = vmatpush1.msra.mxu0 %v689
          %755 = vmatprep.subr.mxu0 %v692
          %756 = vmatpush1.msra.mxu0 %v691
          %757 = vmatprep.subr.mxu0 %v694
          %758 = vmatpush1.msra.mxu0 %v693
          %759 = vmatprep.subr.mxu0 %v696
          %760 = vmatpush1.msra.mxu0 %v695
          %761 = vmatprep.subr.mxu0 %v698
          %762 = vmatpush1.msra.mxu0 %v697
          %763 = vmatprep.subr.mxu0 %v700
          %764 = vmatpush1.msra.mxu0 %v699
          %765 = vmatprep.subr.mxu0 %v702
          %766 = vmatpush1.msra.mxu0 %v701
          %767 = vmatprep.subr.mxu0 %v704
          %768 = vmatpush1.msra.mxu0 %v703
          %769 = vmatprep.subr.mxu0 %v706
          %770 = vmatpush1.msra.mxu0 %v705
          %771 = vmatprep.subr.mxu0 %v708
          %772 = vmatpush1.msra.mxu0 %v707
          %773 = vmatprep.subr.mxu0 %v710
          %774 = vmatpush1.msra.mxu0 %v709
          %775 = vmatprep.subr.mxu0 %v712
          %776 = vmatpush1.msra.mxu0 %v711
          %777 = vmatprep.subr.mxu0 %v714
          %778 = vmatpush1.msra.mxu0 %v713
          %779 = vmatprep.subr.mxu0 %v716
          %780 = vmatpush1.msra.mxu0 %v715
          %781 = vmatprep.subr.mxu0 %v718
          %782 = vmatpush1.msra.mxu0 %v717
          %783 = vmatprep.subr.mxu0 %v720
          %784 = vmatpush1.msra.mxu0 %v719
          %785 = vmatprep.subr.mxu0 %v722
          %786 = vmatpush1.msra.mxu0 %v721
          %787 = vmatprep.subr.mxu0 %v724
          %788 = vmatpush1.msra.mxu0 %v723
          %789 = vmatprep.subr.mxu0 %v726
          %790 = vmatpush1.msra.mxu0 %v725
          %791 = vmatprep.subr.mxu0 %v728
          %792 = vmatpush1.msra.mxu0 %v727
          %793 = vmatprep.mubr.f32.mxu0 %v549
          %794 = vmatmul.mubr.f32.gmra.mrb[0].mxu0 %v548
          %v795 = vpop.f32.mrb[0].mxu0
          %v796 = vadd.f32 0.0, %v795
          %v797 = vpop.f32.mrb[0].mxu0
          %v798 = vadd.f32 0.0, %v797
          %799 = vmatprep.mubr.f32.mxu0 %v551
          %800 = vmatmul.mubr.f32.gmra.mrb[0].mxu0 %v550
          %v801 = vpop.f32.mrb[0].mxu0
          %v802 = vadd.f32 0.0, %v801
          %v803 = vpop.f32.mrb[0].mxu0
          %v804 = vadd.f32 0.0, %v803
          %805 = vdwg.mxu0
          %v806 = vmul.f32 %v655, %v796
          %v807 = vmul.f32 %v657, %v798
          %v808 = vmul.f32 %v661, %v802
          %v809 = vmul.f32 %v663, %v804
          %810 = vst [vmem:[#allocation2] sm:$0xff] %v806
          %811 = vst [vmem:[#allocation2 + $0x8] sm:$0xff] %v807
          %812 = vst [vmem:[#allocation2 + $0x10] sm:$0xff] %v808
          %813 = vst [vmem:[#allocation2 + $0x18] sm:$0xff] %v809
        $region80: #{tpu_custom_call.1} parent=47 // pred_fallthru
          _
        %v814 = vld [vmem:[#allocation2] sm:$0xff]
        %v815 = vld [vmem:[#allocation2 + $0x8] sm:$0xff]
        %v816 = vld [vmem:[#allocation2 + $0x10] sm:$0xff]
        %v817 = vld [vmem:[#allocation2 + $0x18] sm:$0xff]
        %v818 = vld [vmem:[%s472] sm:$0xff]
        %v819 = vld [vmem:[%s472 + $0x8] sm:$0xff]
        %v820 = vld [vmem:[%s472 + $0x10] sm:$0xff]
        %v821 = vld [vmem:[%s472 + $0x18] sm:$0xff]
        %v822 = vld [vmem:[%s472 + $0x20] sm:$0xff]
        %v823 = vld [vmem:[%s472 + $0x28] sm:$0xff]
        %v824 = vld [vmem:[%s472 + $0x30] sm:$0xff]
        %v825 = vld [vmem:[%s472 + $0x38] sm:$0xff]
        %v826 = vld [vmem:[%s472 + $0x40] sm:$0xff]
        %v827 = vld [vmem:[%s472 + $0x48] sm:$0xff]
        %v828 = vld [vmem:[%s472 + $0x50] sm:$0xff]
        %v829 = vld [vmem:[%s472 + $0x58] sm:$0xff]
        %v830 = vld [vmem:[%s472 + $0x60] sm:$0xff]
        %v831 = vld [vmem:[%s472 + $0x68] sm:$0xff]
        %v832 = vld [vmem:[%s472 + $0x70] sm:$0xff]
        %v833 = vld [vmem:[%s472 + $0x78] sm:$0xff]
        %v834 = vld [vmem:[%s472 + $0x80] sm:$0xff]
        %v835 = vld [vmem:[%s472 + $0x88] sm:$0xff]
        %v836 = vld [vmem:[%s472 + $0x90] sm:$0xff]
        %v837 = vld [vmem:[%s472 + $0x98] sm:$0xff]
        %v838 = vld [vmem:[%s472 + $0xa0] sm:$0xff]
        %v839 = vld [vmem:[%s472 + $0xa8] sm:$0xff]
        %v840 = vld [vmem:[%s472 + $0xb0] sm:$0xff]
        %v841 = vld [vmem:[%s472 + $0xb8] sm:$0xff]
        %v842 = vld [vmem:[%s472 + $0xc0] sm:$0xff]
        %v843 = vld [vmem:[%s472 + $0xc8] sm:$0xff]
        %v844 = vld [vmem:[%s472 + $0xd0] sm:$0xff]
        %v845 = vld [vmem:[%s472 + $0xd8] sm:$0xff]
        %v846 = vld [vmem:[%s472 + $0xe0] sm:$0xff]
        %v847 = vld [vmem:[%s472 + $0xe8] sm:$0xff]
        %v848 = vld [vmem:[%s472 + $0xf0] sm:$0xff]
        %v849 = vld [vmem:[%s472 + $0xf8] sm:$0xff]
        %v850 = vld [vmem:[%s472 + $0x100] sm:$0xff]
        %v851 = vld [vmem:[%s472 + $0x108] sm:$0xff]
        %v852 = vld [vmem:[%s472 + $0x110] sm:$0xff]
        %v853 = vld [vmem:[%s472 + $0x118] sm:$0xff]
        %v854 = vld [vmem:[%s472 + $0x120] sm:$0xff]
        %v855 = vld [vmem:[%s472 + $0x128] sm:$0xff]
        %v856 = vld [vmem:[%s472 + $0x130] sm:$0xff]
        %v857 = vld [vmem:[%s472 + $0x138] sm:$0xff]
        %v858 = vld [vmem:[%s472 + $0x140] sm:$0xff]
        %v859 = vld [vmem:[%s472 + $0x148] sm:$0xff]
        %v860 = vld [vmem:[%s472 + $0x150] sm:$0xff]
        %v861 = vld [vmem:[%s472 + $0x158] sm:$0xff]
        %v862 = vld [vmem:[%s472 + $0x160] sm:$0xff]
        %v863 = vld [vmem:[%s472 + $0x168] sm:$0xff]
        %v864 = vld [vmem:[%s472 + $0x170] sm:$0xff]
        %v865 = vld [vmem:[%s472 + $0x178] sm:$0xff]
        %v866 = vld [vmem:[%s472 + $0x180] sm:$0xff]
        %v867 = vld [vmem:[%s472 + $0x188] sm:$0xff]
        %v868 = vld [vmem:[%s472 + $0x190] sm:$0xff]
        %v869 = vld [vmem:[%s472 + $0x198] sm:$0xff]
        %v870 = vld [vmem:[%s472 + $0x1a0] sm:$0xff]
        %v871 = vld [vmem:[%s472 + $0x1a8] sm:$0xff]
        %v872 = vld [vmem:[%s472 + $0x1b0] sm:$0xff]
        %v873 = vld [vmem:[%s472 + $0x1b8] sm:$0xff]
        %v874 = vld [vmem:[%s472 + $0x1c0] sm:$0xff]
        %v875 = vld [vmem:[%s472 + $0x1c8] sm:$0xff]
        %v876 = vld [vmem:[%s472 + $0x1d0] sm:$0xff]
        %v877 = vld [vmem:[%s472 + $0x1d8] sm:$0xff]
        %v878 = vld [vmem:[%s472 + $0x1e0] sm:$0xff]
        %v879 = vld [vmem:[%s472 + $0x1e8] sm:$0xff]
        %v880 = vld [vmem:[%s472 + $0x1f0] sm:$0xff]
        %v881 = vld [vmem:[%s472 + $0x1f8] sm:$0xff]
        %v882 = vld [vmem:[%s481] sm:$0xff]
        %v883 = vld [vmem:[%s481 + $0x8] sm:$0xff]
        %v884 = vld [vmem:[%s481 + $0x10] sm:$0xff]
        %v885 = vld [vmem:[%s481 + $0x18] sm:$0xff]
        %v886 = vld [vmem:[%s481 + $0x20] sm:$0xff]
        %v887 = vld [vmem:[%s481 + $0x28] sm:$0xff]
        %v888 = vld [vmem:[%s481 + $0x30] sm:$0xff]
        %v889 = vld [vmem:[%s481 + $0x38] sm:$0xff]
        %v890 = vld [vmem:[%s481 + $0x40] sm:$0xff]
        %v891 = vld [vmem:[%s481 + $0x48] sm:$0xff]
        %v892 = vld [vmem:[%s481 + $0x50] sm:$0xff]
        %v893 = vld [vmem:[%s481 + $0x58] sm:$0xff]
        %v894 = vld [vmem:[%s481 + $0x60] sm:$0xff]
        %v895 = vld [vmem:[%s481 + $0x68] sm:$0xff]
        %v896 = vld [vmem:[%s481 + $0x70] sm:$0xff]
        %v897 = vld [vmem:[%s481 + $0x78] sm:$0xff]
        %v898 = vld [vmem:[%s481 + $0x80] sm:$0xff]
        %v899 = vld [vmem:[%s481 + $0x88] sm:$0xff]
        %v900 = vld [vmem:[%s481 + $0x90] sm:$0xff]
        %v901 = vld [vmem:[%s481 + $0x98] sm:$0xff]
        %v902 = vld [vmem:[%s481 + $0xa0] sm:$0xff]
        %v903 = vld [vmem:[%s481 + $0xa8] sm:$0xff]
        %v904 = vld [vmem:[%s481 + $0xb0] sm:$0xff]
        %v905 = vld [vmem:[%s481 + $0xb8] sm:$0xff]
        %v906 = vld [vmem:[%s481 + $0xc0] sm:$0xff]
        %v907 = vld [vmem:[%s481 + $0xc8] sm:$0xff]
        %v908 = vld [vmem:[%s481 + $0xd0] sm:$0xff]
        %v909 = vld [vmem:[%s481 + $0xd8] sm:$0xff]
        %v910 = vld [vmem:[%s481 + $0xe0] sm:$0xff]
        %v911 = vld [vmem:[%s481 + $0xe8] sm:$0xff]
        %v912 = vld [vmem:[%s481 + $0xf0] sm:$0xff]
        %v913 = vld [vmem:[%s481 + $0xf8] sm:$0xff]
        %v914 = vld [vmem:[%s481 + $0x100] sm:$0xff]
        %v915 = vld [vmem:[%s481 + $0x108] sm:$0xff]
        %v916 = vld [vmem:[%s481 + $0x110] sm:$0xff]
        %v917 = vld [vmem:[%s481 + $0x118] sm:$0xff]
        %v918 = vld [vmem:[%s481 + $0x120] sm:$0xff]
        %v919 = vld [vmem:[%s481 + $0x128] sm:$0xff]
        %v920 = vld [vmem:[%s481 + $0x130] sm:$0xff]
        %v921 = vld [vmem:[%s481 + $0x138] sm:$0xff]
        %v922 = vld [vmem:[%s481 + $0x140] sm:$0xff]
        %v923 = vld [vmem:[%s481 + $0x148] sm:$0xff]
        %v924 = vld [vmem:[%s481 + $0x150] sm:$0xff]
        %v925 = vld [vmem:[%s481 + $0x158] sm:$0xff]
        %v926 = vld [vmem:[%s481 + $0x160] sm:$0xff]
        %v927 = vld [vmem:[%s481 + $0x168] sm:$0xff]
        %v928 = vld [vmem:[%s481 + $0x170] sm:$0xff]
        %v929 = vld [vmem:[%s481 + $0x178] sm:$0xff]
        %v930 = vld [vmem:[%s481 + $0x180] sm:$0xff]
        %v931 = vld [vmem:[%s481 + $0x188] sm:$0xff]
        %v932 = vld [vmem:[%s481 + $0x190] sm:$0xff]
        %v933 = vld [vmem:[%s481 + $0x198] sm:$0xff]
        %v934 = vld [vmem:[%s481 + $0x1a0] sm:$0xff]
        %v935 = vld [vmem:[%s481 + $0x1a8] sm:$0xff]
        %v936 = vld [vmem:[%s481 + $0x1b0] sm:$0xff]
        %v937 = vld [vmem:[%s481 + $0x1b8] sm:$0xff]
        %v938 = vld [vmem:[%s481 + $0x1c0] sm:$0xff]
        %v939 = vld [vmem:[%s481 + $0x1c8] sm:$0xff]
        %v940 = vld [vmem:[%s481 + $0x1d0] sm:$0xff]
        %v941 = vld [vmem:[%s481 + $0x1d8] sm:$0xff]
        %v942 = vld [vmem:[%s481 + $0x1e0] sm:$0xff]
        %v943 = vld [vmem:[%s481 + $0x1e8] sm:$0xff]
        %v944 = vld [vmem:[%s481 + $0x1f0] sm:$0xff]
        %v945 = vld [vmem:[%s481 + $0x1f8] sm:$0xff]
        %v946 = vld [vmem:[%s481 + $0x200] sm:$0xff]
        %v947 = vld [vmem:[%s481 + $0x208] sm:$0xff]
        %v948 = vld [vmem:[%s481 + $0x210] sm:$0xff]
        %v949 = vld [vmem:[%s481 + $0x218] sm:$0xff]
        %v950 = vld [vmem:[%s481 + $0x220] sm:$0xff]
        %v951 = vld [vmem:[%s481 + $0x228] sm:$0xff]
        %v952 = vld [vmem:[%s481 + $0x230] sm:$0xff]
        %v953 = vld [vmem:[%s481 + $0x238] sm:$0xff]
        %v954 = vld [vmem:[%s481 + $0x240] sm:$0xff]
        %v955 = vld [vmem:[%s481 + $0x248] sm:$0xff]
        %v956 = vld [vmem:[%s481 + $0x250] sm:$0xff]
        %v957 = vld [vmem:[%s481 + $0x258] sm:$0xff]
        %v958 = vld [vmem:[%s481 + $0x260] sm:$0xff]
        %v959 = vld [vmem:[%s481 + $0x268] sm:$0xff]
        %v960 = vld [vmem:[%s481 + $0x270] sm:$0xff]
        %v961 = vld [vmem:[%s481 + $0x278] sm:$0xff]
        %v962 = vld [vmem:[%s481 + $0x280] sm:$0xff]
        %v963 = vld [vmem:[%s481 + $0x288] sm:$0xff]
        %v964 = vld [vmem:[%s481 + $0x290] sm:$0xff]
        %v965 = vld [vmem:[%s481 + $0x298] sm:$0xff]
        %v966 = vld [vmem:[%s481 + $0x2a0] sm:$0xff]
        %v967 = vld [vmem:[%s481 + $0x2a8] sm:$0xff]
        %v968 = vld [vmem:[%s481 + $0x2b0] sm:$0xff]
        %v969 = vld [vmem:[%s481 + $0x2b8] sm:$0xff]
        %v970 = vld [vmem:[%s481 + $0x2c0] sm:$0xff]
        %v971 = vld [vmem:[%s481 + $0x2c8] sm:$0xff]
        %v972 = vld [vmem:[%s481 + $0x2d0] sm:$0xff]
        %v973 = vld [vmem:[%s481 + $0x2d8] sm:$0xff]
        %v974 = vld [vmem:[%s481 + $0x2e0] sm:$0xff]
        %v975 = vld [vmem:[%s481 + $0x2e8] sm:$0xff]
        %v976 = vld [vmem:[%s481 + $0x2f0] sm:$0xff]
        %v977 = vld [vmem:[%s481 + $0x2f8] sm:$0xff]
        %v978 = vld [vmem:[%s481 + $0x300] sm:$0xff]
        %v979 = vld [vmem:[%s481 + $0x308] sm:$0xff]
        %v980 = vld [vmem:[%s481 + $0x310] sm:$0xff]
        %v981 = vld [vmem:[%s481 + $0x318] sm:$0xff]
        %v982 = vld [vmem:[%s481 + $0x320] sm:$0xff]
        %v983 = vld [vmem:[%s481 + $0x328] sm:$0xff]
        %v984 = vld [vmem:[%s481 + $0x330] sm:$0xff]
        %v985 = vld [vmem:[%s481 + $0x338] sm:$0xff]
        %v986 = vld [vmem:[%s481 + $0x340] sm:$0xff]
        %v987 = vld [vmem:[%s481 + $0x348] sm:$0xff]
        %v988 = vld [vmem:[%s481 + $0x350] sm:$0xff]
        %v989 = vld [vmem:[%s481 + $0x358] sm:$0xff]
        %v990 = vld [vmem:[%s481 + $0x360] sm:$0xff]
        %v991 = vld [vmem:[%s481 + $0x368] sm:$0xff]
        %v992 = vld [vmem:[%s481 + $0x370] sm:$0xff]
        %v993 = vld [vmem:[%s481 + $0x378] sm:$0xff]
        %v994 = vld [vmem:[%s481 + $0x380] sm:$0xff]
        %v995 = vld [vmem:[%s481 + $0x388] sm:$0xff]
        %v996 = vld [vmem:[%s481 + $0x390] sm:$0xff]
        %v997 = vld [vmem:[%s481 + $0x398] sm:$0xff]
        %v998 = vld [vmem:[%s481 + $0x3a0] sm:$0xff]
        %v999 = vld [vmem:[%s481 + $0x3a8] sm:$0xff]
        %v1000 = vld [vmem:[%s481 + $0x3b0] sm:$0xff]
        %v1001 = vld [vmem:[%s481 + $0x3b8] sm:$0xff]
        %v1002 = vld [vmem:[%s481 + $0x3c0] sm:$0xff]
        %v1003 = vld [vmem:[%s481 + $0x3c8] sm:$0xff]
        %v1004 = vld [vmem:[%s481 + $0x3d0] sm:$0xff]
        %v1005 = vld [vmem:[%s481 + $0x3d8] sm:$0xff]
        %v1006 = vld [vmem:[%s481 + $0x3e0] sm:$0xff]
        %v1007 = vld [vmem:[%s481 + $0x3e8] sm:$0xff]
        %v1008 = vld [vmem:[%s481 + $0x3f0] sm:$0xff]
        %v1009 = vld [vmem:[%s481 + $0x3f8] sm:$0xff]
        %1010 = vmatprep.subr.mxu0 %v883
        %1011 = vmatpush1.msra.mxu0 %v882
        %1012 = vmatprep.subr.mxu0 %v887
        %1013 = vmatpush1.msra.mxu0 %v886
        %1014 = vmatprep.subr.mxu0 %v891
        %1015 = vmatpush1.msra.mxu0 %v890
        %1016 = vmatprep.subr.mxu0 %v895
        %1017 = vmatpush1.msra.mxu0 %v894
        %1018 = vmatprep.subr.mxu0 %v899
        %1019 = vmatpush1.msra.mxu0 %v898
        %1020 = vmatprep.subr.mxu0 %v903
        %1021 = vmatpush1.msra.mxu0 %v902
        %1022 = vmatprep.subr.mxu0 %v907
        %1023 = vmatpush1.msra.mxu0 %v906
        %1024 = vmatprep.subr.mxu0 %v911
        %1025 = vmatpush1.msra.mxu0 %v910
        %1026 = vmatprep.subr.mxu0 %v915
        %1027 = vmatpush1.msra.mxu0 %v914
        %1028 = vmatprep.subr.mxu0 %v919
        %1029 = vmatpush1.msra.mxu0 %v918
        %1030 = vmatprep.subr.mxu0 %v923
        %1031 = vmatpush1.msra.mxu0 %v922
        %1032 = vmatprep.subr.mxu0 %v927
        %1033 = vmatpush1.msra.mxu0 %v926
        %1034 = vmatprep.subr.mxu0 %v931
        %1035 = vmatpush1.msra.mxu0 %v930
        %1036 = vmatprep.subr.mxu0 %v935
        %1037 = vmatpush1.msra.mxu0 %v934
        %1038 = vmatprep.subr.mxu0 %v939
        %1039 = vmatpush1.msra.mxu0 %v938
        %1040 = vmatprep.subr.mxu0 %v943
        %1041 = vmatpush1.msra.mxu0 %v942
        %1042 = vmatprep.subr.mxu0 %v947
        %1043 = vmatpush1.msra.mxu0 %v946
        %1044 = vmatprep.subr.mxu0 %v951
        %1045 = vmatpush1.msra.mxu0 %v950
        %1046 = vmatprep.subr.mxu0 %v955
        %1047 = vmatpush1.msra.mxu0 %v954
        %1048 = vmatprep.subr.mxu0 %v959
        %1049 = vmatpush1.msra.mxu0 %v958
        %1050 = vmatprep.subr.mxu0 %v963
        %1051 = vmatpush1.msra.mxu0 %v962
        %1052 = vmatprep.subr.mxu0 %v967
        %1053 = vmatpush1.msra.mxu0 %v966
        %1054 = vmatprep.subr.mxu0 %v971
        %1055 = vmatpush1.msra.mxu0 %v970
        %1056 = vmatprep.subr.mxu0 %v975
        %1057 = vmatpush1.msra.mxu0 %v974
        %1058 = vmatprep.subr.mxu0 %v979
        %1059 = vmatpush1.msra.mxu0 %v978
        %1060 = vmatprep.subr.mxu0 %v983
        %1061 = vmatpush1.msra.mxu0 %v982
        %1062 = vmatprep.subr.mxu0 %v987
        %1063 = vmatpush1.msra.mxu0 %v986
        %1064 = vmatprep.subr.mxu0 %v991
        %1065 = vmatpush1.msra.mxu0 %v990
        %1066 = vmatprep.subr.mxu0 %v995
        %1067 = vmatpush1.msra.mxu0 %v994
        %1068 = vmatprep.subr.mxu0 %v999
        %1069 = vmatpush1.msra.mxu0 %v998
        %1070 = vmatprep.subr.mxu0 %v1003
        %1071 = vmatpush1.msra.mxu0 %v1002
        %1072 = vmatprep.subr.mxu0 %v1007
        %1073 = vmatpush1.msra.mxu0 %v1006
        %1074 = vmatprep.mubr.f32.mxu0 %v815
        %1075 = vmatmul.mubr.f32.gmra.mrb[0].mxu0 %v814
        %v1076 = vpop.f32.mrb[0].mxu0
        %v1077 = vadd.f32 0.0, %v1076
        %v1078 = vpop.f32.mrb[0].mxu0
        %v1079 = vadd.f32 0.0, %v1078
        %1080 = vmatprep.mubr.f32.mxu0 %v817
        %1081 = vmatmul.mubr.f32.gmra.mrb[0].mxu0 %v816
        %v1082 = vpop.f32.mrb[0].mxu0
        %v1083 = vadd.f32 0.0, %v1082
        %v1084 = vpop.f32.mrb[0].mxu0
        %v1085 = vadd.f32 0.0, %v1084
        %1086 = vdwg.mxu0
        %1087 = vmatprep.subr.mxu0 %v885
        %1088 = vmatpush1.msra.mxu0 %v884
        %1089 = vmatprep.subr.mxu0 %v889
        %1090 = vmatpush1.msra.mxu0 %v888
        %1091 = vmatprep.subr.mxu0 %v893
        %1092 = vmatpush1.msra.mxu0 %v892
        %1093 = vmatprep.subr.mxu0 %v897
        %1094 = vmatpush1.msra.mxu0 %v896
        %1095 = vmatprep.subr.mxu0 %v901
        %1096 = vmatpush1.msra.mxu0 %v900
        %1097 = vmatprep.subr.mxu0 %v905
        %1098 = vmatpush1.msra.mxu0 %v904
        %1099 = vmatprep.subr.mxu0 %v909
        %1100 = vmatpush1.msra.mxu0 %v908
        %1101 = vmatprep.subr.mxu0 %v913
        %1102 = vmatpush1.msra.mxu0 %v912
        %1103 = vmatprep.subr.mxu0 %v917
        %1104 = vmatpush1.msra.mxu0 %v916
        %1105 = vmatprep.subr.mxu0 %v921
        %1106 = vmatpush1.msra.mxu0 %v920
        %1107 = vmatprep.subr.mxu0 %v925
        %1108 = vmatpush1.msra.mxu0 %v924
        %1109 = vmatprep.subr.mxu0 %v929
        %1110 = vmatpush1.msra.mxu0 %v928
        %1111 = vmatprep.subr.mxu0 %v933
        %1112 = vmatpush1.msra.mxu0 %v932
        %1113 = vmatprep.subr.mxu0 %v937
        %1114 = vmatpush1.msra.mxu0 %v936
        %1115 = vmatprep.subr.mxu0 %v941
        %1116 = vmatpush1.msra.mxu0 %v940
        %1117 = vmatprep.subr.mxu0 %v945
        %1118 = vmatpush1.msra.mxu0 %v944
        %1119 = vmatprep.subr.mxu0 %v949
        %1120 = vmatpush1.msra.mxu0 %v948
        %1121 = vmatprep.subr.mxu0 %v953
        %1122 = vmatpush1.msra.mxu0 %v952
        %1123 = vmatprep.subr.mxu0 %v957
        %1124 = vmatpush1.msra.mxu0 %v956
        %1125 = vmatprep.subr.mxu0 %v961
        %1126 = vmatpush1.msra.mxu0 %v960
        %1127 = vmatprep.subr.mxu0 %v965
        %1128 = vmatpush1.msra.mxu0 %v964
        %1129 = vmatprep.subr.mxu0 %v969
        %1130 = vmatpush1.msra.mxu0 %v968
        %1131 = vmatprep.subr.mxu0 %v973
        %1132 = vmatpush1.msra.mxu0 %v972
        %1133 = vmatprep.subr.mxu0 %v977
        %1134 = vmatpush1.msra.mxu0 %v976
        %1135 = vmatprep.subr.mxu0 %v981
        %1136 = vmatpush1.msra.mxu0 %v980
        %1137 = vmatprep.subr.mxu0 %v985
        %1138 = vmatpush1.msra.mxu0 %v984
        %1139 = vmatprep.subr.mxu0 %v989
        %1140 = vmatpush1.msra.mxu0 %v988
        %1141 = vmatprep.subr.mxu0 %v993
        %1142 = vmatpush1.msra.mxu0 %v992
        %1143 = vmatprep.subr.mxu0 %v997
        %1144 = vmatpush1.msra.mxu0 %v996
        %1145 = vmatprep.subr.mxu0 %v1001
        %1146 = vmatpush1.msra.mxu0 %v1000
        %1147 = vmatprep.subr.mxu0 %v1005
        %1148 = vmatpush1.msra.mxu0 %v1004
        %1149 = vmatprep.subr.mxu0 %v1009
        %1150 = vmatpush1.msra.mxu0 %v1008
        %1151 = vmatprep.mubr.f32.mxu0 %v815
        %1152 = vmatmul.mubr.f32.gmra.mrb[0].mxu0 %v814
        %v1153 = vpop.f32.mrb[0].mxu0
        %v1154 = vadd.f32 0.0, %v1153
        %v1155 = vpop.f32.mrb[0].mxu0
        %v1156 = vadd.f32 0.0, %v1155
        %1157 = vmatprep.mubr.f32.mxu0 %v817
        %1158 = vmatmul.mubr.f32.gmra.mrb[0].mxu0 %v816
        %v1159 = vpop.f32.mrb[0].mxu0
        %v1160 = vadd.f32 0.0, %v1159
        %v1161 = vpop.f32.mrb[0].mxu0
        %v1162 = vadd.f32 0.0, %v1161
        %1163 = vdwg.mxu0
        %1164 = vmatprep.subr.mxu0 %v819
        %1165 = vmatpush1.msra.mxu0 %v818
        %1166 = vmatprep.subr.mxu0 %v823
        %1167 = vmatpush1.msra.mxu0 %v822
        %1168 = vmatprep.subr.mxu0 %v827
        %1169 = vmatpush1.msra.mxu0 %v826
        %1170 = vmatprep.subr.mxu0 %v831
        %1171 = vmatpush1.msra.mxu0 %v830
        %1172 = vmatprep.subr.mxu0 %v835
        %1173 = vmatpush1.msra.mxu0 %v834
        %1174 = vmatprep.subr.mxu0 %v839
        %1175 = vmatpush1.msra.mxu0 %v838
        %1176 = vmatprep.subr.mxu0 %v843
        %1177 = vmatpush1.msra.mxu0 %v842
        %1178 = vmatprep.subr.mxu0 %v847
        %1179 = vmatpush1.msra.mxu0 %v846
        %1180 = vmatprep.subr.mxu0 %v851
        %1181 = vmatpush1.msra.mxu0 %v850
        %1182 = vmatprep.subr.mxu0 %v855
        %1183 = vmatpush1.msra.mxu0 %v854
        %1184 = vmatprep.subr.mxu0 %v859
        %1185 = vmatpush1.msra.mxu0 %v858
        %1186 = vmatprep.subr.mxu0 %v863
        %1187 = vmatpush1.msra.mxu0 %v862
        %1188 = vmatprep.subr.mxu0 %v867
        %1189 = vmatpush1.msra.mxu0 %v866
        %1190 = vmatprep.subr.mxu0 %v871
        %1191 = vmatpush1.msra.mxu0 %v870
        %1192 = vmatprep.subr.mxu0 %v875
        %1193 = vmatpush1.msra.mxu0 %v874
        %1194 = vmatprep.subr.mxu0 %v879
        %1195 = vmatpush1.msra.mxu0 %v878
        %1196 = vmatprep.subr.mxu0 0.0
        %1197 = vmatpush1.msra.mxu0 0.0
        %1198 = vmatprep.subr.mxu0 0.0
        %1199 = vmatpush1.msra.mxu0 0.0
        %1200 = vmatprep.subr.mxu0 0.0
        %1201 = vmatpush1.msra.mxu0 0.0
        %1202 = vmatprep.subr.mxu0 0.0
        %1203 = vmatpush1.msra.mxu0 0.0
        %1204 = vmatprep.subr.mxu0 0.0
        %1205 = vmatpush1.msra.mxu0 0.0
        %1206 = vmatprep.subr.mxu0 0.0
        %1207 = vmatpush1.msra.mxu0 0.0
        %1208 = vmatprep.subr.mxu0 0.0
        %1209 = vmatpush1.msra.mxu0 0.0
        %1210 = vmatprep.subr.mxu0 0.0
        %1211 = vmatpush1.msra.mxu0 0.0
        %1212 = vmatprep.subr.mxu0 0.0
        %1213 = vmatpush1.msra.mxu0 0.0
        %1214 = vmatprep.subr.mxu0 0.0
        %1215 = vmatpush1.msra.mxu0 0.0
        %1216 = vmatprep.subr.mxu0 0.0
        %1217 = vmatpush1.msra.mxu0 0.0
        %1218 = vmatprep.subr.mxu0 0.0
        %1219 = vmatpush1.msra.mxu0 0.0
        %1220 = vmatprep.subr.mxu0 0.0
        %1221 = vmatpush1.msra.mxu0 0.0
        %1222 = vmatprep.subr.mxu0 0.0
        %1223 = vmatpush1.msra.mxu0 0.0
        %1224 = vmatprep.subr.mxu0 0.0
        %1225 = vmatpush1.msra.mxu0 0.0
        %1226 = vmatprep.subr.mxu0 0.0
        %1227 = vmatpush1.msra.mxu0 0.0
        %1228 = vmatprep.mubr.f32.mxu0 0.0
        %1229 = vmatmul.mubr.f32.gmra.mrb[0].mxu0 %v546
        %v1230 = vpop.f32.mrb[0].mxu0
        %v1231 = vadd.f32 %v1077, %v1230
        %v1232 = vpop.f32.mrb[0].mxu0
        %v1233 = vadd.f32 %v1079, %v1232
        %1234 = vmatprep.mubr.f32.mxu0 0.0
        %1235 = vmatmul.mubr.f32.gmra.mrb[0].mxu0 %v547
        %v1236 = vpop.f32.mrb[0].mxu0
        %v1237 = vadd.f32 %v1083, %v1236
        %v1238 = vpop.f32.mrb[0].mxu0
        %v1239 = vadd.f32 %v1085, %v1238
        %1240 = vdwg.mxu0
        %1241 = vmatprep.subr.mxu0 %v821
        %1242 = vmatpush1.msra.mxu0 %v820
        %1243 = vmatprep.subr.mxu0 %v825
        %1244 = vmatpush1.msra.mxu0 %v824
        %1245 = vmatprep.subr.mxu0 %v829
        %1246 = vmatpush1.msra.mxu0 %v828
        %1247 = vmatprep.subr.mxu0 %v833
        %1248 = vmatpush1.msra.mxu0 %v832
        %1249 = vmatprep.subr.mxu0 %v837
        %1250 = vmatpush1.msra.mxu0 %v836
        %1251 = vmatprep.subr.mxu0 %v841
        %1252 = vmatpush1.msra.mxu0 %v840
        %1253 = vmatprep.subr.mxu0 %v845
        %1254 = vmatpush1.msra.mxu0 %v844
        %1255 = vmatprep.subr.mxu0 %v849
        %1256 = vmatpush1.msra.mxu0 %v848
        %1257 = vmatprep.subr.mxu0 %v853
        %1258 = vmatpush1.msra.mxu0 %v852
        %1259 = vmatprep.subr.mxu0 %v857
        %1260 = vmatpush1.msra.mxu0 %v856
        %1261 = vmatprep.subr.mxu0 %v861
        %1262 = vmatpush1.msra.mxu0 %v860
        %1263 = vmatprep.subr.mxu0 %v865
        %1264 = vmatpush1.msra.mxu0 %v864
        %1265 = vmatprep.subr.mxu0 %v869
        %1266 = vmatpush1.msra.mxu0 %v868
        %1267 = vmatprep.subr.mxu0 %v873
        %1268 = vmatpush1.msra.mxu0 %v872
        %1269 = vmatprep.subr.mxu0 %v877
        %1270 = vmatpush1.msra.mxu0 %v876
        %1271 = vmatprep.subr.mxu0 %v881
        %1272 = vmatpush1.msra.mxu0 %v880
        %1273 = vmatprep.subr.mxu0 0.0
        %1274 = vmatpush1.msra.mxu0 0.0
        %1275 = vmatprep.subr.mxu0 0.0
        %1276 = vmatpush1.msra.mxu0 0.0
        %1277 = vmatprep.subr.mxu0 0.0
        %1278 = vmatpush1.msra.mxu0 0.0
        %1279 = vmatprep.subr.mxu0 0.0
        %1280 = vmatpush1.msra.mxu0 0.0
        %1281 = vmatprep.subr.mxu0 0.0
        %1282 = vmatpush1.msra.mxu0 0.0
        %1283 = vmatprep.subr.mxu0 0.0
        %1284 = vmatpush1.msra.mxu0 0.0
        %1285 = vmatprep.subr.mxu0 0.0
        %1286 = vmatpush1.msra.mxu0 0.0
        %1287 = vmatprep.subr.mxu0 0.0
        %1288 = vmatpush1.msra.mxu0 0.0
        %1289 = vmatprep.subr.mxu0 0.0
        %1290 = vmatpush1.msra.mxu0 0.0
        %1291 = vmatprep.subr.mxu0 0.0
        %1292 = vmatpush1.msra.mxu0 0.0
        %1293 = vmatprep.subr.mxu0 0.0
        %1294 = vmatpush1.msra.mxu0 0.0
        %1295 = vmatprep.subr.mxu0 0.0
        %1296 = vmatpush1.msra.mxu0 0.0
        %1297 = vmatprep.subr.mxu0 0.0
        %1298 = vmatpush1.msra.mxu0 0.0
        %1299 = vmatprep.subr.mxu0 0.0
        %1300 = vmatpush1.msra.mxu0 0.0
        %1301 = vmatprep.subr.mxu0 0.0
        %1302 = vmatpush1.msra.mxu0 0.0
        %1303 = vmatprep.subr.mxu0 0.0
        %1304 = vmatpush1.msra.mxu0 0.0
        %1305 = vmatprep.mubr.f32.mxu0 0.0
        %1306 = vmatmul.mubr.f32.gmra.mrb[0].mxu0 %v546
        %v1307 = vpop.f32.mrb[0].mxu0
        %v1308 = vadd.f32 %v1154, %v1307
        %v1309 = vpop.f32.mrb[0].mxu0
        %v1310 = vadd.f32 %v1156, %v1309
        %1311 = vmatprep.mubr.f32.mxu0 0.0
        %1312 = vmatmul.mubr.f32.gmra.mrb[0].mxu0 %v547
        %v1313 = vpop.f32.mrb[0].mxu0
        %v1314 = vadd.f32 %v1160, %v1313
        %v1315 = vpop.f32.mrb[0].mxu0
        %v1316 = vadd.f32 %v1162, %v1315
        %1317 = vdwg.mxu0
        %v1318 = vxor.u32 %v1231, 2147483648
        %v1319 = vxor.u32 %v1237, 2147483648
        %v1320 = vmul.f32 %v1318, 1.442695
        %v1321 = vpow.pop %v1320
        %v1322 = vmul.f32 %v1319, 1.442695
        %v1323 = vpow.pop %v1322
        %v1324 = vadd.f32 %v1321, 1.0
        %v1325 = vadd.f32 %v1323, 1.0
        %v1326 = vrcp.pop %v1324
        %v1327 = vmul.f32 1.0, %v1326
        %v1328 = vrcp.pop %v1325
        %v1329 = vmul.f32 1.0, %v1328
        %v1330 = vxor.u32 %v1233, 2147483648
        %v1331 = vxor.u32 %v1239, 2147483648
        %v1332 = vmul.f32 %v1330, 1.442695
        %v1333 = vpow.pop %v1332
        %v1334 = vmul.f32 %v1331, 1.442695
        %v1335 = vpow.pop %v1334
        %v1336 = vadd.f32 %v1333, 1.0
        %v1337 = vadd.f32 %v1335, 1.0
        %v1338 = vrcp.pop %v1336
        %v1339 = vmul.f32 1.0, %v1338
        %v1340 = vrcp.pop %v1337
        %v1341 = vmul.f32 1.0, %v1340
        %v1342 = vxor.u32 %v1308, 2147483648
        %v1343 = vxor.u32 %v1314, 2147483648
        %v1344 = vmul.f32 %v1342, 1.442695
        %v1345 = vpow.pop %v1344
        %v1346 = vmul.f32 %v1343, 1.442695
        %v1347 = vpow.pop %v1346
        %v1348 = vadd.f32 %v1345, 1.0
        %v1349 = vadd.f32 %v1347, 1.0
        %v1350 = vrcp.pop %v1348
        %v1351 = vmul.f32 1.0, %v1350
        %v1352 = vrcp.pop %v1349
        %v1353 = vmul.f32 1.0, %v1352
        %v1354 = vtanh.pop %v1310
        %v1355 = vtanh.pop %v1316
        %v1356 = vld [vmem:[%s455] sm:$0xff]
        %v1357 = vld [vmem:[%s455 + $0x8] sm:$0xff]
        %v1358 = vmul.f32 %v1339, %v1356
        %v1359 = vmul.f32 %v1341, %v1357
        %v1360 = vmul.f32 %v1327, %v1354
        %v1361 = vmul.f32 %v1329, %v1355
        %v1362 = vadd.f32 %v1358, %v1360
        %v1363 = vadd.f32 %v1359, %v1361
        %v1364 = vtanh.pop %v1362
        %v1365 = vtanh.pop %v1363
        %v1366 = vmul.f32 %v1351, %v1364
        %v1367 = vmul.f32 %v1353, %v1365
        %1368 = vst [vmem:[%s531] sm:$0xff] %v1366
        %1369 = vst [vmem:[%s531 + $0x8] sm:$0xff] %v1367
        %1370 = vst [vmem:[%s538] sm:$0xff] %v1362
        %1371 = vst [vmem:[%s538 + $0x8] sm:$0xff] %v1363
        %s1372 = sand.u32 %s232, 1
        %s1373 = scalar_lea.sflag [#allocation5], %s1372
        %s1374 = sand.u32 %s232, 1
        %s1375 = smul.addr %s1374, 16
        %s1376 = scalar_lea.vmem [#allocation15], %s1375
        %s1377 = sand.u32 %s260, 1
        %s1378 = scalar_lea.sflag [#allocation17], %s1377
        %s1379 = sand.u32 %s260, 1
        %s1380 = smul.addr %s1379, 16
        %s1381 = scalar_lea.vmem [#allocation16], %s1380
        // Predicated region
        $region81: #{tpu_custom_call.1} parent=47 // pred_check
          %p1382 = pneg %p242
        $region82: #{tpu_custom_call.1} parent=47 // pred_check_branch
          %1384 = sbr.rel (%p1382) target = $region84
        $region83: #{tpu_custom_call.1} parent=47 // pred_region
          %s1385 = smul.u32 2, %s40
          %s1387 = ssub.s32 256, 256
          %1388 = vsyncadd %s1373, %s1387
          %s1389 = smul.addr %s1385, 2
          %s1390 = sadd.s32 %s41, %s1389
          %s1391 = smul.addr %s1390, 128
          %s1392 = scalar_lea.hbm %s7, %s1391
          %s1393 = sshll.u32 %s1376, 4
          %s1394 = int_to_ptr.vmem [resolvable:$true] %s1393
          %1399 = dma.vmem_to_hbm [thread:$0]  %s1394, 256, %s1392, %s1373, 128, 256, 8
        $region84: #{tpu_custom_call.1} parent=47 // pred_fallthru
          _
        // Predicated region
        $region85: #{tpu_custom_call.1} parent=47 // pred_check
          %p1400 = pneg %p270
        $region86: #{tpu_custom_call.1} parent=47 // pred_check_branch
          %1402 = sbr.rel (%p1400) target = $region88
        $region87: #{tpu_custom_call.1} parent=47 // pred_region
          %s1403 = smul.u32 2, %s40
          %s1405 = ssub.s32 256, 256
          %1406 = vsyncadd %s1378, %s1405
          %s1407 = smul.addr %s1403, 2
          %s1408 = sadd.s32 %s41, %s1407
          %s1409 = smul.addr %s1408, 128
          %s1410 = scalar_lea.hbm %s8, %s1409
          %s1411 = sshll.u32 %s1381, 4
          %s1412 = int_to_ptr.vmem [resolvable:$true] %s1411
          %1417 = dma.vmem_to_hbm [thread:$0]  %s1412, 256, %s1410, %s1378, 128, 256, 8
        $region88: #{tpu_custom_call.1} parent=47 // pred_fallthru
          _
      $region48: #{tpu_custom_call.1} parent=5 // pred_fallthru
        _
      %p1418 = scmp.le.s32.totalorder 2, %s31
      // Predicated region
      $region89: #{tpu_custom_call.1} parent=5 // pred_check
        %p1419 = pneg %p1418
      $region90: #{tpu_custom_call.1} parent=5 // pred_check_branch
        %1421 = sbr.rel (%p1419) target = $region92
      $region91: #{tpu_custom_call.1} parent=5 // pred_region
        %s1422 = ssub.s32 %s31, 2
        // Predicated region
        $region93: #{tpu_custom_call.1} parent=91 // pred_check
          %p1423 = pneg %p248
        $region94: #{tpu_custom_call.1} parent=91 // pred_check_branch
          %1425 = sbr.rel (%p1423) target = $region96
        $region95: #{tpu_custom_call.1} parent=91 // pred_region
          %s1426 = sand.u32 %s233, 1
          %s1427 = scalar_lea.sflag [#allocation5], %s1426
          %s1428 = sand.u32 %s233, 1
          %s1429 = smul.addr %s1428, 16
          %s1430 = scalar_lea.vmem [#allocation15], %s1429
          %1431 = dma.done %s1427, 256
        $region96: #{tpu_custom_call.1} parent=91 // pred_fallthru
          _
        // Predicated region
        $region97: #{tpu_custom_call.1} parent=91 // pred_check
          %p1432 = pneg %p276
        $region98: #{tpu_custom_call.1} parent=91 // pred_check_branch
          %1434 = sbr.rel (%p1432) target = $region100
        $region99: #{tpu_custom_call.1} parent=91 // pred_region
          %s1435 = sand.u32 %s261, 1
          %s1436 = scalar_lea.sflag [#allocation17], %s1435
          %s1437 = sand.u32 %s261, 1
          %s1438 = smul.addr %s1437, 16
          %s1439 = scalar_lea.vmem [#allocation16], %s1438
          %1440 = dma.done %s1436, 256
        $region100: #{tpu_custom_call.1} parent=91 // pred_fallthru
          _
      $region92: #{tpu_custom_call.1} parent=5 // pred_fallthru
        _
    $region6: #{tpu_custom_call.1} parent=1 // loop_footer
      %s35 = sadd.s32 1, %s31
    $region7: #{tpu_custom_call.1} parent=1 // loop_footer_branch
      %30 = sbr.rel target = $region3
    $region8: #{tpu_custom_call.1} parent=1 // loop_exit
      _
    %1441 = vsyncpa [#allocation4], 1
    %s1442 = scalar_lea.sflag [#allocation4], 1
    %1443 = vsyncpa %s1442, 1
    %1444 = vsyncpa [#allocation7], 1
    %s1445 = scalar_lea.sflag [#allocation7], 1
    %1446 = vsyncpa %s1445, 1
    %1447 = vsyncpa [#allocation10], 1
    %1448 = vsyncpa [#allocation13], 1
    %s1449 = scalar_lea.sflag [#allocation13], 1
    %1450 = vsyncpa %s1449, 1
    %1451 = vsyncpa [#allocation5], 1
    %s1452 = scalar_lea.sflag [#allocation5], 1
    %1453 = vsyncpa %s1452, 1
    %1454 = vsyncpa [#allocation17], 1
    %s1455 = scalar_lea.sflag [#allocation17], 1
    %1456 = vsyncpa %s1455, 1

</llo_original>
